<compile_context>
chip_gen: v5e
topology: v5e:2x2
jax: 0.10.0
libtpu: 0.0.40
codegen_flags: <defaults>
</compile_context>

<pallas_src>
import jax
import jax.numpy as jnp
from jax.experimental import pallas as pl
from jax.experimental.pallas import tpu as pltpu


PARAM_ORDER = [
    "enw0", "enb0", "enw1", "enb1",          # encoder_nodes  MiniMLP
    "eew0", "eeb0", "eew1", "eeb1",          # encoder_edges  MiniMLP
    "bew0", "beb0", "bew1", "beb1",          # GNNBlock.update_edge (stacked over blocks)
    "bnw0", "bnb0", "bnw1", "bnb1",          # GNNBlock.update_node (stacked over blocks)
    "dnw0", "dnb0", "dnw1", "dnb1",          # decoder_nodes  MiniMLP
    "t",                                     # SoftmaxAggregation temperature (learn=True)
    "dgw0", "dgb0", "dgw1", "dgb1", "dgw2", "dgb2",  # decoder_glob MiniMLP (2 hidden)
]

# Weight matrices go to the MXU in bf16; biases / temperature stay f32.
WEIGHT_KEYS = {"enw0", "enw1", "eew0", "eew1", "bew0", "bew1", "bnw0", "bnw1",
               "dnw0", "dnw1", "dgw0", "dgw1", "dgw2"}


def make_kernel(n_blocks, hidden):
    H = hidden
    bf16 = jnp.bfloat16

    def kernel(x_ref, ea_ref, gsrc_ref, gdst_ref, scat_ref, invdeg_ref, *rest):
        (enw0, enb0, enw1, enb1,
         eew0, eeb0, eew1, eeb1,
         bew0, beb0, bew1, beb1,
         bnw0, bnb0, bnw1, bnb1,
         dnw0, dnb0, dnw1, dnb1,
         t_ref,
         dgw0, dgb0, dgw1, dgb1, dgw2, dgb2,
         y_ref, g_ref) = rest

        def leaky(v):                      # nn.LeakyReLU(0.01), f32 on the VPU
            return jnp.maximum(v, 0.01 * v)

        def dot(a, b):                     # bf16 MXU operands, f32 accumulate
            return jnp.dot(a.astype(bf16), b.astype(bf16),
                           preferred_element_type=jnp.float32)

        x = x_ref[...]            # [N, Fn] f32
        ea = ea_ref[...]          # [E, Fe] f32
        gsrc = gsrc_ref[...]      # [E, N]  bf16 one-hot(source)   (exact 0/1)
        gdst = gdst_ref[...]      # [E, N]  bf16 one-hot(target)   (exact 0/1)
        scat = scat_ref[...]      # [N, E]  bf16 one-hot(target).T (exact 0/1)
        inv_deg = invdeg_ref[...]  # [N, 1] f32 1/deg (applied after exact sum)

        # --- encoders (MiniMLP with one hidden layer) ---
        nf = dot(leaky(dot(x, enw0[0]) + enb0[0]), enw1[0]) + enb1[0]     # [N,H]
        ef = dot(leaky(dot(ea, eew0[0]) + eeb0[0]), eew1[0]) + eeb1[0]    # [E,H]

        # --- processor: n_blocks GNN blocks ---
        for blk in range(n_blocks):
            # per-block weights read directly from the refs (no stacked loads)
            w0 = bew0[0, blk]                 # (3H, H) bf16
            b0 = beb0[0, blk]                 # (1, H)  f32
            w1 = bew1[0, blk]                 # (H, H)  bf16
            b1 = beb1[0, blk]                 # (1, H)  f32
            nw0 = bnw0[0, blk]                # (2H, H) bf16
            nb0 = bnb0[0, blk]                # (1, H)  f32
            nw1 = bnw1[0, blk]                # (H, H)  bf16
            nb1 = bnb1[0, blk]                # (1, H)  f32

            # edge update: reassociated first layer
            #   concat([x_i, x_j, ef]) @ w0 == gdst@(nf@w0[:H]) + gsrc@(nf@w0[H:2H]) + ef@w0[2H:]
            nfa = dot(nf, w0[:H])             # [N, H]
            nfb = dot(nf, w0[H:2 * H])        # [N, H]
            h = leaky(dot(gdst, nfa) + dot(gsrc, nfb) + dot(ef, w0[2 * H:]) + b0)
            edge_out = dot(h, w1) + b1        # [E, H]

            # scatter-mean over targets: exact one-hot sum, f32 1/deg scaling
            aggr = dot(scat, edge_out) * inv_deg          # [N, H]

            # node update
            hn = leaky(dot(nf, nw0[:H]) + dot(aggr, nw0[H:]) + nb0)
            node_out = dot(hn, nw1) + nb1

            ef = edge_out + ef                # edge residual (f32)
            nf = node_out + nf                # node residual (f32)

        # --- node decoder ---
        y = dot(leaky(dot(nf, dnw0[0]) + dnb0[0]), dnw1[0]) + dnb1[0]     # [N,out_n]

        # --- SoftmaxAggregation(learn=True), single graph, + global decoder ---
        t = t_ref[0]                                    # (1, 1)
        s = nf * t
        s_max = jnp.max(s, axis=0, keepdims=True)
        p = jnp.exp(s - s_max)
        denom = jnp.sum(p, axis=0, keepdims=True)       # >= 1 (max term)
        alpha = p * pl.reciprocal(denom, approx=True)   # divide on the EUP slot
        glob_in = jnp.sum(alpha * nf, axis=0, keepdims=True)   # (1, H)

        hg = leaky(dot(glob_in, dgw0[0]) + dgb0[0])
        hg = leaky(dot(hg, dgw1[0]) + dgb1[0])
        glob = dot(hg, dgw2[0]) + dgb2[0]               # (1, out_glob)

        # --- per-model outputs (ensemble mean taken in the wrapper) ---
        y_ref[0] = y
        g_ref[0] = glob

    return kernel


def ensemble_forward(x, edge_attr, edge_index, params, *,
                     n_blocks, n_models, hidden, out_nodes, out_glob):
    N = x.shape[0]
    src, dst = edge_index[0], edge_index[1]

    # Dense one-hot gather / scatter operators (graph structure only).
    # 0/1 values are exact in bf16; the 1/deg scaling stays f32 in-kernel.
    # TODO(synk): replace with scalar-prefetched index gather for large graphs.
    gsrc = jax.nn.one_hot(src, N, dtype=jnp.float32)          # [E, N]
    gdst = jax.nn.one_hot(dst, N, dtype=jnp.float32)          # [E, N]
    counts = gdst.sum(axis=0)                                 # [N]
    inv_deg = (1.0 / jnp.maximum(counts, 1.0)).reshape(N, 1).astype(jnp.float32)

    data = [x.astype(jnp.float32), edge_attr.astype(jnp.float32),
            gsrc.astype(jnp.bfloat16), gdst.astype(jnp.bfloat16),
            gdst.T.astype(jnp.bfloat16), inv_deg]

    plist = [params[k].astype(jnp.bfloat16) if k in WEIGHT_KEYS else
             params[k].astype(jnp.float32) for k in PARAM_ORDER]

    def full_spec(a):             # grid-invariant input, full block
        zeros = (0,) * a.ndim
        return pl.BlockSpec(a.shape, lambda m, z=zeros: z)

    def model_spec(a):            # one model slice per grid step
        tail = (0,) * (a.ndim - 1)
        return pl.BlockSpec((1,) + a.shape[1:], lambda m, t=tail: (m,) + t)

    in_specs = [full_spec(a) for a in data] + [model_spec(a) for a in plist]
    out_specs = [pl.BlockSpec((1, N, out_nodes), lambda m: (m, 0, 0)),
                 pl.BlockSpec((1, 1, out_glob), lambda m: (m, 0, 0))]
    out_shape = (jax.ShapeDtypeStruct((n_models, N, out_nodes), jnp.float32),
                 jax.ShapeDtypeStruct((n_models, 1, out_glob), jnp.float32))

    fn = pl.pallas_call(
        make_kernel(n_blocks, hidden),
        out_shape=out_shape,
        grid_spec=pltpu.PrefetchScalarGridSpec(
            num_scalar_prefetch=0,
            grid=(n_models,),
            in_specs=in_specs,
            out_specs=out_specs,
        ),
        # Per-model outputs -> no cross-step accumulation -> the ensemble axis
        # can be "parallel" (shards across both TensorCores on v7x; neutral on
        # single-core v5e/v6e).
        compiler_params=pltpu.CompilerParams(
            dimension_semantics=("parallel",)),
    )
    y_all, g_all = fn(*data, *plist)
    # ensemble mean (== torch.stack(...).mean(-1)), computed in f32
    return y_all.mean(axis=0), g_all.mean(axis=0)


def init_params(key, n_models, node_f, edge_f, H, n_blocks, out_n, out_g):
    keys = iter(jax.random.split(key, 64))

    def w(shape, scale=0.1):
        return (scale * jax.random.normal(next(keys), shape)).astype(jnp.float32)

    p = {}
    p["enw0"] = w((n_models, node_f, H)); p["enb0"] = w((n_models, 1, H))
    p["enw1"] = w((n_models, H, H));      p["enb1"] = w((n_models, 1, H))
    p["eew0"] = w((n_models, edge_f, H)); p["eeb0"] = w((n_models, 1, H))
    p["eew1"] = w((n_models, H, H));      p["eeb1"] = w((n_models, 1, H))
    p["bew0"] = w((n_models, n_blocks, 3 * H, H)); p["beb0"] = w((n_models, n_blocks, 1, H))
    p["bew1"] = w((n_models, n_blocks, H, H));     p["beb1"] = w((n_models, n_blocks, 1, H))
    p["bnw0"] = w((n_models, n_blocks, 2 * H, H)); p["bnb0"] = w((n_models, n_blocks, 1, H))
    p["bnw1"] = w((n_models, n_blocks, H, H));     p["bnb1"] = w((n_models, n_blocks, 1, H))
    p["dnw0"] = w((n_models, H, H));      p["dnb0"] = w((n_models, 1, H))
    p["dnw1"] = w((n_models, H, out_n));  p["dnb1"] = w((n_models, 1, out_n))
    p["t"] = (1.0 + 0.05 * jnp.arange(n_models, dtype=jnp.float32)).reshape(n_models, 1, 1)
    p["dgw0"] = w((n_models, H, H));      p["dgb0"] = w((n_models, 1, H))
    p["dgw1"] = w((n_models, H, H));      p["dgb1"] = w((n_models, 1, H))
    p["dgw2"] = w((n_models, H, out_g));  p["dgb2"] = w((n_models, 1, out_g))
    return p


def reference_forward(x, ea, edge_index, params, n_blocks, n_models):
    """Pure-JAX f32 reference of Ensemble(EncodeProcessDecode).forward (single graph)."""
    N = x.shape[0]
    src, dst = edge_index[0], edge_index[1]
    gdst = jax.nn.one_hot(dst, N, dtype=jnp.float32)
    counts = gdst.sum(0)

    def leaky(v):
        return jnp.where(v >= 0, v, 0.01 * v)

    def mlp(h, w0, b0, w1, b1):
        return leaky(h @ w0 + b0) @ w1 + b1

    ys, gs = [], []
    for m in range(n_models):
        P = {k: v[m] for k, v in params.items()}
        nf = mlp(x, P["enw0"], P["enb0"][0], P["enw1"], P["enb1"][0])
        ef = mlp(ea, P["eew0"], P["eeb0"][0], P["eew1"], P["eeb1"][0])
        for b in range(n_blocks):
            x_i, x_j = nf[dst], nf[src]
            e_in = jnp.concatenate([x_i, x_j, ef], axis=-1)
            edge_out = mlp(e_in, P["bew0"][b], P["beb0"][b], P["bew1"][b], P["beb1"][b])
            summed = jnp.zeros((N, edge_out.shape[-1]), jnp.float32).at[dst].add(edge_out)
            aggr = summed / jnp.maximum(counts, 1.0)[:, None]
            n_in = jnp.concatenate([nf, aggr], axis=-1)
            node_out = mlp(n_in, P["bnw0"][b], P["bnb0"][b], P["bnw1"][b], P["bnb1"][b])
            ef = edge_out + ef
            nf = node_out + nf
        y = mlp(nf, P["dnw0"], P["dnb0"][0], P["dnw1"], P["dnb1"][0])
        alpha = jax.nn.softmax(nf * P["t"][0, 0], axis=0)
        glob_in = jnp.sum(alpha * nf, axis=0, keepdims=True)
        h = leaky(glob_in @ P["dgw0"] + P["dgb0"][0])
        h = leaky(h @ P["dgw1"] + P["dgb1"][0])
        glob = h @ P["dgw2"] + P["dgb2"][0]
        ys.append(y)
        gs.append(glob)
    return jnp.stack(ys, -1).mean(-1), jnp.stack(gs, -1).mean(-1)


if __name__ == "__main__":
    # Small synthetic configuration
    N = 32               # nodes (single graph)
    node_f, edge_f = 4, 4
    H = 32               # hidden_features
    n_blocks = 2
    out_n, out_g = 3, 2  # out_nodes, out_glob
    n_models = 3

    key = jax.random.PRNGKey(0)
    kx, ke, kp = jax.random.split(key, 3)

    x = jax.random.normal(kx, (N, node_f), jnp.float32)
    # bidirectional ring graph -> E = 2N edges
    fwd = jnp.arange(N, dtype=jnp.int32)
    src = jnp.concatenate([fwd, (fwd + 1) % N])
    dst = jnp.concatenate([(fwd + 1) % N, fwd])
    edge_index = jnp.stack([src, dst])                       # [2, E]
    E = edge_index.shape[1]
    edge_attr = jax.random.normal(ke, (E, edge_f), jnp.float32)

    params = init_params(kp, n_models, node_f, edge_f, H, n_blocks, out_n, out_g)

    y_mean, glob_mean = ensemble_forward(
        x, edge_attr, edge_index, params,
        n_blocks=n_blocks, n_models=n_models, hidden=H,
        out_nodes=out_n, out_glob=out_g)
    jax.block_until_ready((y_mean, glob_mean))

    y_ref, g_ref = reference_forward(x, edge_attr, edge_index, params,
                                     n_blocks, n_models)
    assert y_mean.shape == (N, out_n) and glob_mean.shape == (1, out_g)
    # tolerance reflects bf16 MXU operands (+ approx reciprocal in softmax)
    assert jnp.allclose(y_mean, y_ref, atol=3e-2, rtol=3e-2)
    assert jnp.allclose(glob_mean, g_ref, atol=3e-2, rtol=3e-2)

    print("KERNEL_OK")
</pallas_src>

<mosaic_0001>
module attributes {stable_mosaic.version = 11 : i64} {
  func.func @kernel(%arg0: i32, %arg1: memref<32x4xf32, #tpu.memory_space<vmem>>, %arg2: memref<64x4xf32, #tpu.memory_space<vmem>>, %arg3: memref<64x32xbf16, #tpu.memory_space<vmem>>, %arg4: memref<64x32xbf16, #tpu.memory_space<vmem>>, %arg5: memref<32x64xbf16, #tpu.memory_space<vmem>>, %arg6: memref<32x1xf32, #tpu.memory_space<vmem>>, %arg7: memref<1x4x32xbf16, #tpu.memory_space<vmem>>, %arg8: memref<1x1x32xf32, #tpu.memory_space<vmem>>, %arg9: memref<1x32x32xbf16, #tpu.memory_space<vmem>>, %arg10: memref<1x1x32xf32, #tpu.memory_space<vmem>>, %arg11: memref<1x4x32xbf16, #tpu.memory_space<vmem>>, %arg12: memref<1x1x32xf32, #tpu.memory_space<vmem>>, %arg13: memref<1x32x32xbf16, #tpu.memory_space<vmem>>, %arg14: memref<1x1x32xf32, #tpu.memory_space<vmem>>, %arg15: memref<1x2x96x32xbf16, #tpu.memory_space<vmem>>, %arg16: memref<1x2x1x32xf32, #tpu.memory_space<vmem>>, %arg17: memref<1x2x32x32xbf16, #tpu.memory_space<vmem>>, %arg18: memref<1x2x1x32xf32, #tpu.memory_space<vmem>>, %arg19: memref<1x2x64x32xbf16, #tpu.memory_space<vmem>>, %arg20: memref<1x2x1x32xf32, #tpu.memory_space<vmem>>, %arg21: memref<1x2x32x32xbf16, #tpu.memory_space<vmem>>, %arg22: memref<1x2x1x32xf32, #tpu.memory_space<vmem>>, %arg23: memref<1x32x32xbf16, #tpu.memory_space<vmem>>, %arg24: memref<1x1x32xf32, #tpu.memory_space<vmem>>, %arg25: memref<1x32x3xbf16, #tpu.memory_space<vmem>>, %arg26: memref<1x1x3xf32, #tpu.memory_space<vmem>>, %arg27: memref<1x1x1xf32, #tpu.memory_space<vmem>>, %arg28: memref<1x32x32xbf16, #tpu.memory_space<vmem>>, %arg29: memref<1x1x32xf32, #tpu.memory_space<vmem>>, %arg30: memref<1x32x32xbf16, #tpu.memory_space<vmem>>, %arg31: memref<1x1x32xf32, #tpu.memory_space<vmem>>, %arg32: memref<1x32x2xbf16, #tpu.memory_space<vmem>>, %arg33: memref<1x1x2xf32, #tpu.memory_space<vmem>>, %arg34: memref<1x32x3xf32, #tpu.memory_space<vmem>>, %arg35: memref<1x1x2xf32, #tpu.memory_space<vmem>>) attributes {dimension_semantics = [#tpu.dimension_semantics<parallel>], iteration_bounds = array<i64: 3>, scalar_prefetch = 0 : i64, scratch_operands = 0 : i64, tpu.core_type = #tpu.core_type<tc>, window_params = [{pipeline_mode = #tpu.pipeline_mode<synchronous>, transform_indices = @transform_0, window_bounds = array<i64: 32, 4>}, {pipeline_mode = #tpu.pipeline_mode<synchronous>, transform_indices = @transform_1, window_bounds = array<i64: 64, 4>}, {pipeline_mode = #tpu.pipeline_mode<synchronous>, transform_indices = @transform_2, window_bounds = array<i64: 64, 32>}, {pipeline_mode = #tpu.pipeline_mode<synchronous>, transform_indices = @transform_3, window_bounds = array<i64: 64, 32>}, {pipeline_mode = #tpu.pipeline_mode<synchronous>, transform_indices = @transform_4, window_bounds = array<i64: 32, 64>}, {pipeline_mode = #tpu.pipeline_mode<synchronous>, transform_indices = @transform_5, window_bounds = array<i64: 32, 1>}, {transform_indices = @transform_6, window_bounds = array<i64: 1, 4, 32>}, {transform_indices = @transform_7, window_bounds = array<i64: 1, 1, 32>}, {transform_indices = @transform_8, window_bounds = array<i64: 1, 32, 32>}, {transform_indices = @transform_9, window_bounds = array<i64: 1, 1, 32>}, {transform_indices = @transform_10, window_bounds = array<i64: 1, 4, 32>}, {transform_indices = @transform_11, window_bounds = array<i64: 1, 1, 32>}, {transform_indices = @transform_12, window_bounds = array<i64: 1, 32, 32>}, {transform_indices = @transform_13, window_bounds = array<i64: 1, 1, 32>}, {transform_indices = @transform_14, window_bounds = array<i64: 1, 2, 96, 32>}, {transform_indices = @transform_15, window_bounds = array<i64: 1, 2, 1, 32>}, {transform_indices = @transform_16, window_bounds = array<i64: 1, 2, 32, 32>}, {transform_indices = @transform_17, window_bounds = array<i64: 1, 2, 1, 32>}, {transform_indices = @transform_18, window_bounds = array<i64: 1, 2, 64, 32>}, {transform_indices = @transform_19, window_bounds = array<i64: 1, 2, 1, 32>}, {transform_indices = @transform_20, window_bounds = array<i64: 1, 2, 32, 32>}, {transform_indices = @transform_21, window_bounds = array<i64: 1, 2, 1, 32>}, {transform_indices = @transform_22, window_bounds = array<i64: 1, 32, 32>}, {transform_indices = @transform_23, window_bounds = array<i64: 1, 1, 32>}, {transform_indices = @transform_24, window_bounds = array<i64: 1, 32, 3>}, {transform_indices = @transform_25, window_bounds = array<i64: 1, 1, 3>}, {transform_indices = @transform_26, window_bounds = array<i64: 1, 1, 1>}, {transform_indices = @transform_27, window_bounds = array<i64: 1, 32, 32>}, {transform_indices = @transform_28, window_bounds = array<i64: 1, 1, 32>}, {transform_indices = @transform_29, window_bounds = array<i64: 1, 32, 32>}, {transform_indices = @transform_30, window_bounds = array<i64: 1, 1, 32>}, {transform_indices = @transform_31, window_bounds = array<i64: 1, 32, 2>}, {transform_indices = @transform_32, window_bounds = array<i64: 1, 1, 2>}, {transform_indices = @transform_33, window_bounds = array<i64: 1, 32, 3>}, {transform_indices = @transform_34, window_bounds = array<i64: 1, 1, 2>}]} {
    %c0 = arith.constant 0 : index
    %c0_0 = arith.constant 0 : index
    %0 = vector.load %arg1[%c0, %c0_0] : memref<32x4xf32, #tpu.memory_space<vmem>>, vector<32x4xf32>
    %c0_1 = arith.constant 0 : index
    %c0_2 = arith.constant 0 : index
    %1 = vector.load %arg2[%c0_1, %c0_2] : memref<64x4xf32, #tpu.memory_space<vmem>>, vector<64x4xf32>
    %c0_3 = arith.constant 0 : index
    %c0_4 = arith.constant 0 : index
    %2 = vector.load %arg3[%c0_3, %c0_4] : memref<64x32xbf16, #tpu.memory_space<vmem>>, vector<64x32xbf16>
    %c0_5 = arith.constant 0 : index
    %c0_6 = arith.constant 0 : index
    %3 = vector.load %arg4[%c0_5, %c0_6] : memref<64x32xbf16, #tpu.memory_space<vmem>>, vector<64x32xbf16>
    %c0_7 = arith.constant 0 : index
    %c0_8 = arith.constant 0 : index
    %4 = vector.load %arg5[%c0_7, %c0_8] : memref<32x64xbf16, #tpu.memory_space<vmem>>, vector<32x64xbf16>
    %c0_9 = arith.constant 0 : index
    %c0_10 = arith.constant 0 : index
    %5 = vector.load %arg6[%c0_9, %c0_10] : memref<32x1xf32, #tpu.memory_space<vmem>>, vector<32x1xf32>
    %c0_11 = arith.constant 0 : index
    %c0_12 = arith.constant 0 : index
    %c0_13 = arith.constant 0 : index
    %6 = vector.load %arg7[%c0_11, %c0_12, %c0_13] : memref<1x4x32xbf16, #tpu.memory_space<vmem>>, vector<1x4x32xbf16>
    %7 = vector.shape_cast %6 : vector<1x4x32xbf16> to vector<4x32xbf16>
    %8 = arith.truncf %0 : vector<32x4xf32> to vector<32x4xbf16>
    %cst = arith.constant dense<0.000000e+00> : vector<32x32xf32>
    %9 = tpu.matmul %8, %7, %cst {dimension_numbers = #tpu.dot_dimension_numbers<[1], [0], [0], [1], [0, 0, 1, 1], [], []>} : vector<32x4xbf16>, vector<4x32xbf16>, vector<32x32xf32> -> vector<32x32xf32>
    %c0_14 = arith.constant 0 : index
    %c0_15 = arith.constant 0 : index
    %c0_16 = arith.constant 0 : index
    %10 = vector.load %arg8[%c0_14, %c0_15, %c0_16] : memref<1x1x32xf32, #tpu.memory_space<vmem>>, vector<1x1x32xf32>
    %11 = vector.shape_cast %10 : vector<1x1x32xf32> to vector<1x32xf32>
    %12 = vector.broadcast %11 : vector<1x32xf32> to vector<32x32xf32>
    %13 = arith.addf %9, %12 : vector<32x32xf32>
    %cst_17 = arith.constant 0.00999999977 : f32
    %14 = vector.broadcast %cst_17 : f32 to vector<32x32xf32>
    %15 = arith.mulf %14, %13 : vector<32x32xf32>
    %16 = arith.maximumf %13, %15 : vector<32x32xf32>
    %c0_18 = arith.constant 0 : index
    %c0_19 = arith.constant 0 : index
    %c0_20 = arith.constant 0 : index
    %17 = vector.load %arg9[%c0_18, %c0_19, %c0_20] : memref<1x32x32xbf16, #tpu.memory_space<vmem>>, vector<1x32x32xbf16>
    %18 = vector.shape_cast %17 : vector<1x32x32xbf16> to vector<32x32xbf16>
    %19 = arith.truncf %16 : vector<32x32xf32> to vector<32x32xbf16>
    %cst_21 = arith.constant dense<0.000000e+00> : vector<32x32xf32>
    %20 = tpu.matmul %19, %18, %cst_21 {dimension_numbers = #tpu.dot_dimension_numbers<[1], [0], [0], [1], [0, 0, 1, 1], [], []>} : vector<32x32xbf16>, vector<32x32xbf16>, vector<32x32xf32> -> vector<32x32xf32>
    %c0_22 = arith.constant 0 : index
    %c0_23 = arith.constant 0 : index
    %c0_24 = arith.constant 0 : index
    %21 = vector.load %arg10[%c0_22, %c0_23, %c0_24] : memref<1x1x32xf32, #tpu.memory_space<vmem>>, vector<1x1x32xf32>
    %22 = vector.shape_cast %21 : vector<1x1x32xf32> to vector<1x32xf32>
    %23 = vector.broadcast %22 : vector<1x32xf32> to vector<32x32xf32>
    %24 = arith.addf %20, %23 : vector<32x32xf32>
    %c0_25 = arith.constant 0 : index
    %c0_26 = arith.constant 0 : index
    %c0_27 = arith.constant 0 : index
    %25 = vector.load %arg11[%c0_25, %c0_26, %c0_27] : memref<1x4x32xbf16, #tpu.memory_space<vmem>>, vector<1x4x32xbf16>
    %26 = vector.shape_cast %25 : vector<1x4x32xbf16> to vector<4x32xbf16>
    %27 = arith.truncf %1 : vector<64x4xf32> to vector<64x4xbf16>
    %cst_28 = arith.constant dense<0.000000e+00> : vector<64x32xf32>
    %28 = tpu.matmul %27, %26, %cst_28 {dimension_numbers = #tpu.dot_dimension_numbers<[1], [0], [0], [1], [0, 0, 1, 1], [], []>} : vector<64x4xbf16>, vector<4x32xbf16>, vector<64x32xf32> -> vector<64x32xf32>
    %c0_29 = arith.constant 0 : index
    %c0_30 = arith.constant 0 : index
    %c0_31 = arith.constant 0 : index
    %29 = vector.load %arg12[%c0_29, %c0_30, %c0_31] : memref<1x1x32xf32, #tpu.memory_space<vmem>>, vector<1x1x32xf32>
    %30 = vector.shape_cast %29 : vector<1x1x32xf32> to vector<1x32xf32>
    %31 = vector.broadcast %30 : vector<1x32xf32> to vector<64x32xf32>
    %32 = arith.addf %28, %31 : vector<64x32xf32>
    %cst_32 = arith.constant 0.00999999977 : f32
    %33 = vector.broadcast %cst_32 : f32 to vector<64x32xf32>
    %34 = arith.mulf %33, %32 : vector<64x32xf32>
    %35 = arith.maximumf %32, %34 : vector<64x32xf32>
    %c0_33 = arith.constant 0 : index
    %c0_34 = arith.constant 0 : index
    %c0_35 = arith.constant 0 : index
    %36 = vector.load %arg13[%c0_33, %c0_34, %c0_35] : memref<1x32x32xbf16, #tpu.memory_space<vmem>>, vector<1x32x32xbf16>
    %37 = vector.shape_cast %36 : vector<1x32x32xbf16> to vector<32x32xbf16>
    %38 = arith.truncf %35 : vector<64x32xf32> to vector<64x32xbf16>
    %cst_36 = arith.constant dense<0.000000e+00> : vector<64x32xf32>
    %39 = tpu.matmul %38, %37, %cst_36 {dimension_numbers = #tpu.dot_dimension_numbers<[1], [0], [0], [1], [0, 0, 1, 1], [], []>} : vector<64x32xbf16>, vector<32x32xbf16>, vector<64x32xf32> -> vector<64x32xf32>
    %c0_37 = arith.constant 0 : index
    %c0_38 = arith.constant 0 : index
    %c0_39 = arith.constant 0 : index
    %40 = vector.load %arg14[%c0_37, %c0_38, %c0_39] : memref<1x1x32xf32, #tpu.memory_space<vmem>>, vector<1x1x32xf32>
    %41 = vector.shape_cast %40 : vector<1x1x32xf32> to vector<1x32xf32>
    %42 = vector.broadcast %41 : vector<1x32xf32> to vector<64x32xf32>
    %43 = arith.addf %39, %42 : vector<64x32xf32>
    %c0_40 = arith.constant 0 : index
    %c0_41 = arith.constant 0 : index
    %c0_42 = arith.constant 0 : index
    %c0_43 = arith.constant 0 : index
    %44 = vector.load %arg15[%c0_40, %c0_41, %c0_42, %c0_43] : memref<1x2x96x32xbf16, #tpu.memory_space<vmem>>, vector<1x1x96x32xbf16>
    %45 = vector.shape_cast %44 : vector<1x1x96x32xbf16> to vector<96x32xbf16>
    %c0_44 = arith.constant 0 : index
    %c0_45 = arith.constant 0 : index
    %c0_46 = arith.constant 0 : index
    %c0_47 = arith.constant 0 : index
    %46 = vector.load %arg16[%c0_44, %c0_45, %c0_46, %c0_47] : memref<1x2x1x32xf32, #tpu.memory_space<vmem>>, vector<1x1x1x32xf32>
    %47 = vector.shape_cast %46 : vector<1x1x1x32xf32> to vector<1x32xf32>
    %c0_48 = arith.constant 0 : index
    %c0_49 = arith.constant 0 : index
    %c0_50 = arith.constant 0 : index
    %c0_51 = arith.constant 0 : index
    %48 = vector.load %arg17[%c0_48, %c0_49, %c0_50, %c0_51] : memref<1x2x32x32xbf16, #tpu.memory_space<vmem>>, vector<1x1x32x32xbf16>
    %49 = vector.shape_cast %48 : vector<1x1x32x32xbf16> to vector<32x32xbf16>
    %c0_52 = arith.constant 0 : index
    %c0_53 = arith.constant 0 : index
    %c0_54 = arith.constant 0 : index
    %c0_55 = arith.constant 0 : index
    %50 = vector.load %arg18[%c0_52, %c0_53, %c0_54, %c0_55] : memref<1x2x1x32xf32, #tpu.memory_space<vmem>>, vector<1x1x1x32xf32>
    %51 = vector.shape_cast %50 : vector<1x1x1x32xf32> to vector<1x32xf32>
    %c0_56 = arith.constant 0 : index
    %c0_57 = arith.constant 0 : index
    %c0_58 = arith.constant 0 : index
    %c0_59 = arith.constant 0 : index
    %52 = vector.load %arg19[%c0_56, %c0_57, %c0_58, %c0_59] : memref<1x2x64x32xbf16, #tpu.memory_space<vmem>>, vector<1x1x64x32xbf16>
    %53 = vector.shape_cast %52 : vector<1x1x64x32xbf16> to vector<64x32xbf16>
    %c0_60 = arith.constant 0 : index
    %c0_61 = arith.constant 0 : index
    %c0_62 = arith.constant 0 : index
    %c0_63 = arith.constant 0 : index
    %54 = vector.load %arg20[%c0_60, %c0_61, %c0_62, %c0_63] : memref<1x2x1x32xf32, #tpu.memory_space<vmem>>, vector<1x1x1x32xf32>
    %55 = vector.shape_cast %54 : vector<1x1x1x32xf32> to vector<1x32xf32>
    %c0_64 = arith.constant 0 : index
    %c0_65 = arith.constant 0 : index
    %c0_66 = arith.constant 0 : index
    %c0_67 = arith.constant 0 : index
    %56 = vector.load %arg21[%c0_64, %c0_65, %c0_66, %c0_67] : memref<1x2x32x32xbf16, #tpu.memory_space<vmem>>, vector<1x1x32x32xbf16>
    %57 = vector.shape_cast %56 : vector<1x1x32x32xbf16> to vector<32x32xbf16>
    %c0_68 = arith.constant 0 : index
    %c0_69 = arith.constant 0 : index
    %c0_70 = arith.constant 0 : index
    %c0_71 = arith.constant 0 : index
    %58 = vector.load %arg22[%c0_68, %c0_69, %c0_70, %c0_71] : memref<1x2x1x32xf32, #tpu.memory_space<vmem>>, vector<1x1x1x32xf32>
    %59 = vector.shape_cast %58 : vector<1x1x1x32xf32> to vector<1x32xf32>
    %60 = vector.extract_strided_slice %45 {offsets = [0, 0], sizes = [32, 32], strides = [1, 1]} : vector<96x32xbf16> to vector<32x32xbf16>
    %61 = arith.truncf %24 : vector<32x32xf32> to vector<32x32xbf16>
    %cst_72 = arith.constant dense<0.000000e+00> : vector<32x32xf32>
    %62 = tpu.matmul %61, %60, %cst_72 {dimension_numbers = #tpu.dot_dimension_numbers<[1], [0], [0], [1], [0, 0, 1, 1], [], []>} : vector<32x32xbf16>, vector<32x32xbf16>, vector<32x32xf32> -> vector<32x32xf32>
    %63 = vector.extract_strided_slice %45 {offsets = [32, 0], sizes = [32, 32], strides = [1, 1]} : vector<96x32xbf16> to vector<32x32xbf16>
    %64 = arith.truncf %24 : vector<32x32xf32> to vector<32x32xbf16>
    %cst_73 = arith.constant dense<0.000000e+00> : vector<32x32xf32>
    %65 = tpu.matmul %64, %63, %cst_73 {dimension_numbers = #tpu.dot_dimension_numbers<[1], [0], [0], [1], [0, 0, 1, 1], [], []>} : vector<32x32xbf16>, vector<32x32xbf16>, vector<32x32xf32> -> vector<32x32xf32>
    %66 = arith.truncf %62 : vector<32x32xf32> to vector<32x32xbf16>
    %cst_74 = arith.constant dense<0.000000e+00> : vector<64x32xf32>
    %67 = tpu.matmul %3, %66, %cst_74 {dimension_numbers = #tpu.dot_dimension_numbers<[1], [0], [0], [1], [0, 0, 1, 1], [], []>} : vector<64x32xbf16>, vector<32x32xbf16>, vector<64x32xf32> -> vector<64x32xf32>
    %68 = arith.truncf %65 : vector<32x32xf32> to vector<32x32xbf16>
    %cst_75 = arith.constant dense<0.000000e+00> : vector<64x32xf32>
    %69 = tpu.matmul %2, %68, %cst_75 {dimension_numbers = #tpu.dot_dimension_numbers<[1], [0], [0], [1], [0, 0, 1, 1], [], []>} : vector<64x32xbf16>, vector<32x32xbf16>, vector<64x32xf32> -> vector<64x32xf32>
    %70 = arith.addf %67, %69 : vector<64x32xf32>
    %71 = vector.extract_strided_slice %45 {offsets = [64, 0], sizes = [32, 32], strides = [1, 1]} : vector<96x32xbf16> to vector<32x32xbf16>
    %72 = arith.truncf %43 : vector<64x32xf32> to vector<64x32xbf16>
    %cst_76 = arith.constant dense<0.000000e+00> : vector<64x32xf32>
    %73 = tpu.matmul %72, %71, %cst_76 {dimension_numbers = #tpu.dot_dimension_numbers<[1], [0], [0], [1], [0, 0, 1, 1], [], []>} : vector<64x32xbf16>, vector<32x32xbf16>, vector<64x32xf32> -> vector<64x32xf32>
    %74 = arith.addf %70, %73 : vector<64x32xf32>
    %75 = vector.broadcast %47 : vector<1x32xf32> to vector<64x32xf32>
    %76 = arith.addf %74, %75 : vector<64x32xf32>
    %cst_77 = arith.constant 0.00999999977 : f32
    %77 = vector.broadcast %cst_77 : f32 to vector<64x32xf32>
    %78 = arith.mulf %77, %76 : vector<64x32xf32>
    %79 = arith.maximumf %76, %78 : vector<64x32xf32>
    %80 = arith.truncf %79 : vector<64x32xf32> to vector<64x32xbf16>
    %cst_78 = arith.constant dense<0.000000e+00> : vector<64x32xf32>
    %81 = tpu.matmul %80, %49, %cst_78 {dimension_numbers = #tpu.dot_dimension_numbers<[1], [0], [0], [1], [0, 0, 1, 1], [], []>} : vector<64x32xbf16>, vector<32x32xbf16>, vector<64x32xf32> -> vector<64x32xf32>
    %82 = vector.broadcast %51 : vector<1x32xf32> to vector<64x32xf32>
    %83 = arith.addf %81, %82 : vector<64x32xf32>
    %84 = arith.truncf %83 : vector<64x32xf32> to vector<64x32xbf16>
    %cst_79 = arith.constant dense<0.000000e+00> : vector<32x32xf32>
    %85 = tpu.matmul %4, %84, %cst_79 {dimension_numbers = #tpu.dot_dimension_numbers<[1], [0], [0], [1], [0, 0, 1, 1], [], []>} : vector<32x64xbf16>, vector<64x32xbf16>, vector<32x32xf32> -> vector<32x32xf32>
    %86 = vector.broadcast %5 : vector<32x1xf32> to vector<32x32xf32>
    %87 = arith.mulf %85, %86 : vector<32x32xf32>
    %88 = vector.extract_strided_slice %53 {offsets = [0, 0], sizes = [32, 32], strides = [1, 1]} : vector<64x32xbf16> to vector<32x32xbf16>
    %89 = arith.truncf %24 : vector<32x32xf32> to vector<32x32xbf16>
    %cst_80 = arith.constant dense<0.000000e+00> : vector<32x32xf32>
    %90 = tpu.matmul %89, %88, %cst_80 {dimension_numbers = #tpu.dot_dimension_numbers<[1], [0], [0], [1], [0, 0, 1, 1], [], []>} : vector<32x32xbf16>, vector<32x32xbf16>, vector<32x32xf32> -> vector<32x32xf32>
    %91 = vector.extract_strided_slice %53 {offsets = [32, 0], sizes = [32, 32], strides = [1, 1]} : vector<64x32xbf16> to vector<32x32xbf16>
    %92 = arith.truncf %87 : vector<32x32xf32> to vector<32x32xbf16>
    %cst_81 = arith.constant dense<0.000000e+00> : vector<32x32xf32>
    %93 = tpu.matmul %92, %91, %cst_81 {dimension_numbers = #tpu.dot_dimension_numbers<[1], [0], [0], [1], [0, 0, 1, 1], [], []>} : vector<32x32xbf16>, vector<32x32xbf16>, vector<32x32xf32> -> vector<32x32xf32>
    %94 = arith.addf %90, %93 : vector<32x32xf32>
    %95 = vector.broadcast %55 : vector<1x32xf32> to vector<32x32xf32>
    %96 = arith.addf %94, %95 : vector<32x32xf32>
    %cst_82 = arith.constant 0.00999999977 : f32
    %97 = vector.broadcast %cst_82 : f32 to vector<32x32xf32>
    %98 = arith.mulf %97, %96 : vector<32x32xf32>
    %99 = arith.maximumf %96, %98 : vector<32x32xf32>
    %100 = arith.truncf %99 : vector<32x32xf32> to vector<32x32xbf16>
    %cst_83 = arith.constant dense<0.000000e+00> : vector<32x32xf32>
    %101 = tpu.matmul %100, %57, %cst_83 {dimension_numbers = #tpu.dot_dimension_numbers<[1], [0], [0], [1], [0, 0, 1, 1], [], []>} : vector<32x32xbf16>, vector<32x32xbf16>, vector<32x32xf32> -> vector<32x32xf32>
    %102 = vector.broadcast %59 : vector<1x32xf32> to vector<32x32xf32>
    %103 = arith.addf %101, %102 : vector<32x32xf32>
    %104 = arith.addf %83, %43 : vector<64x32xf32>
    %105 = arith.addf %103, %24 : vector<32x32xf32>
    %c0_84 = arith.constant 0 : index
    %c1 = arith.constant 1 : index
    %c0_85 = arith.constant 0 : index
    %c0_86 = arith.constant 0 : index
    %106 = vector.load %arg15[%c0_84, %c1, %c0_85, %c0_86] : memref<1x2x96x32xbf16, #tpu.memory_space<vmem>>, vector<1x1x96x32xbf16>
    %107 = vector.shape_cast %106 : vector<1x1x96x32xbf16> to vector<96x32xbf16>
    %c0_87 = arith.constant 0 : index
    %c1_88 = arith.constant 1 : index
    %c0_89 = arith.constant 0 : index
    %c0_90 = arith.constant 0 : index
    %108 = vector.load %arg16[%c0_87, %c1_88, %c0_89, %c0_90] : memref<1x2x1x32xf32, #tpu.memory_space<vmem>>, vector<1x1x1x32xf32>
    %109 = vector.shape_cast %108 : vector<1x1x1x32xf32> to vector<1x32xf32>
    %c0_91 = arith.constant 0 : index
    %c1_92 = arith.constant 1 : index
    %c0_93 = arith.constant 0 : index
    %c0_94 = arith.constant 0 : index
    %110 = vector.load %arg17[%c0_91, %c1_92, %c0_93, %c0_94] : memref<1x2x32x32xbf16, #tpu.memory_space<vmem>>, vector<1x1x32x32xbf16>
    %111 = vector.shape_cast %110 : vector<1x1x32x32xbf16> to vector<32x32xbf16>
    %c0_95 = arith.constant 0 : index
    %c1_96 = arith.constant 1 : index
    %c0_97 = arith.constant 0 : index
    %c0_98 = arith.constant 0 : index
    %112 = vector.load %arg18[%c0_95, %c1_96, %c0_97, %c0_98] : memref<1x2x1x32xf32, #tpu.memory_space<vmem>>, vector<1x1x1x32xf32>
    %113 = vector.shape_cast %112 : vector<1x1x1x32xf32> to vector<1x32xf32>
    %c0_99 = arith.constant 0 : index
    %c1_100 = arith.constant 1 : index
    %c0_101 = arith.constant 0 : index
    %c0_102 = arith.constant 0 : index
    %114 = vector.load %arg19[%c0_99, %c1_100, %c0_101, %c0_102] : memref<1x2x64x32xbf16, #tpu.memory_space<vmem>>, vector<1x1x64x32xbf16>
    %115 = vector.shape_cast %114 : vector<1x1x64x32xbf16> to vector<64x32xbf16>
    %c0_103 = arith.constant 0 : index
    %c1_104 = arith.constant 1 : index
    %c0_105 = arith.constant 0 : index
    %c0_106 = arith.constant 0 : index
    %116 = vector.load %arg20[%c0_103, %c1_104, %c0_105, %c0_106] : memref<1x2x1x32xf32, #tpu.memory_space<vmem>>, vector<1x1x1x32xf32>
    %117 = vector.shape_cast %116 : vector<1x1x1x32xf32> to vector<1x32xf32>
    %c0_107 = arith.constant 0 : index
    %c1_108 = arith.constant 1 : index
    %c0_109 = arith.constant 0 : index
    %c0_110 = arith.constant 0 : index
    %118 = vector.load %arg21[%c0_107, %c1_108, %c0_109, %c0_110] : memref<1x2x32x32xbf16, #tpu.memory_space<vmem>>, vector<1x1x32x32xbf16>
    %119 = vector.shape_cast %118 : vector<1x1x32x32xbf16> to vector<32x32xbf16>
    %c0_111 = arith.constant 0 : index
    %c1_112 = arith.constant 1 : index
    %c0_113 = arith.constant 0 : index
    %c0_114 = arith.constant 0 : index
    %120 = vector.load %arg22[%c0_111, %c1_112, %c0_113, %c0_114] : memref<1x2x1x32xf32, #tpu.memory_space<vmem>>, vector<1x1x1x32xf32>
    %121 = vector.shape_cast %120 : vector<1x1x1x32xf32> to vector<1x32xf32>
    %122 = vector.extract_strided_slice %107 {offsets = [0, 0], sizes = [32, 32], strides = [1, 1]} : vector<96x32xbf16> to vector<32x32xbf16>
    %123 = arith.truncf %105 : vector<32x32xf32> to vector<32x32xbf16>
    %cst_115 = arith.constant dense<0.000000e+00> : vector<32x32xf32>
    %124 = tpu.matmul %123, %122, %cst_115 {dimension_numbers = #tpu.dot_dimension_numbers<[1], [0], [0], [1], [0, 0, 1, 1], [], []>} : vector<32x32xbf16>, vector<32x32xbf16>, vector<32x32xf32> -> vector<32x32xf32>
    %125 = vector.extract_strided_slice %107 {offsets = [32, 0], sizes = [32, 32], strides = [1, 1]} : vector<96x32xbf16> to vector<32x32xbf16>
    %126 = arith.truncf %105 : vector<32x32xf32> to vector<32x32xbf16>
    %cst_116 = arith.constant dense<0.000000e+00> : vector<32x32xf32>
    %127 = tpu.matmul %126, %125, %cst_116 {dimension_numbers = #tpu.dot_dimension_numbers<[1], [0], [0], [1], [0, 0, 1, 1], [], []>} : vector<32x32xbf16>, vector<32x32xbf16>, vector<32x32xf32> -> vector<32x32xf32>
    %128 = arith.truncf %124 : vector<32x32xf32> to vector<32x32xbf16>
    %cst_117 = arith.constant dense<0.000000e+00> : vector<64x32xf32>
    %129 = tpu.matmul %3, %128, %cst_117 {dimension_numbers = #tpu.dot_dimension_numbers<[1], [0], [0], [1], [0, 0, 1, 1], [], []>} : vector<64x32xbf16>, vector<32x32xbf16>, vector<64x32xf32> -> vector<64x32xf32>
    %130 = arith.truncf %127 : vector<32x32xf32> to vector<32x32xbf16>
    %cst_118 = arith.constant dense<0.000000e+00> : vector<64x32xf32>
    %131 = tpu.matmul %2, %130, %cst_118 {dimension_numbers = #tpu.dot_dimension_numbers<[1], [0], [0], [1], [0, 0, 1, 1], [], []>} : vector<64x32xbf16>, vector<32x32xbf16>, vector<64x32xf32> -> vector<64x32xf32>
    %132 = arith.addf %129, %131 : vector<64x32xf32>
    %133 = vector.extract_strided_slice %107 {offsets = [64, 0], sizes = [32, 32], strides = [1, 1]} : vector<96x32xbf16> to vector<32x32xbf16>
    %134 = arith.truncf %104 : vector<64x32xf32> to vector<64x32xbf16>
    %cst_119 = arith.constant dense<0.000000e+00> : vector<64x32xf32>
    %135 = tpu.matmul %134, %133, %cst_119 {dimension_numbers = #tpu.dot_dimension_numbers<[1], [0], [0], [1], [0, 0, 1, 1], [], []>} : vector<64x32xbf16>, vector<32x32xbf16>, vector<64x32xf32> -> vector<64x32xf32>
    %136 = arith.addf %132, %135 : vector<64x32xf32>
    %137 = vector.broadcast %109 : vector<1x32xf32> to vector<64x32xf32>
    %138 = arith.addf %136, %137 : vector<64x32xf32>
    %cst_120 = arith.constant 0.00999999977 : f32
    %139 = vector.broadcast %cst_120 : f32 to vector<64x32xf32>
    %140 = arith.mulf %139, %138 : vector<64x32xf32>
    %141 = arith.maximumf %138, %140 : vector<64x32xf32>
    %142 = arith.truncf %141 : vector<64x32xf32> to vector<64x32xbf16>
    %cst_121 = arith.constant dense<0.000000e+00> : vector<64x32xf32>
    %143 = tpu.matmul %142, %111, %cst_121 {dimension_numbers = #tpu.dot_dimension_numbers<[1], [0], [0], [1], [0, 0, 1, 1], [], []>} : vector<64x32xbf16>, vector<32x32xbf16>, vector<64x32xf32> -> vector<64x32xf32>
    %144 = vector.broadcast %113 : vector<1x32xf32> to vector<64x32xf32>
    %145 = arith.addf %143, %144 : vector<64x32xf32>
    %146 = arith.truncf %145 : vector<64x32xf32> to vector<64x32xbf16>
    %cst_122 = arith.constant dense<0.000000e+00> : vector<32x32xf32>
    %147 = tpu.matmul %4, %146, %cst_122 {dimension_numbers = #tpu.dot_dimension_numbers<[1], [0], [0], [1], [0, 0, 1, 1], [], []>} : vector<32x64xbf16>, vector<64x32xbf16>, vector<32x32xf32> -> vector<32x32xf32>
    %148 = vector.broadcast %5 : vector<32x1xf32> to vector<32x32xf32>
    %149 = arith.mulf %147, %148 : vector<32x32xf32>
    %150 = vector.extract_strided_slice %115 {offsets = [0, 0], sizes = [32, 32], strides = [1, 1]} : vector<64x32xbf16> to vector<32x32xbf16>
    %151 = arith.truncf %105 : vector<32x32xf32> to vector<32x32xbf16>
    %cst_123 = arith.constant dense<0.000000e+00> : vector<32x32xf32>
    %152 = tpu.matmul %151, %150, %cst_123 {dimension_numbers = #tpu.dot_dimension_numbers<[1], [0], [0], [1], [0, 0, 1, 1], [], []>} : vector<32x32xbf16>, vector<32x32xbf16>, vector<32x32xf32> -> vector<32x32xf32>
    %153 = vector.extract_strided_slice %115 {offsets = [32, 0], sizes = [32, 32], strides = [1, 1]} : vector<64x32xbf16> to vector<32x32xbf16>
    %154 = arith.truncf %149 : vector<32x32xf32> to vector<32x32xbf16>
    %cst_124 = arith.constant dense<0.000000e+00> : vector<32x32xf32>
    %155 = tpu.matmul %154, %153, %cst_124 {dimension_numbers = #tpu.dot_dimension_numbers<[1], [0], [0], [1], [0, 0, 1, 1], [], []>} : vector<32x32xbf16>, vector<32x32xbf16>, vector<32x32xf32> -> vector<32x32xf32>
    %156 = arith.addf %152, %155 : vector<32x32xf32>
    %157 = vector.broadcast %117 : vector<1x32xf32> to vector<32x32xf32>
    %158 = arith.addf %156, %157 : vector<32x32xf32>
    %cst_125 = arith.constant 0.00999999977 : f32
    %159 = vector.broadcast %cst_125 : f32 to vector<32x32xf32>
    %160 = arith.mulf %159, %158 : vector<32x32xf32>
    %161 = arith.maximumf %158, %160 : vector<32x32xf32>
    %162 = arith.truncf %161 : vector<32x32xf32> to vector<32x32xbf16>
    %cst_126 = arith.constant dense<0.000000e+00> : vector<32x32xf32>
    %163 = tpu.matmul %162, %119, %cst_126 {dimension_numbers = #tpu.dot_dimension_numbers<[1], [0], [0], [1], [0, 0, 1, 1], [], []>} : vector<32x32xbf16>, vector<32x32xbf16>, vector<32x32xf32> -> vector<32x32xf32>
    %164 = vector.broadcast %121 : vector<1x32xf32> to vector<32x32xf32>
    %165 = arith.addf %163, %164 : vector<32x32xf32>
    %166 = arith.addf %165, %105 : vector<32x32xf32>
    %c0_127 = arith.constant 0 : index
    %c0_128 = arith.constant 0 : index
    %c0_129 = arith.constant 0 : index
    %167 = vector.load %arg23[%c0_127, %c0_128, %c0_129] : memref<1x32x32xbf16, #tpu.memory_space<vmem>>, vector<1x32x32xbf16>
    %168 = vector.shape_cast %167 : vector<1x32x32xbf16> to vector<32x32xbf16>
    %169 = arith.truncf %166 : vector<32x32xf32> to vector<32x32xbf16>
    %cst_130 = arith.constant dense<0.000000e+00> : vector<32x32xf32>
    %170 = tpu.matmul %169, %168, %cst_130 {dimension_numbers = #tpu.dot_dimension_numbers<[1], [0], [0], [1], [0, 0, 1, 1], [], []>} : vector<32x32xbf16>, vector<32x32xbf16>, vector<32x32xf32> -> vector<32x32xf32>
    %c0_131 = arith.constant 0 : index
    %c0_132 = arith.constant 0 : index
    %c0_133 = arith.constant 0 : index
    %171 = vector.load %arg24[%c0_131, %c0_132, %c0_133] : memref<1x1x32xf32, #tpu.memory_space<vmem>>, vector<1x1x32xf32>
    %172 = vector.shape_cast %171 : vector<1x1x32xf32> to vector<1x32xf32>
    %173 = vector.broadcast %172 : vector<1x32xf32> to vector<32x32xf32>
    %174 = arith.addf %170, %173 : vector<32x32xf32>
    %cst_134 = arith.constant 0.00999999977 : f32
    %175 = vector.broadcast %cst_134 : f32 to vector<32x32xf32>
    %176 = arith.mulf %175, %174 : vector<32x32xf32>
    %177 = arith.maximumf %174, %176 : vector<32x32xf32>
    %c0_135 = arith.constant 0 : index
    %c0_136 = arith.constant 0 : index
    %c0_137 = arith.constant 0 : index
    %178 = vector.load %arg25[%c0_135, %c0_136, %c0_137] : memref<1x32x3xbf16, #tpu.memory_space<vmem>>, vector<1x32x3xbf16>
    %179 = vector.shape_cast %178 : vector<1x32x3xbf16> to vector<32x3xbf16>
    %180 = arith.truncf %177 : vector<32x32xf32> to vector<32x32xbf16>
    %cst_138 = arith.constant dense<0.000000e+00> : vector<32x3xf32>
    %181 = tpu.matmul %180, %179, %cst_138 {dimension_numbers = #tpu.dot_dimension_numbers<[1], [0], [0], [1], [0, 0, 1, 1], [], []>} : vector<32x32xbf16>, vector<32x3xbf16>, vector<32x3xf32> -> vector<32x3xf32>
    %c0_139 = arith.constant 0 : index
    %c0_140 = arith.constant 0 : index
    %c0_141 = arith.constant 0 : index
    %182 = vector.load %arg26[%c0_139, %c0_140, %c0_141] : memref<1x1x3xf32, #tpu.memory_space<vmem>>, vector<1x1x3xf32>
    %183 = vector.shape_cast %182 : vector<1x1x3xf32> to vector<1x3xf32>
    %184 = vector.broadcast %183 : vector<1x3xf32> to vector<32x3xf32>
    %185 = arith.addf %181, %184 : vector<32x3xf32>
    %c0_142 = arith.constant 0 : index
    %c0_143 = arith.constant 0 : index
    %c0_144 = arith.constant 0 : index
    %186 = vector.load %arg27[%c0_142, %c0_143, %c0_144] : memref<1x1x1xf32, #tpu.memory_space<vmem>>, vector<1x1x1xf32>
    %187 = vector.shape_cast %186 : vector<1x1x1xf32> to vector<1x1xf32>
    %188 = vector.broadcast %187 : vector<1x1xf32> to vector<32x32xf32>
    %189 = arith.mulf %166, %188 : vector<32x32xf32>
    %cst_145 = arith.constant dense<0xFF800000> : vector<32xf32>
    %190 = vector.multi_reduction <maximumf>, %189, %cst_145 [0] : vector<32x32xf32> to vector<32xf32>
    %191 = vector.shape_cast %190 : vector<32xf32> to vector<1x32xf32>
    %192 = vector.broadcast %191 : vector<1x32xf32> to vector<32x32xf32>
    %193 = arith.subf %189, %192 : vector<32x32xf32>
    %194 = math.exp %193 : vector<32x32xf32>
    %cst_146 = arith.constant dense<0.000000e+00> : vector<32xf32>
    %195 = vector.multi_reduction <add>, %194, %cst_146 [0] : vector<32x32xf32> to vector<32xf32>
    %196 = vector.shape_cast %195 : vector<32xf32> to vector<1x32xf32>
    %197 = tpu.reciprocal %196 {approx = true} : vector<1x32xf32> -> vector<1x32xf32>
    %198 = vector.broadcast %197 : vector<1x32xf32> to vector<32x32xf32>
    %199 = arith.mulf %194, %198 : vector<32x32xf32>
    %200 = arith.mulf %199, %166 : vector<32x32xf32>
    %cst_147 = arith.constant dense<0.000000e+00> : vector<32xf32>
    %201 = vector.multi_reduction <add>, %200, %cst_147 [0] : vector<32x32xf32> to vector<32xf32>
    %202 = vector.shape_cast %201 : vector<32xf32> to vector<1x32xf32>
    %c0_148 = arith.constant 0 : index
    %c0_149 = arith.constant 0 : index
    %c0_150 = arith.constant 0 : index
    %203 = vector.load %arg28[%c0_148, %c0_149, %c0_150] : memref<1x32x32xbf16, #tpu.memory_space<vmem>>, vector<1x32x32xbf16>
    %204 = vector.shape_cast %203 : vector<1x32x32xbf16> to vector<32x32xbf16>
    %205 = arith.truncf %202 : vector<1x32xf32> to vector<1x32xbf16>
    %cst_151 = arith.constant dense<0.000000e+00> : vector<1x32xf32>
    %206 = tpu.matmul %205, %204, %cst_151 {dimension_numbers = #tpu.dot_dimension_numbers<[1], [0], [0], [1], [0, 0, 1, 1], [], []>} : vector<1x32xbf16>, vector<32x32xbf16>, vector<1x32xf32> -> vector<1x32xf32>
    %c0_152 = arith.constant 0 : index
    %c0_153 = arith.constant 0 : index
    %c0_154 = arith.constant 0 : index
    %207 = vector.load %arg29[%c0_152, %c0_153, %c0_154] : memref<1x1x32xf32, #tpu.memory_space<vmem>>, vector<1x1x32xf32>
    %208 = vector.shape_cast %207 : vector<1x1x32xf32> to vector<1x32xf32>
    %209 = arith.addf %206, %208 : vector<1x32xf32>
    %cst_155 = arith.constant 0.00999999977 : f32
    %210 = vector.broadcast %cst_155 : f32 to vector<1x32xf32>
    %211 = arith.mulf %210, %209 : vector<1x32xf32>
    %212 = arith.maximumf %209, %211 : vector<1x32xf32>
    %c0_156 = arith.constant 0 : index
    %c0_157 = arith.constant 0 : index
    %c0_158 = arith.constant 0 : index
    %213 = vector.load %arg30[%c0_156, %c0_157, %c0_158] : memref<1x32x32xbf16, #tpu.memory_space<vmem>>, vector<1x32x32xbf16>
    %214 = vector.shape_cast %213 : vector<1x32x32xbf16> to vector<32x32xbf16>
    %215 = arith.truncf %212 : vector<1x32xf32> to vector<1x32xbf16>
    %cst_159 = arith.constant dense<0.000000e+00> : vector<1x32xf32>
    %216 = tpu.matmul %215, %214, %cst_159 {dimension_numbers = #tpu.dot_dimension_numbers<[1], [0], [0], [1], [0, 0, 1, 1], [], []>} : vector<1x32xbf16>, vector<32x32xbf16>, vector<1x32xf32> -> vector<1x32xf32>
    %c0_160 = arith.constant 0 : index
    %c0_161 = arith.constant 0 : index
    %c0_162 = arith.constant 0 : index
    %217 = vector.load %arg31[%c0_160, %c0_161, %c0_162] : memref<1x1x32xf32, #tpu.memory_space<vmem>>, vector<1x1x32xf32>
    %218 = vector.shape_cast %217 : vector<1x1x32xf32> to vector<1x32xf32>
    %219 = arith.addf %216, %218 : vector<1x32xf32>
    %cst_163 = arith.constant 0.00999999977 : f32
    %220 = vector.broadcast %cst_163 : f32 to vector<1x32xf32>
    %221 = arith.mulf %220, %219 : vector<1x32xf32>
    %222 = arith.maximumf %219, %221 : vector<1x32xf32>
    %c0_164 = arith.constant 0 : index
    %c0_165 = arith.constant 0 : index
    %c0_166 = arith.constant 0 : index
    %223 = vector.load %arg32[%c0_164, %c0_165, %c0_166] : memref<1x32x2xbf16, #tpu.memory_space<vmem>>, vector<1x32x2xbf16>
    %224 = vector.shape_cast %223 : vector<1x32x2xbf16> to vector<32x2xbf16>
    %225 = arith.truncf %222 : vector<1x32xf32> to vector<1x32xbf16>
    %cst_167 = arith.constant dense<0.000000e+00> : vector<1x2xf32>
    %226 = tpu.matmul %225, %224, %cst_167 {dimension_numbers = #tpu.dot_dimension_numbers<[1], [0], [0], [1], [0, 0, 1, 1], [], []>} : vector<1x32xbf16>, vector<32x2xbf16>, vector<1x2xf32> -> vector<1x2xf32>
    %c0_168 = arith.constant 0 : index
    %c0_169 = arith.constant 0 : index
    %c0_170 = arith.constant 0 : index
    %227 = vector.load %arg33[%c0_168, %c0_169, %c0_170] : memref<1x1x2xf32, #tpu.memory_space<vmem>>, vector<1x1x2xf32>
    %228 = vector.shape_cast %227 : vector<1x1x2xf32> to vector<1x2xf32>
    %229 = arith.addf %226, %228 : vector<1x2xf32>
    %c0_171 = arith.constant 0 : index
    %c0_172 = arith.constant 0 : index
    %c0_173 = arith.constant 0 : index
    %230 = vector.load %arg34[%c0_171, %c0_172, %c0_173] : memref<1x32x3xf32, #tpu.memory_space<vmem>>, vector<1x32x3xf32>
    %231 = vector.shape_cast %230 : vector<1x32x3xf32> to vector<32x3xf32>
    %232 = vector.shape_cast %185 : vector<32x3xf32> to vector<1x32x3xf32>
    tpu.vector_store %arg34[%c0_171, %c0_172, %c0_173], %232 {strides = array<i32>} : memref<1x32x3xf32, #tpu.memory_space<vmem>>, vector<1x32x3xf32>,
    %c0_174 = arith.constant 0 : index
    %c0_175 = arith.constant 0 : index
    %c0_176 = arith.constant 0 : index
    %233 = vector.load %arg35[%c0_174, %c0_175, %c0_176] : memref<1x1x2xf32, #tpu.memory_space<vmem>>, vector<1x1x2xf32>
    %234 = vector.shape_cast %233 : vector<1x1x2xf32> to vector<1x2xf32>
    %235 = vector.shape_cast %229 : vector<1x2xf32> to vector<1x1x2xf32>
    tpu.vector_store %arg35[%c0_174, %c0_175, %c0_176], %235 {strides = array<i32>} : memref<1x1x2xf32, #tpu.memory_space<vmem>>, vector<1x1x2xf32>,
    return
  }
  func.func @transform_0(%arg0: i32) -> (i32, i32) {
    %c0_i32 = arith.constant 0 : i32
    %c0_i32_0 = arith.constant 0 : i32
    %c0_i32_1 = arith.constant 0 : i32
    return %c0_i32, %c0_i32_0 : i32, i32
  }
  func.func @transform_1(%arg0: i32) -> (i32, i32) {
    %c0_i32 = arith.constant 0 : i32
    %c0_i32_0 = arith.constant 0 : i32
    %c0_i32_1 = arith.constant 0 : i32
    return %c0_i32, %c0_i32_0 : i32, i32
  }
  func.func @transform_2(%arg0: i32) -> (i32, i32) {
    %c0_i32 = arith.constant 0 : i32
    %c0_i32_0 = arith.constant 0 : i32
    %c0_i32_1 = arith.constant 0 : i32
    return %c0_i32, %c0_i32_0 : i32, i32
  }
  func.func @transform_3(%arg0: i32) -> (i32, i32) {
    %c0_i32 = arith.constant 0 : i32
    %c0_i32_0 = arith.constant 0 : i32
    %c0_i32_1 = arith.constant 0 : i32
    return %c0_i32, %c0_i32_0 : i32, i32
  }
  func.func @transform_4(%arg0: i32) -> (i32, i32) {
    %c0_i32 = arith.constant 0 : i32
    %c0_i32_0 = arith.constant 0 : i32
    %c0_i32_1 = arith.constant 0 : i32
    return %c0_i32, %c0_i32_0 : i32, i32
  }
  func.func @transform_5(%arg0: i32) -> (i32, i32) {
    %c0_i32 = arith.constant 0 : i32
    %c0_i32_0 = arith.constant 0 : i32
    %c0_i32_1 = arith.constant 0 : i32
    return %c0_i32, %c0_i32_0 : i32, i32
  }
  func.func @transform_6(%arg0: i32) -> (i32, i32, i32) {
    %c0_i32 = arith.constant 0 : i32
    %c0_i32_0 = arith.constant 0 : i32
    %c0_i32_1 = arith.constant 0 : i32
    return %arg0, %c0_i32, %c0_i32_0 : i32, i32, i32
  }
  func.func @transform_7(%arg0: i32) -> (i32, i32, i32) {
    %c0_i32 = arith.constant 0 : i32
    %c0_i32_0 = arith.constant 0 : i32
    %c0_i32_1 = arith.constant 0 : i32
    return %arg0, %c0_i32, %c0_i32_0 : i32, i32, i32
  }
  func.func @transform_8(%arg0: i32) -> (i32, i32, i32) {
    %c0_i32 = arith.constant 0 : i32
    %c0_i32_0 = arith.constant 0 : i32
    %c0_i32_1 = arith.constant 0 : i32
    return %arg0, %c0_i32, %c0_i32_0 : i32, i32, i32
  }
  func.func @transform_9(%arg0: i32) -> (i32, i32, i32) {
    %c0_i32 = arith.constant 0 : i32
    %c0_i32_0 = arith.constant 0 : i32
    %c0_i32_1 = arith.constant 0 : i32
    return %arg0, %c0_i32, %c0_i32_0 : i32, i32, i32
  }
  func.func @transform_10(%arg0: i32) -> (i32, i32, i32) {
    %c0_i32 = arith.constant 0 : i32
    %c0_i32_0 = arith.constant 0 : i32
    %c0_i32_1 = arith.constant 0 : i32
    return %arg0, %c0_i32, %c0_i32_0 : i32, i32, i32
  }
  func.func @transform_11(%arg0: i32) -> (i32, i32, i32) {
    %c0_i32 = arith.constant 0 : i32
    %c0_i32_0 = arith.constant 0 : i32
    %c0_i32_1 = arith.constant 0 : i32
    return %arg0, %c0_i32, %c0_i32_0 : i32, i32, i32
  }
  func.func @transform_12(%arg0: i32) -> (i32, i32, i32) {
    %c0_i32 = arith.constant 0 : i32
    %c0_i32_0 = arith.constant 0 : i32
    %c0_i32_1 = arith.constant 0 : i32
    return %arg0, %c0_i32, %c0_i32_0 : i32, i32, i32
  }
  func.func @transform_13(%arg0: i32) -> (i32, i32, i32) {
    %c0_i32 = arith.constant 0 : i32
    %c0_i32_0 = arith.constant 0 : i32
    %c0_i32_1 = arith.constant 0 : i32
    return %arg0, %c0_i32, %c0_i32_0 : i32, i32, i32
  }
  func.func @transform_14(%arg0: i32) -> (i32, i32, i32, i32) {
    %c0_i32 = arith.constant 0 : i32
    %c0_i32_0 = arith.constant 0 : i32
    %c0_i32_1 = arith.constant 0 : i32
    %c0_i32_2 = arith.constant 0 : i32
    return %arg0, %c0_i32, %c0_i32_0, %c0_i32_1 : i32, i32, i32, i32
  }
  func.func @transform_15(%arg0: i32) -> (i32, i32, i32, i32) {
    %c0_i32 = arith.constant 0 : i32
    %c0_i32_0 = arith.constant 0 : i32
    %c0_i32_1 = arith.constant 0 : i32
    %c0_i32_2 = arith.constant 0 : i32
    return %arg0, %c0_i32, %c0_i32_0, %c0_i32_1 : i32, i32, i32, i32
  }
  func.func @transform_16(%arg0: i32) -> (i32, i32, i32, i32) {
    %c0_i32 = arith.constant 0 : i32
    %c0_i32_0 = arith.constant 0 : i32
    %c0_i32_1 = arith.constant 0 : i32
    %c0_i32_2 = arith.constant 0 : i32
    return %arg0, %c0_i32, %c0_i32_0, %c0_i32_1 : i32, i32, i32, i32
  }
  func.func @transform_17(%arg0: i32) -> (i32, i32, i32, i32) {
    %c0_i32 = arith.constant 0 : i32
    %c0_i32_0 = arith.constant 0 : i32
    %c0_i32_1 = arith.constant 0 : i32
    %c0_i32_2 = arith.constant 0 : i32
    return %arg0, %c0_i32, %c0_i32_0, %c0_i32_1 : i32, i32, i32, i32
  }
  func.func @transform_18(%arg0: i32) -> (i32, i32, i32, i32) {
    %c0_i32 = arith.constant 0 : i32
    %c0_i32_0 = arith.constant 0 : i32
    %c0_i32_1 = arith.constant 0 : i32
    %c0_i32_2 = arith.constant 0 : i32
    return %arg0, %c0_i32, %c0_i32_0, %c0_i32_1 : i32, i32, i32, i32
  }
  func.func @transform_19(%arg0: i32) -> (i32, i32, i32, i32) {
    %c0_i32 = arith.constant 0 : i32
    %c0_i32_0 = arith.constant 0 : i32
    %c0_i32_1 = arith.constant 0 : i32
    %c0_i32_2 = arith.constant 0 : i32
    return %arg0, %c0_i32, %c0_i32_0, %c0_i32_1 : i32, i32, i32, i32
  }
  func.func @transform_20(%arg0: i32) -> (i32, i32, i32, i32) {
    %c0_i32 = arith.constant 0 : i32
    %c0_i32_0 = arith.constant 0 : i32
    %c0_i32_1 = arith.constant 0 : i32
    %c0_i32_2 = arith.constant 0 : i32
    return %arg0, %c0_i32, %c0_i32_0, %c0_i32_1 : i32, i32, i32, i32
  }
  func.func @transform_21(%arg0: i32) -> (i32, i32, i32, i32) {
    %c0_i32 = arith.constant 0 : i32
    %c0_i32_0 = arith.constant 0 : i32
    %c0_i32_1 = arith.constant 0 : i32
    %c0_i32_2 = arith.constant 0 : i32
    return %arg0, %c0_i32, %c0_i32_0, %c0_i32_1 : i32, i32, i32, i32
  }
  func.func @transform_22(%arg0: i32) -> (i32, i32, i32) {
    %c0_i32 = arith.constant 0 : i32
    %c0_i32_0 = arith.constant 0 : i32
    %c0_i32_1 = arith.constant 0 : i32
    return %arg0, %c0_i32, %c0_i32_0 : i32, i32, i32
  }
  func.func @transform_23(%arg0: i32) -> (i32, i32, i32) {
    %c0_i32 = arith.constant 0 : i32
    %c0_i32_0 = arith.constant 0 : i32
    %c0_i32_1 = arith.constant 0 : i32
    return %arg0, %c0_i32, %c0_i32_0 : i32, i32, i32
  }
  func.func @transform_24(%arg0: i32) -> (i32, i32, i32) {
    %c0_i32 = arith.constant 0 : i32
    %c0_i32_0 = arith.constant 0 : i32
    %c0_i32_1 = arith.constant 0 : i32
    return %arg0, %c0_i32, %c0_i32_0 : i32, i32, i32
  }
  func.func @transform_25(%arg0: i32) -> (i32, i32, i32) {
    %c0_i32 = arith.constant 0 : i32
    %c0_i32_0 = arith.constant 0 : i32
    %c0_i32_1 = arith.constant 0 : i32
    return %arg0, %c0_i32, %c0_i32_0 : i32, i32, i32
  }
  func.func @transform_26(%arg0: i32) -> (i32, i32, i32) {
    %c0_i32 = arith.constant 0 : i32
    %c0_i32_0 = arith.constant 0 : i32
    %c0_i32_1 = arith.constant 0 : i32
    return %arg0, %c0_i32, %c0_i32_0 : i32, i32, i32
  }
  func.func @transform_27(%arg0: i32) -> (i32, i32, i32) {
    %c0_i32 = arith.constant 0 : i32
    %c0_i32_0 = arith.constant 0 : i32
    %c0_i32_1 = arith.constant 0 : i32
    return %arg0, %c0_i32, %c0_i32_0 : i32, i32, i32
  }
  func.func @transform_28(%arg0: i32) -> (i32, i32, i32) {
    %c0_i32 = arith.constant 0 : i32
    %c0_i32_0 = arith.constant 0 : i32
    %c0_i32_1 = arith.constant 0 : i32
    return %arg0, %c0_i32, %c0_i32_0 : i32, i32, i32
  }
  func.func @transform_29(%arg0: i32) -> (i32, i32, i32) {
    %c0_i32 = arith.constant 0 : i32
    %c0_i32_0 = arith.constant 0 : i32
    %c0_i32_1 = arith.constant 0 : i32
    return %arg0, %c0_i32, %c0_i32_0 : i32, i32, i32
  }
  func.func @transform_30(%arg0: i32) -> (i32, i32, i32) {
    %c0_i32 = arith.constant 0 : i32
    %c0_i32_0 = arith.constant 0 : i32
    %c0_i32_1 = arith.constant 0 : i32
    return %arg0, %c0_i32, %c0_i32_0 : i32, i32, i32
  }
  func.func @transform_31(%arg0: i32) -> (i32, i32, i32) {
    %c0_i32 = arith.constant 0 : i32
    %c0_i32_0 = arith.constant 0 : i32
    %c0_i32_1 = arith.constant 0 : i32
    return %arg0, %c0_i32, %c0_i32_0 : i32, i32, i32
  }
  func.func @transform_32(%arg0: i32) -> (i32, i32, i32) {
    %c0_i32 = arith.constant 0 : i32
    %c0_i32_0 = arith.constant 0 : i32
    %c0_i32_1 = arith.constant 0 : i32
    return %arg0, %c0_i32, %c0_i32_0 : i32, i32, i32
  }
  func.func @transform_33(%arg0: i32) -> (i32, i32, i32) {
    %c0_i32 = arith.constant 0 : i32
    %c0_i32_0 = arith.constant 0 : i32
    %c0_i32_1 = arith.constant 0 : i32
    return %arg0, %c0_i32, %c0_i32_0 : i32, i32, i32
  }
  func.func @transform_34(%arg0: i32) -> (i32, i32, i32) {
    %c0_i32 = arith.constant 0 : i32
    %c0_i32_0 = arith.constant 0 : i32
    %c0_i32_1 = arith.constant 0 : i32
    return %arg0, %c0_i32, %c0_i32_0 : i32, i32, i32
  }
}

</mosaic_0001>

<llo_original>
// kernel: tpu_custom_call.1
$region0: #{tpu_custom_call.1}
  #allocation0 [shape = 'u32[]', space=smem, size = 0x4, offset = 0x4, fixed_abs, tag = 'smem constant byte address 0x4 - core index']
  #allocation1 [shape = 'u32[72,128]{1,0:T(1,128)}', space=vmem, size = 0x9000, scoped, tag = 'internal scratch']
  %s0 = inlined_call_operand.smem [shape: u32[35], index: -1, kind: input, shape index: {}]
  %s1 = sld [smem:[%s0]]
  %s2 = scalar_lea.smem %s0, 1
  %s3 = sld [smem:[%s2]]
  %s4 = scalar_lea.smem %s0, 2
  %s5 = sld [smem:[%s4]]
  %s6 = scalar_lea.smem %s0, 3
  %s7 = sld [smem:[%s6]]
  %s8 = scalar_lea.smem %s0, 4
  %s9 = sld [smem:[%s8]]
  %s10 = scalar_lea.smem %s0, 5
  %s11 = sld [smem:[%s10]]
  %s12 = scalar_lea.smem %s0, 6
  %s13 = sld [smem:[%s12]]
  %s14 = scalar_lea.smem %s0, 7
  %s15 = sld [smem:[%s14]]
  %s16 = scalar_lea.smem %s0, 8
  %s17 = sld [smem:[%s16]]
  %s18 = scalar_lea.smem %s0, 9
  %s19 = sld [smem:[%s18]]
  %s20 = scalar_lea.smem %s0, 10
  %s21 = sld [smem:[%s20]]
  %s22 = scalar_lea.smem %s0, 11
  %s23 = sld [smem:[%s22]]
  %s24 = scalar_lea.smem %s0, 12
  %s25 = sld [smem:[%s24]]
  %s26 = scalar_lea.smem %s0, 13
  %s27 = sld [smem:[%s26]]
  %s28 = scalar_lea.smem %s0, 14
  %s29 = sld [smem:[%s28]]
  %s30 = scalar_lea.smem %s0, 15
  %s31 = sld [smem:[%s30]]
  %s32 = scalar_lea.smem %s0, 16
  %s33 = sld [smem:[%s32]]
  %s34 = scalar_lea.smem %s0, 17
  %s35 = sld [smem:[%s34]]
  %s36 = scalar_lea.smem %s0, 18
  %s37 = sld [smem:[%s36]]
  %s38 = scalar_lea.smem %s0, 19
  %s39 = sld [smem:[%s38]]
  %s40 = scalar_lea.smem %s0, 20
  %s41 = sld [smem:[%s40]]
  %s42 = scalar_lea.smem %s0, 21
  %s43 = sld [smem:[%s42]]
  %s44 = scalar_lea.smem %s0, 22
  %s45 = sld [smem:[%s44]]
  %s46 = scalar_lea.smem %s0, 23
  %s47 = sld [smem:[%s46]]
  %s48 = scalar_lea.smem %s0, 24
  %s49 = sld [smem:[%s48]]
  %s50 = scalar_lea.smem %s0, 25
  %s51 = sld [smem:[%s50]]
  %s52 = scalar_lea.smem %s0, 26
  %s53 = sld [smem:[%s52]]
  %s54 = scalar_lea.smem %s0, 27
  %s55 = sld [smem:[%s54]]
  %s56 = scalar_lea.smem %s0, 28
  %s57 = sld [smem:[%s56]]
  %s58 = scalar_lea.smem %s0, 29
  %s59 = sld [smem:[%s58]]
  %s60 = scalar_lea.smem %s0, 30
  %s61 = sld [smem:[%s60]]
  %s62 = scalar_lea.smem %s0, 31
  %s63 = sld [smem:[%s62]]
  %s64 = scalar_lea.smem %s0, 32
  %s65 = sld [smem:[%s64]]
  %s66 = scalar_lea.smem %s0, 33
  %s67 = sld [smem:[%s66]]
  %s68 = scalar_lea.smem %s0, 34
  %s69 = sld [smem:[%s68]]
  %70 = xla_tuple %s67, %s69
  %s71 = sld [smem:[#allocation0]]
  $region173: #{tpu_custom_call.1} parent=0
    _
  %s73 = ssub.s32 1, %s71
  %s74 = scalar_select 0, %s73, %s71
  loop: start=0, step=1, limit=5
  $region2: #{tpu_custom_call.1} parent=0 // loop_pre_header
    _
  $region3: #{tpu_custom_call.1} parent=0 // loop_header
    %s76 = sphi 0, %s80
    %p77 = scmp.ge.s32.totalorder %s76, 5
    %s84 = sphi 0, %s84
    %s86 = sphi 0, %s84
    %s87 = sphi 0, %s86
    %s101 = sphi 0, %s87
    %s105 = sphi 0, %s105
    %s107 = sphi 0, %s105
    %s108 = sphi 0, %s107
    %s122 = sphi 0, %s108
    %s126 = sphi 0, %s126
    %s128 = sphi 0, %s126
    %s129 = sphi 0, %s128
    %s143 = sphi 0, %s129
    %s147 = sphi 0, %s147
    %s149 = sphi 0, %s147
    %s150 = sphi 0, %s149
    %s164 = sphi 0, %s150
    %s168 = sphi 0, %s168
    %s170 = sphi 0, %s168
    %s171 = sphi 0, %s170
    %s185 = sphi 0, %s171
    %s189 = sphi 0, %s189
    %s191 = sphi 0, %s189
    %s192 = sphi 0, %s191
    %s206 = sphi 0, %s192
    %s212 = sphi 0, %s214
    %s215 = sphi 0, %s212
    %s216 = sphi 0, %s215
    %s232 = sphi 0, %s216
    %s238 = sphi 0, %s240
    %s241 = sphi 0, %s238
    %s242 = sphi 0, %s241
    %s258 = sphi 0, %s242
    %s264 = sphi 0, %s266
    %s267 = sphi 0, %s264
    %s268 = sphi 0, %s267
    %s284 = sphi 0, %s268
    %s290 = sphi 0, %s292
    %s293 = sphi 0, %s290
    %s294 = sphi 0, %s293
    %s310 = sphi 0, %s294
    %s316 = sphi 0, %s318
    %s319 = sphi 0, %s316
    %s320 = sphi 0, %s319
    %s336 = sphi 0, %s320
    %s342 = sphi 0, %s344
    %s345 = sphi 0, %s342
    %s346 = sphi 0, %s345
    %s362 = sphi 0, %s346
    %s368 = sphi 0, %s370
    %s371 = sphi 0, %s368
    %s372 = sphi 0, %s371
    %s388 = sphi 0, %s372
    %s394 = sphi 0, %s396
    %s397 = sphi 0, %s394
    %s398 = sphi 0, %s397
    %s414 = sphi 0, %s398
    %s420 = sphi 0, %s422
    %s423 = sphi 0, %s420
    %s424 = sphi 0, %s423
    %s440 = sphi 0, %s424
    %s446 = sphi 0, %s448
    %s449 = sphi 0, %s446
    %s450 = sphi 0, %s449
    %s466 = sphi 0, %s450
    %s472 = sphi 0, %s474
    %s475 = sphi 0, %s472
    %s476 = sphi 0, %s475
    %s492 = sphi 0, %s476
    %s498 = sphi 0, %s500
    %s501 = sphi 0, %s498
    %s502 = sphi 0, %s501
    %s518 = sphi 0, %s502
    %s524 = sphi 0, %s526
    %s527 = sphi 0, %s524
    %s528 = sphi 0, %s527
    %s544 = sphi 0, %s528
    %s550 = sphi 0, %s552
    %s553 = sphi 0, %s550
    %s554 = sphi 0, %s553
    %s570 = sphi 0, %s554
    %s576 = sphi 0, %s578
    %s579 = sphi 0, %s576
    %s580 = sphi 0, %s579
    %s596 = sphi 0, %s580
    %s602 = sphi 0, %s604
    %s605 = sphi 0, %s602
    %s606 = sphi 0, %s605
    %s622 = sphi 0, %s606
    %s628 = sphi 0, %s630
    %s631 = sphi 0, %s628
    %s632 = sphi 0, %s631
    %s648 = sphi 0, %s632
    %s654 = sphi 0, %s656
    %s657 = sphi 0, %s654
    %s658 = sphi 0, %s657
    %s674 = sphi 0, %s658
    %s680 = sphi 0, %s682
    %s683 = sphi 0, %s680
    %s684 = sphi 0, %s683
    %s700 = sphi 0, %s684
    %s706 = sphi 0, %s708
    %s709 = sphi 0, %s706
    %s710 = sphi 0, %s709
    %s726 = sphi 0, %s710
    %s732 = sphi 0, %s734
    %s735 = sphi 0, %s732
    %s736 = sphi 0, %s735
    %s752 = sphi 0, %s736
    %s758 = sphi 0, %s760
    %s761 = sphi 0, %s758
    %s762 = sphi 0, %s761
    %s778 = sphi 0, %s762
    %s784 = sphi 0, %s786
    %s787 = sphi 0, %s784
    %s788 = sphi 0, %s787
    %s804 = sphi 0, %s788
    %s810 = sphi 0, %s812
    %s813 = sphi 0, %s810
    %s814 = sphi 0, %s813
    %s830 = sphi 0, %s814
    %s836 = sphi 0, %s838
    %s839 = sphi 0, %s836
    %s840 = sphi 0, %s839
    %s856 = sphi 0, %s840
    %s862 = sphi 0, %s864
    %s865 = sphi 0, %s862
    %s866 = sphi 0, %s865
    %s882 = sphi 0, %s866
    %s888 = sphi 0, %s890
    %s891 = sphi 0, %s888
    %s892 = sphi 0, %s891
    %s908 = sphi 0, %s892
    %s914 = sphi 0, %s916
    %s917 = sphi 0, %s914
    %s918 = sphi 0, %s917
    %s934 = sphi 0, %s918
    %s940 = sphi 0, %s942
    %s943 = sphi 0, %s940
    %s944 = sphi 0, %s943
    %s960 = sphi 0, %s944
  $region4: #{tpu_custom_call.1} parent=0 // loop_header_branch
    %79 = sbr.rel (%p77) target = $region8
  $region5: #{tpu_custom_call.1} parent=0 // loop_body
    %s81 = ssub.s32 %s76, 1
    %s82 = ssub.s32 %s76, 2
    %s83 = sadd.s32 %s76, 1
    %s85 = sadd.s32 %s84, 1
    %p88 = scmp.eq.s32.totalorder %s76, 2
    %p89 = scmp.ne.s32.totalorder %s84, %s86
    %p90 = scmp.eq.s32.totalorder %s76, 0
    %p91 = por %p89, %p90
    %p92 = scmp.ne.s32.totalorder %s84, %s86
    %p93 = scmp.eq.s32.totalorder %s81, 2
    %p94 = por %p92, %p93
    %p95 = scmp.ne.s32.totalorder %s86, %s87
    %p96 = scmp.eq.s32.totalorder %s81, 0
    %p97 = por %p95, %p96
    %p98 = scmp.ne.s32.totalorder %s86, %s87
    %p99 = scmp.eq.s32.totalorder %s82, 2
    %p100 = por %p98, %p99
    %p102 = scmp.ne.s32.totalorder %s87, %s101
    %p103 = scmp.eq.s32.totalorder %s82, 0
    %p104 = por %p102, %p103
    %s106 = sadd.s32 %s105, 1
    %p109 = scmp.eq.s32.totalorder %s76, 2
    %p110 = scmp.ne.s32.totalorder %s105, %s107
    %p111 = scmp.eq.s32.totalorder %s76, 0
    %p112 = por %p110, %p111
    %p113 = scmp.ne.s32.totalorder %s105, %s107
    %p114 = scmp.eq.s32.totalorder %s81, 2
    %p115 = por %p113, %p114
    %p116 = scmp.ne.s32.totalorder %s107, %s108
    %p117 = scmp.eq.s32.totalorder %s81, 0
    %p118 = por %p116, %p117
    %p119 = scmp.ne.s32.totalorder %s107, %s108
    %p120 = scmp.eq.s32.totalorder %s82, 2
    %p121 = por %p119, %p120
    %p123 = scmp.ne.s32.totalorder %s108, %s122
    %p124 = scmp.eq.s32.totalorder %s82, 0
    %p125 = por %p123, %p124
    %s127 = sadd.s32 %s126, 1
    %p130 = scmp.eq.s32.totalorder %s76, 2
    %p131 = scmp.ne.s32.totalorder %s126, %s128
    %p132 = scmp.eq.s32.totalorder %s76, 0
    %p133 = por %p131, %p132
    %p134 = scmp.ne.s32.totalorder %s126, %s128
    %p135 = scmp.eq.s32.totalorder %s81, 2
    %p136 = por %p134, %p135
    %p137 = scmp.ne.s32.totalorder %s128, %s129
    %p138 = scmp.eq.s32.totalorder %s81, 0
    %p139 = por %p137, %p138
    %p140 = scmp.ne.s32.totalorder %s128, %s129
    %p141 = scmp.eq.s32.totalorder %s82, 2
    %p142 = por %p140, %p141
    %p144 = scmp.ne.s32.totalorder %s129, %s143
    %p145 = scmp.eq.s32.totalorder %s82, 0
    %p146 = por %p144, %p145
    %s148 = sadd.s32 %s147, 1
    %p151 = scmp.eq.s32.totalorder %s76, 2
    %p152 = scmp.ne.s32.totalorder %s147, %s149
    %p153 = scmp.eq.s32.totalorder %s76, 0
    %p154 = por %p152, %p153
    %p155 = scmp.ne.s32.totalorder %s147, %s149
    %p156 = scmp.eq.s32.totalorder %s81, 2
    %p157 = por %p155, %p156
    %p158 = scmp.ne.s32.totalorder %s149, %s150
    %p159 = scmp.eq.s32.totalorder %s81, 0
    %p160 = por %p158, %p159
    %p161 = scmp.ne.s32.totalorder %s149, %s150
    %p162 = scmp.eq.s32.totalorder %s82, 2
    %p163 = por %p161, %p162
    %p165 = scmp.ne.s32.totalorder %s150, %s164
    %p166 = scmp.eq.s32.totalorder %s82, 0
    %p167 = por %p165, %p166
    %s169 = sadd.s32 %s168, 1
    %p172 = scmp.eq.s32.totalorder %s76, 2
    %p173 = scmp.ne.s32.totalorder %s168, %s170
    %p174 = scmp.eq.s32.totalorder %s76, 0
    %p175 = por %p173, %p174
    %p176 = scmp.ne.s32.totalorder %s168, %s170
    %p177 = scmp.eq.s32.totalorder %s81, 2
    %p178 = por %p176, %p177
    %p179 = scmp.ne.s32.totalorder %s170, %s171
    %p180 = scmp.eq.s32.totalorder %s81, 0
    %p181 = por %p179, %p180
    %p182 = scmp.ne.s32.totalorder %s170, %s171
    %p183 = scmp.eq.s32.totalorder %s82, 2
    %p184 = por %p182, %p183
    %p186 = scmp.ne.s32.totalorder %s171, %s185
    %p187 = scmp.eq.s32.totalorder %s82, 0
    %p188 = por %p186, %p187
    %s190 = sadd.s32 %s189, 1
    %p193 = scmp.eq.s32.totalorder %s76, 2
    %p194 = scmp.ne.s32.totalorder %s189, %s191
    %p195 = scmp.eq.s32.totalorder %s76, 0
    %p196 = por %p194, %p195
    %p197 = scmp.ne.s32.totalorder %s189, %s191
    %p198 = scmp.eq.s32.totalorder %s81, 2
    %p199 = por %p197, %p198
    %p200 = scmp.ne.s32.totalorder %s191, %s192
    %p201 = scmp.eq.s32.totalorder %s81, 0
    %p202 = por %p200, %p201
    %p203 = scmp.ne.s32.totalorder %s191, %s192
    %p204 = scmp.eq.s32.totalorder %s82, 2
    %p205 = por %p203, %p204
    %p207 = scmp.ne.s32.totalorder %s192, %s206
    %p208 = scmp.eq.s32.totalorder %s82, 0
    %p209 = por %p207, %p208
    %s210 = ssub.s32 %s76, %s83
    %p211 = scmp.eq.s32.totalorder %s210, 0
    %s213 = sadd.s32 %s212, 1
    %s214 = scalar_select %p211, %s212, %s213
    %p217 = pneg %p211
    %p218 = scmp.eq.s32.totalorder %s76, 2
    %p219 = por %p217, %p218
    %p220 = scmp.ne.s32.totalorder %s212, %s215
    %p221 = scmp.eq.s32.totalorder %s76, 0
    %p222 = por %p220, %p221
    %p223 = scmp.ne.s32.totalorder %s212, %s215
    %p224 = scmp.eq.s32.totalorder %s81, 2
    %p225 = por %p223, %p224
    %p226 = scmp.ne.s32.totalorder %s215, %s216
    %p227 = scmp.eq.s32.totalorder %s81, 0
    %p228 = por %p226, %p227
    %p229 = scmp.ne.s32.totalorder %s215, %s216
    %p230 = scmp.eq.s32.totalorder %s82, 2
    %p231 = por %p229, %p230
    %p233 = scmp.ne.s32.totalorder %s216, %s232
    %p234 = scmp.eq.s32.totalorder %s82, 0
    %p235 = por %p233, %p234
    %s236 = ssub.s32 %s76, %s83
    %p237 = scmp.eq.s32.totalorder %s236, 0
    %s239 = sadd.s32 %s238, 1
    %s240 = scalar_select %p237, %s238, %s239
    %p243 = pneg %p237
    %p244 = scmp.eq.s32.totalorder %s76, 2
    %p245 = por %p243, %p244
    %p246 = scmp.ne.s32.totalorder %s238, %s241
    %p247 = scmp.eq.s32.totalorder %s76, 0
    %p248 = por %p246, %p247
    %p249 = scmp.ne.s32.totalorder %s238, %s241
    %p250 = scmp.eq.s32.totalorder %s81, 2
    %p251 = por %p249, %p250
    %p252 = scmp.ne.s32.totalorder %s241, %s242
    %p253 = scmp.eq.s32.totalorder %s81, 0
    %p254 = por %p252, %p253
    %p255 = scmp.ne.s32.totalorder %s241, %s242
    %p256 = scmp.eq.s32.totalorder %s82, 2
    %p257 = por %p255, %p256
    %p259 = scmp.ne.s32.totalorder %s242, %s258
    %p260 = scmp.eq.s32.totalorder %s82, 0
    %p261 = por %p259, %p260
    %s262 = ssub.s32 %s76, %s83
    %p263 = scmp.eq.s32.totalorder %s262, 0
    %s265 = sadd.s32 %s264, 1
    %s266 = scalar_select %p263, %s264, %s265
    %p269 = pneg %p263
    %p270 = scmp.eq.s32.totalorder %s76, 2
    %p271 = por %p269, %p270
    %p272 = scmp.ne.s32.totalorder %s264, %s267
    %p273 = scmp.eq.s32.totalorder %s76, 0
    %p274 = por %p272, %p273
    %p275 = scmp.ne.s32.totalorder %s264, %s267
    %p276 = scmp.eq.s32.totalorder %s81, 2
    %p277 = por %p275, %p276
    %p278 = scmp.ne.s32.totalorder %s267, %s268
    %p279 = scmp.eq.s32.totalorder %s81, 0
    %p280 = por %p278, %p279
    %p281 = scmp.ne.s32.totalorder %s267, %s268
    %p282 = scmp.eq.s32.totalorder %s82, 2
    %p283 = por %p281, %p282
    %p285 = scmp.ne.s32.totalorder %s268, %s284
    %p286 = scmp.eq.s32.totalorder %s82, 0
    %p287 = por %p285, %p286
    %s288 = ssub.s32 %s76, %s83
    %p289 = scmp.eq.s32.totalorder %s288, 0
    %s291 = sadd.s32 %s290, 1
    %s292 = scalar_select %p289, %s290, %s291
    %p295 = pneg %p289
    %p296 = scmp.eq.s32.totalorder %s76, 2
    %p297 = por %p295, %p296
    %p298 = scmp.ne.s32.totalorder %s290, %s293
    %p299 = scmp.eq.s32.totalorder %s76, 0
    %p300 = por %p298, %p299
    %p301 = scmp.ne.s32.totalorder %s290, %s293
    %p302 = scmp.eq.s32.totalorder %s81, 2
    %p303 = por %p301, %p302
    %p304 = scmp.ne.s32.totalorder %s293, %s294
    %p305 = scmp.eq.s32.totalorder %s81, 0
    %p306 = por %p304, %p305
    %p307 = scmp.ne.s32.totalorder %s293, %s294
    %p308 = scmp.eq.s32.totalorder %s82, 2
    %p309 = por %p307, %p308
    %p311 = scmp.ne.s32.totalorder %s294, %s310
    %p312 = scmp.eq.s32.totalorder %s82, 0
    %p313 = por %p311, %p312
    %s314 = ssub.s32 %s76, %s83
    %p315 = scmp.eq.s32.totalorder %s314, 0
    %s317 = sadd.s32 %s316, 1
    %s318 = scalar_select %p315, %s316, %s317
    %p321 = pneg %p315
    %p322 = scmp.eq.s32.totalorder %s76, 2
    %p323 = por %p321, %p322
    %p324 = scmp.ne.s32.totalorder %s316, %s319
    %p325 = scmp.eq.s32.totalorder %s76, 0
    %p326 = por %p324, %p325
    %p327 = scmp.ne.s32.totalorder %s316, %s319
    %p328 = scmp.eq.s32.totalorder %s81, 2
    %p329 = por %p327, %p328
    %p330 = scmp.ne.s32.totalorder %s319, %s320
    %p331 = scmp.eq.s32.totalorder %s81, 0
    %p332 = por %p330, %p331
    %p333 = scmp.ne.s32.totalorder %s319, %s320
    %p334 = scmp.eq.s32.totalorder %s82, 2
    %p335 = por %p333, %p334
    %p337 = scmp.ne.s32.totalorder %s320, %s336
    %p338 = scmp.eq.s32.totalorder %s82, 0
    %p339 = por %p337, %p338
    %s340 = ssub.s32 %s76, %s83
    %p341 = scmp.eq.s32.totalorder %s340, 0
    %s343 = sadd.s32 %s342, 1
    %s344 = scalar_select %p341, %s342, %s343
    %p347 = pneg %p341
    %p348 = scmp.eq.s32.totalorder %s76, 2
    %p349 = por %p347, %p348
    %p350 = scmp.ne.s32.totalorder %s342, %s345
    %p351 = scmp.eq.s32.totalorder %s76, 0
    %p352 = por %p350, %p351
    %p353 = scmp.ne.s32.totalorder %s342, %s345
    %p354 = scmp.eq.s32.totalorder %s81, 2
    %p355 = por %p353, %p354
    %p356 = scmp.ne.s32.totalorder %s345, %s346
    %p357 = scmp.eq.s32.totalorder %s81, 0
    %p358 = por %p356, %p357
    %p359 = scmp.ne.s32.totalorder %s345, %s346
    %p360 = scmp.eq.s32.totalorder %s82, 2
    %p361 = por %p359, %p360
    %p363 = scmp.ne.s32.totalorder %s346, %s362
    %p364 = scmp.eq.s32.totalorder %s82, 0
    %p365 = por %p363, %p364
    %s366 = ssub.s32 %s76, %s83
    %p367 = scmp.eq.s32.totalorder %s366, 0
    %s369 = sadd.s32 %s368, 1
    %s370 = scalar_select %p367, %s368, %s369
    %p373 = pneg %p367
    %p374 = scmp.eq.s32.totalorder %s76, 2
    %p375 = por %p373, %p374
    %p376 = scmp.ne.s32.totalorder %s368, %s371
    %p377 = scmp.eq.s32.totalorder %s76, 0
    %p378 = por %p376, %p377
    %p379 = scmp.ne.s32.totalorder %s368, %s371
    %p380 = scmp.eq.s32.totalorder %s81, 2
    %p381 = por %p379, %p380
    %p382 = scmp.ne.s32.totalorder %s371, %s372
    %p383 = scmp.eq.s32.totalorder %s81, 0
    %p384 = por %p382, %p383
    %p385 = scmp.ne.s32.totalorder %s371, %s372
    %p386 = scmp.eq.s32.totalorder %s82, 2
    %p387 = por %p385, %p386
    %p389 = scmp.ne.s32.totalorder %s372, %s388
    %p390 = scmp.eq.s32.totalorder %s82, 0
    %p391 = por %p389, %p390
    %s392 = ssub.s32 %s76, %s83
    %p393 = scmp.eq.s32.totalorder %s392, 0
    %s395 = sadd.s32 %s394, 1
    %s396 = scalar_select %p393, %s394, %s395
    %p399 = pneg %p393
    %p400 = scmp.eq.s32.totalorder %s76, 2
    %p401 = por %p399, %p400
    %p402 = scmp.ne.s32.totalorder %s394, %s397
    %p403 = scmp.eq.s32.totalorder %s76, 0
    %p404 = por %p402, %p403
    %p405 = scmp.ne.s32.totalorder %s394, %s397
    %p406 = scmp.eq.s32.totalorder %s81, 2
    %p407 = por %p405, %p406
    %p408 = scmp.ne.s32.totalorder %s397, %s398
    %p409 = scmp.eq.s32.totalorder %s81, 0
    %p410 = por %p408, %p409
    %p411 = scmp.ne.s32.totalorder %s397, %s398
    %p412 = scmp.eq.s32.totalorder %s82, 2
    %p413 = por %p411, %p412
    %p415 = scmp.ne.s32.totalorder %s398, %s414
    %p416 = scmp.eq.s32.totalorder %s82, 0
    %p417 = por %p415, %p416
    %s418 = ssub.s32 %s76, %s83
    %p419 = scmp.eq.s32.totalorder %s418, 0
    %s421 = sadd.s32 %s420, 1
    %s422 = scalar_select %p419, %s420, %s421
    %p425 = pneg %p419
    %p426 = scmp.eq.s32.totalorder %s76, 2
    %p427 = por %p425, %p426
    %p428 = scmp.ne.s32.totalorder %s420, %s423
    %p429 = scmp.eq.s32.totalorder %s76, 0
    %p430 = por %p428, %p429
    %p431 = scmp.ne.s32.totalorder %s420, %s423
    %p432 = scmp.eq.s32.totalorder %s81, 2
    %p433 = por %p431, %p432
    %p434 = scmp.ne.s32.totalorder %s423, %s424
    %p435 = scmp.eq.s32.totalorder %s81, 0
    %p436 = por %p434, %p435
    %p437 = scmp.ne.s32.totalorder %s423, %s424
    %p438 = scmp.eq.s32.totalorder %s82, 2
    %p439 = por %p437, %p438
    %p441 = scmp.ne.s32.totalorder %s424, %s440
    %p442 = scmp.eq.s32.totalorder %s82, 0
    %p443 = por %p441, %p442
    %s444 = ssub.s32 %s76, %s83
    %p445 = scmp.eq.s32.totalorder %s444, 0
    %s447 = sadd.s32 %s446, 1
    %s448 = scalar_select %p445, %s446, %s447
    %p451 = pneg %p445
    %p452 = scmp.eq.s32.totalorder %s76, 2
    %p453 = por %p451, %p452
    %p454 = scmp.ne.s32.totalorder %s446, %s449
    %p455 = scmp.eq.s32.totalorder %s76, 0
    %p456 = por %p454, %p455
    %p457 = scmp.ne.s32.totalorder %s446, %s449
    %p458 = scmp.eq.s32.totalorder %s81, 2
    %p459 = por %p457, %p458
    %p460 = scmp.ne.s32.totalorder %s449, %s450
    %p461 = scmp.eq.s32.totalorder %s81, 0
    %p462 = por %p460, %p461
    %p463 = scmp.ne.s32.totalorder %s449, %s450
    %p464 = scmp.eq.s32.totalorder %s82, 2
    %p465 = por %p463, %p464
    %p467 = scmp.ne.s32.totalorder %s450, %s466
    %p468 = scmp.eq.s32.totalorder %s82, 0
    %p469 = por %p467, %p468
    %s470 = ssub.s32 %s76, %s83
    %p471 = scmp.eq.s32.totalorder %s470, 0
    %s473 = sadd.s32 %s472, 1
    %s474 = scalar_select %p471, %s472, %s473
    %p477 = pneg %p471
    %p478 = scmp.eq.s32.totalorder %s76, 2
    %p479 = por %p477, %p478
    %p480 = scmp.ne.s32.totalorder %s472, %s475
    %p481 = scmp.eq.s32.totalorder %s76, 0
    %p482 = por %p480, %p481
    %p483 = scmp.ne.s32.totalorder %s472, %s475
    %p484 = scmp.eq.s32.totalorder %s81, 2
    %p485 = por %p483, %p484
    %p486 = scmp.ne.s32.totalorder %s475, %s476
    %p487 = scmp.eq.s32.totalorder %s81, 0
    %p488 = por %p486, %p487
    %p489 = scmp.ne.s32.totalorder %s475, %s476
    %p490 = scmp.eq.s32.totalorder %s82, 2
    %p491 = por %p489, %p490
    %p493 = scmp.ne.s32.totalorder %s476, %s492
    %p494 = scmp.eq.s32.totalorder %s82, 0
    %p495 = por %p493, %p494
    %s496 = ssub.s32 %s76, %s83
    %p497 = scmp.eq.s32.totalorder %s496, 0
    %s499 = sadd.s32 %s498, 1
    %s500 = scalar_select %p497, %s498, %s499
    %p503 = pneg %p497
    %p504 = scmp.eq.s32.totalorder %s76, 2
    %p505 = por %p503, %p504
    %p506 = scmp.ne.s32.totalorder %s498, %s501
    %p507 = scmp.eq.s32.totalorder %s76, 0
    %p508 = por %p506, %p507
    %p509 = scmp.ne.s32.totalorder %s498, %s501
    %p510 = scmp.eq.s32.totalorder %s81, 2
    %p511 = por %p509, %p510
    %p512 = scmp.ne.s32.totalorder %s501, %s502
    %p513 = scmp.eq.s32.totalorder %s81, 0
    %p514 = por %p512, %p513
    %p515 = scmp.ne.s32.totalorder %s501, %s502
    %p516 = scmp.eq.s32.totalorder %s82, 2
    %p517 = por %p515, %p516
    %p519 = scmp.ne.s32.totalorder %s502, %s518
    %p520 = scmp.eq.s32.totalorder %s82, 0
    %p521 = por %p519, %p520
    %s522 = ssub.s32 %s76, %s83
    %p523 = scmp.eq.s32.totalorder %s522, 0
    %s525 = sadd.s32 %s524, 1
    %s526 = scalar_select %p523, %s524, %s525
    %p529 = pneg %p523
    %p530 = scmp.eq.s32.totalorder %s76, 2
    %p531 = por %p529, %p530
    %p532 = scmp.ne.s32.totalorder %s524, %s527
    %p533 = scmp.eq.s32.totalorder %s76, 0
    %p534 = por %p532, %p533
    %p535 = scmp.ne.s32.totalorder %s524, %s527
    %p536 = scmp.eq.s32.totalorder %s81, 2
    %p537 = por %p535, %p536
    %p538 = scmp.ne.s32.totalorder %s527, %s528
    %p539 = scmp.eq.s32.totalorder %s81, 0
    %p540 = por %p538, %p539
    %p541 = scmp.ne.s32.totalorder %s527, %s528
    %p542 = scmp.eq.s32.totalorder %s82, 2
    %p543 = por %p541, %p542
    %p545 = scmp.ne.s32.totalorder %s528, %s544
    %p546 = scmp.eq.s32.totalorder %s82, 0
    %p547 = por %p545, %p546
    %s548 = ssub.s32 %s76, %s83
    %p549 = scmp.eq.s32.totalorder %s548, 0
    %s551 = sadd.s32 %s550, 1
    %s552 = scalar_select %p549, %s550, %s551
    %p555 = pneg %p549
    %p556 = scmp.eq.s32.totalorder %s76, 2
    %p557 = por %p555, %p556
    %p558 = scmp.ne.s32.totalorder %s550, %s553
    %p559 = scmp.eq.s32.totalorder %s76, 0
    %p560 = por %p558, %p559
    %p561 = scmp.ne.s32.totalorder %s550, %s553
    %p562 = scmp.eq.s32.totalorder %s81, 2
    %p563 = por %p561, %p562
    %p564 = scmp.ne.s32.totalorder %s553, %s554
    %p565 = scmp.eq.s32.totalorder %s81, 0
    %p566 = por %p564, %p565
    %p567 = scmp.ne.s32.totalorder %s553, %s554
    %p568 = scmp.eq.s32.totalorder %s82, 2
    %p569 = por %p567, %p568
    %p571 = scmp.ne.s32.totalorder %s554, %s570
    %p572 = scmp.eq.s32.totalorder %s82, 0
    %p573 = por %p571, %p572
    %s574 = ssub.s32 %s76, %s83
    %p575 = scmp.eq.s32.totalorder %s574, 0
    %s577 = sadd.s32 %s576, 1
    %s578 = scalar_select %p575, %s576, %s577
    %p581 = pneg %p575
    %p582 = scmp.eq.s32.totalorder %s76, 2
    %p583 = por %p581, %p582
    %p584 = scmp.ne.s32.totalorder %s576, %s579
    %p585 = scmp.eq.s32.totalorder %s76, 0
    %p586 = por %p584, %p585
    %p587 = scmp.ne.s32.totalorder %s576, %s579
    %p588 = scmp.eq.s32.totalorder %s81, 2
    %p589 = por %p587, %p588
    %p590 = scmp.ne.s32.totalorder %s579, %s580
    %p591 = scmp.eq.s32.totalorder %s81, 0
    %p592 = por %p590, %p591
    %p593 = scmp.ne.s32.totalorder %s579, %s580
    %p594 = scmp.eq.s32.totalorder %s82, 2
    %p595 = por %p593, %p594
    %p597 = scmp.ne.s32.totalorder %s580, %s596
    %p598 = scmp.eq.s32.totalorder %s82, 0
    %p599 = por %p597, %p598
    %s600 = ssub.s32 %s76, %s83
    %p601 = scmp.eq.s32.totalorder %s600, 0
    %s603 = sadd.s32 %s602, 1
    %s604 = scalar_select %p601, %s602, %s603
    %p607 = pneg %p601
    %p608 = scmp.eq.s32.totalorder %s76, 2
    %p609 = por %p607, %p608
    %p610 = scmp.ne.s32.totalorder %s602, %s605
    %p611 = scmp.eq.s32.totalorder %s76, 0
    %p612 = por %p610, %p611
    %p613 = scmp.ne.s32.totalorder %s602, %s605
    %p614 = scmp.eq.s32.totalorder %s81, 2
    %p615 = por %p613, %p614
    %p616 = scmp.ne.s32.totalorder %s605, %s606
    %p617 = scmp.eq.s32.totalorder %s81, 0
    %p618 = por %p616, %p617
    %p619 = scmp.ne.s32.totalorder %s605, %s606
    %p620 = scmp.eq.s32.totalorder %s82, 2
    %p621 = por %p619, %p620
    %p623 = scmp.ne.s32.totalorder %s606, %s622
    %p624 = scmp.eq.s32.totalorder %s82, 0
    %p625 = por %p623, %p624
    %s626 = ssub.s32 %s76, %s83
    %p627 = scmp.eq.s32.totalorder %s626, 0
    %s629 = sadd.s32 %s628, 1
    %s630 = scalar_select %p627, %s628, %s629
    %p633 = pneg %p627
    %p634 = scmp.eq.s32.totalorder %s76, 2
    %p635 = por %p633, %p634
    %p636 = scmp.ne.s32.totalorder %s628, %s631
    %p637 = scmp.eq.s32.totalorder %s76, 0
    %p638 = por %p636, %p637
    %p639 = scmp.ne.s32.totalorder %s628, %s631
    %p640 = scmp.eq.s32.totalorder %s81, 2
    %p641 = por %p639, %p640
    %p642 = scmp.ne.s32.totalorder %s631, %s632
    %p643 = scmp.eq.s32.totalorder %s81, 0
    %p644 = por %p642, %p643
    %p645 = scmp.ne.s32.totalorder %s631, %s632
    %p646 = scmp.eq.s32.totalorder %s82, 2
    %p647 = por %p645, %p646
    %p649 = scmp.ne.s32.totalorder %s632, %s648
    %p650 = scmp.eq.s32.totalorder %s82, 0
    %p651 = por %p649, %p650
    %s652 = ssub.s32 %s76, %s83
    %p653 = scmp.eq.s32.totalorder %s652, 0
    %s655 = sadd.s32 %s654, 1
    %s656 = scalar_select %p653, %s654, %s655
    %p659 = pneg %p653
    %p660 = scmp.eq.s32.totalorder %s76, 2
    %p661 = por %p659, %p660
    %p662 = scmp.ne.s32.totalorder %s654, %s657
    %p663 = scmp.eq.s32.totalorder %s76, 0
    %p664 = por %p662, %p663
    %p665 = scmp.ne.s32.totalorder %s654, %s657
    %p666 = scmp.eq.s32.totalorder %s81, 2
    %p667 = por %p665, %p666
    %p668 = scmp.ne.s32.totalorder %s657, %s658
    %p669 = scmp.eq.s32.totalorder %s81, 0
    %p670 = por %p668, %p669
    %p671 = scmp.ne.s32.totalorder %s657, %s658
    %p672 = scmp.eq.s32.totalorder %s82, 2
    %p673 = por %p671, %p672
    %p675 = scmp.ne.s32.totalorder %s658, %s674
    %p676 = scmp.eq.s32.totalorder %s82, 0
    %p677 = por %p675, %p676
    %s678 = ssub.s32 %s76, %s83
    %p679 = scmp.eq.s32.totalorder %s678, 0
    %s681 = sadd.s32 %s680, 1
    %s682 = scalar_select %p679, %s680, %s681
    %p685 = pneg %p679
    %p686 = scmp.eq.s32.totalorder %s76, 2
    %p687 = por %p685, %p686
    %p688 = scmp.ne.s32.totalorder %s680, %s683
    %p689 = scmp.eq.s32.totalorder %s76, 0
    %p690 = por %p688, %p689
    %p691 = scmp.ne.s32.totalorder %s680, %s683
    %p692 = scmp.eq.s32.totalorder %s81, 2
    %p693 = por %p691, %p692
    %p694 = scmp.ne.s32.totalorder %s683, %s684
    %p695 = scmp.eq.s32.totalorder %s81, 0
    %p696 = por %p694, %p695
    %p697 = scmp.ne.s32.totalorder %s683, %s684
    %p698 = scmp.eq.s32.totalorder %s82, 2
    %p699 = por %p697, %p698
    %p701 = scmp.ne.s32.totalorder %s684, %s700
    %p702 = scmp.eq.s32.totalorder %s82, 0
    %p703 = por %p701, %p702
    %s704 = ssub.s32 %s76, %s83
    %p705 = scmp.eq.s32.totalorder %s704, 0
    %s707 = sadd.s32 %s706, 1
    %s708 = scalar_select %p705, %s706, %s707
    %p711 = pneg %p705
    %p712 = scmp.eq.s32.totalorder %s76, 2
    %p713 = por %p711, %p712
    %p714 = scmp.ne.s32.totalorder %s706, %s709
    %p715 = scmp.eq.s32.totalorder %s76, 0
    %p716 = por %p714, %p715
    %p717 = scmp.ne.s32.totalorder %s706, %s709
    %p718 = scmp.eq.s32.totalorder %s81, 2
    %p719 = por %p717, %p718
    %p720 = scmp.ne.s32.totalorder %s709, %s710
    %p721 = scmp.eq.s32.totalorder %s81, 0
    %p722 = por %p720, %p721
    %p723 = scmp.ne.s32.totalorder %s709, %s710
    %p724 = scmp.eq.s32.totalorder %s82, 2
    %p725 = por %p723, %p724
    %p727 = scmp.ne.s32.totalorder %s710, %s726
    %p728 = scmp.eq.s32.totalorder %s82, 0
    %p729 = por %p727, %p728
    %s730 = ssub.s32 %s76, %s83
    %p731 = scmp.eq.s32.totalorder %s730, 0
    %s733 = sadd.s32 %s732, 1
    %s734 = scalar_select %p731, %s732, %s733
    %p737 = pneg %p731
    %p738 = scmp.eq.s32.totalorder %s76, 2
    %p739 = por %p737, %p738
    %p740 = scmp.ne.s32.totalorder %s732, %s735
    %p741 = scmp.eq.s32.totalorder %s76, 0
    %p742 = por %p740, %p741
    %p743 = scmp.ne.s32.totalorder %s732, %s735
    %p744 = scmp.eq.s32.totalorder %s81, 2
    %p745 = por %p743, %p744
    %p746 = scmp.ne.s32.totalorder %s735, %s736
    %p747 = scmp.eq.s32.totalorder %s81, 0
    %p748 = por %p746, %p747
    %p749 = scmp.ne.s32.totalorder %s735, %s736
    %p750 = scmp.eq.s32.totalorder %s82, 2
    %p751 = por %p749, %p750
    %p753 = scmp.ne.s32.totalorder %s736, %s752
    %p754 = scmp.eq.s32.totalorder %s82, 0
    %p755 = por %p753, %p754
    %s756 = ssub.s32 %s76, %s83
    %p757 = scmp.eq.s32.totalorder %s756, 0
    %s759 = sadd.s32 %s758, 1
    %s760 = scalar_select %p757, %s758, %s759
    %p763 = pneg %p757
    %p764 = scmp.eq.s32.totalorder %s76, 2
    %p765 = por %p763, %p764
    %p766 = scmp.ne.s32.totalorder %s758, %s761
    %p767 = scmp.eq.s32.totalorder %s76, 0
    %p768 = por %p766, %p767
    %p769 = scmp.ne.s32.totalorder %s758, %s761
    %p770 = scmp.eq.s32.totalorder %s81, 2
    %p771 = por %p769, %p770
    %p772 = scmp.ne.s32.totalorder %s761, %s762
    %p773 = scmp.eq.s32.totalorder %s81, 0
    %p774 = por %p772, %p773
    %p775 = scmp.ne.s32.totalorder %s761, %s762
    %p776 = scmp.eq.s32.totalorder %s82, 2
    %p777 = por %p775, %p776
    %p779 = scmp.ne.s32.totalorder %s762, %s778
    %p780 = scmp.eq.s32.totalorder %s82, 0
    %p781 = por %p779, %p780
    %s782 = ssub.s32 %s76, %s83
    %p783 = scmp.eq.s32.totalorder %s782, 0
    %s785 = sadd.s32 %s784, 1
    %s786 = scalar_select %p783, %s784, %s785
    %p789 = pneg %p783
    %p790 = scmp.eq.s32.totalorder %s76, 2
    %p791 = por %p789, %p790
    %p792 = scmp.ne.s32.totalorder %s784, %s787
    %p793 = scmp.eq.s32.totalorder %s76, 0
    %p794 = por %p792, %p793
    %p795 = scmp.ne.s32.totalorder %s784, %s787
    %p796 = scmp.eq.s32.totalorder %s81, 2
    %p797 = por %p795, %p796
    %p798 = scmp.ne.s32.totalorder %s787, %s788
    %p799 = scmp.eq.s32.totalorder %s81, 0
    %p800 = por %p798, %p799
    %p801 = scmp.ne.s32.totalorder %s787, %s788
    %p802 = scmp.eq.s32.totalorder %s82, 2
    %p803 = por %p801, %p802
    %p805 = scmp.ne.s32.totalorder %s788, %s804
    %p806 = scmp.eq.s32.totalorder %s82, 0
    %p807 = por %p805, %p806
    %s808 = ssub.s32 %s76, %s83
    %p809 = scmp.eq.s32.totalorder %s808, 0
    %s811 = sadd.s32 %s810, 1
    %s812 = scalar_select %p809, %s810, %s811
    %p815 = pneg %p809
    %p816 = scmp.eq.s32.totalorder %s76, 2
    %p817 = por %p815, %p816
    %p818 = scmp.ne.s32.totalorder %s810, %s813
    %p819 = scmp.eq.s32.totalorder %s76, 0
    %p820 = por %p818, %p819
    %p821 = scmp.ne.s32.totalorder %s810, %s813
    %p822 = scmp.eq.s32.totalorder %s81, 2
    %p823 = por %p821, %p822
    %p824 = scmp.ne.s32.totalorder %s813, %s814
    %p825 = scmp.eq.s32.totalorder %s81, 0
    %p826 = por %p824, %p825
    %p827 = scmp.ne.s32.totalorder %s813, %s814
    %p828 = scmp.eq.s32.totalorder %s82, 2
    %p829 = por %p827, %p828
    %p831 = scmp.ne.s32.totalorder %s814, %s830
    %p832 = scmp.eq.s32.totalorder %s82, 0
    %p833 = por %p831, %p832
    %s834 = ssub.s32 %s76, %s83
    %p835 = scmp.eq.s32.totalorder %s834, 0
    %s837 = sadd.s32 %s836, 1
    %s838 = scalar_select %p835, %s836, %s837
    %p841 = pneg %p835
    %p842 = scmp.eq.s32.totalorder %s76, 2
    %p843 = por %p841, %p842
    %p844 = scmp.ne.s32.totalorder %s836, %s839
    %p845 = scmp.eq.s32.totalorder %s76, 0
    %p846 = por %p844, %p845
    %p847 = scmp.ne.s32.totalorder %s836, %s839
    %p848 = scmp.eq.s32.totalorder %s81, 2
    %p849 = por %p847, %p848
    %p850 = scmp.ne.s32.totalorder %s839, %s840
    %p851 = scmp.eq.s32.totalorder %s81, 0
    %p852 = por %p850, %p851
    %p853 = scmp.ne.s32.totalorder %s839, %s840
    %p854 = scmp.eq.s32.totalorder %s82, 2
    %p855 = por %p853, %p854
    %p857 = scmp.ne.s32.totalorder %s840, %s856
    %p858 = scmp.eq.s32.totalorder %s82, 0
    %p859 = por %p857, %p858
    %s860 = ssub.s32 %s76, %s83
    %p861 = scmp.eq.s32.totalorder %s860, 0
    %s863 = sadd.s32 %s862, 1
    %s864 = scalar_select %p861, %s862, %s863
    %p867 = pneg %p861
    %p868 = scmp.eq.s32.totalorder %s76, 2
    %p869 = por %p867, %p868
    %p870 = scmp.ne.s32.totalorder %s862, %s865
    %p871 = scmp.eq.s32.totalorder %s76, 0
    %p872 = por %p870, %p871
    %p873 = scmp.ne.s32.totalorder %s862, %s865
    %p874 = scmp.eq.s32.totalorder %s81, 2
    %p875 = por %p873, %p874
    %p876 = scmp.ne.s32.totalorder %s865, %s866
    %p877 = scmp.eq.s32.totalorder %s81, 0
    %p878 = por %p876, %p877
    %p879 = scmp.ne.s32.totalorder %s865, %s866
    %p880 = scmp.eq.s32.totalorder %s82, 2
    %p881 = por %p879, %p880
    %p883 = scmp.ne.s32.totalorder %s866, %s882
    %p884 = scmp.eq.s32.totalorder %s82, 0
    %p885 = por %p883, %p884
    %s886 = ssub.s32 %s76, %s83
    %p887 = scmp.eq.s32.totalorder %s886, 0
    %s889 = sadd.s32 %s888, 1
    %s890 = scalar_select %p887, %s888, %s889
    %p893 = pneg %p887
    %p894 = scmp.eq.s32.totalorder %s76, 2
    %p895 = por %p893, %p894
    %p896 = scmp.ne.s32.totalorder %s888, %s891
    %p897 = scmp.eq.s32.totalorder %s76, 0
    %p898 = por %p896, %p897
    %p899 = scmp.ne.s32.totalorder %s888, %s891
    %p900 = scmp.eq.s32.totalorder %s81, 2
    %p901 = por %p899, %p900
    %p902 = scmp.ne.s32.totalorder %s891, %s892
    %p903 = scmp.eq.s32.totalorder %s81, 0
    %p904 = por %p902, %p903
    %p905 = scmp.ne.s32.totalorder %s891, %s892
    %p906 = scmp.eq.s32.totalorder %s82, 2
    %p907 = por %p905, %p906
    %p909 = scmp.ne.s32.totalorder %s892, %s908
    %p910 = scmp.eq.s32.totalorder %s82, 0
    %p911 = por %p909, %p910
    %s912 = ssub.s32 %s76, %s83
    %p913 = scmp.eq.s32.totalorder %s912, 0
    %s915 = sadd.s32 %s914, 1
    %s916 = scalar_select %p913, %s914, %s915
    %p919 = pneg %p913
    %p920 = scmp.eq.s32.totalorder %s76, 2
    %p921 = por %p919, %p920
    %p922 = scmp.ne.s32.totalorder %s914, %s917
    %p923 = scmp.eq.s32.totalorder %s76, 0
    %p924 = por %p922, %p923
    %p925 = scmp.ne.s32.totalorder %s914, %s917
    %p926 = scmp.eq.s32.totalorder %s81, 2
    %p927 = por %p925, %p926
    %p928 = scmp.ne.s32.totalorder %s917, %s918
    %p929 = scmp.eq.s32.totalorder %s81, 0
    %p930 = por %p928, %p929
    %p931 = scmp.ne.s32.totalorder %s917, %s918
    %p932 = scmp.eq.s32.totalorder %s82, 2
    %p933 = por %p931, %p932
    %p935 = scmp.ne.s32.totalorder %s918, %s934
    %p936 = scmp.eq.s32.totalorder %s82, 0
    %p937 = por %p935, %p936
    %s938 = ssub.s32 %s76, %s83
    %p939 = scmp.eq.s32.totalorder %s938, 0
    %s941 = sadd.s32 %s940, 1
    %s942 = scalar_select %p939, %s940, %s941
    %p945 = pneg %p939
    %p946 = scmp.eq.s32.totalorder %s76, 2
    %p947 = por %p945, %p946
    %p948 = scmp.ne.s32.totalorder %s940, %s943
    %p949 = scmp.eq.s32.totalorder %s76, 0
    %p950 = por %p948, %p949
    %p951 = scmp.ne.s32.totalorder %s940, %s943
    %p952 = scmp.eq.s32.totalorder %s81, 2
    %p953 = por %p951, %p952
    %p954 = scmp.ne.s32.totalorder %s943, %s944
    %p955 = scmp.eq.s32.totalorder %s81, 0
    %p956 = por %p954, %p955
    %p957 = scmp.ne.s32.totalorder %s943, %s944
    %p958 = scmp.eq.s32.totalorder %s82, 2
    %p959 = por %p957, %p958
    %p961 = scmp.ne.s32.totalorder %s944, %s960
    %p962 = scmp.eq.s32.totalorder %s82, 0
    %p963 = por %p961, %p962
    %p964 = scmp.le.s32.totalorder 1, %s76
    %p965 = scmp.lt.s32.totalorder %s76, 4
    %p966 = pnand %p964, %p965
    %p967 = pneg %p966
    // Predicated region
    $region9: #{tpu_custom_call.1} parent=5 // pred_check
      _
    $region10: #{tpu_custom_call.1} parent=5 // pred_check_branch
      %969 = sbr.rel (%p966) target = $region12
    $region11: #{tpu_custom_call.1} parent=5 // pred_region
      %s970 = ssub.s32 %s76, 1
      // Predicated region
      $region13: #{tpu_custom_call.1} parent=11 // pred_check
        %p971 = pneg %p97
      $region14: #{tpu_custom_call.1} parent=11 // pred_check_branch
        %973 = sbr.rel (%p971) target = $region16
      $region15: #{tpu_custom_call.1} parent=11 // pred_region
        _
      $region16: #{tpu_custom_call.1} parent=11 // pred_fallthru
        _
      // Predicated region
      $region17: #{tpu_custom_call.1} parent=11 // pred_check
        %p974 = pneg %p118
      $region18: #{tpu_custom_call.1} parent=11 // pred_check_branch
        %976 = sbr.rel (%p974) target = $region20
      $region19: #{tpu_custom_call.1} parent=11 // pred_region
        _
      $region20: #{tpu_custom_call.1} parent=11 // pred_fallthru
        _
      // Predicated region
      $region21: #{tpu_custom_call.1} parent=11 // pred_check
        %p977 = pneg %p139
      $region22: #{tpu_custom_call.1} parent=11 // pred_check_branch
        %979 = sbr.rel (%p977) target = $region24
      $region23: #{tpu_custom_call.1} parent=11 // pred_region
        _
      $region24: #{tpu_custom_call.1} parent=11 // pred_fallthru
        _
      // Predicated region
      $region25: #{tpu_custom_call.1} parent=11 // pred_check
        %p980 = pneg %p160
      $region26: #{tpu_custom_call.1} parent=11 // pred_check_branch
        %982 = sbr.rel (%p980) target = $region28
      $region27: #{tpu_custom_call.1} parent=11 // pred_region
        _
      $region28: #{tpu_custom_call.1} parent=11 // pred_fallthru
        _
      // Predicated region
      $region29: #{tpu_custom_call.1} parent=11 // pred_check
        %p983 = pneg %p181
      $region30: #{tpu_custom_call.1} parent=11 // pred_check_branch
        %985 = sbr.rel (%p983) target = $region32
      $region31: #{tpu_custom_call.1} parent=11 // pred_region
        _
      $region32: #{tpu_custom_call.1} parent=11 // pred_fallthru
        _
      // Predicated region
      $region33: #{tpu_custom_call.1} parent=11 // pred_check
        %p986 = pneg %p202
      $region34: #{tpu_custom_call.1} parent=11 // pred_check_branch
        %988 = sbr.rel (%p986) target = $region36
      $region35: #{tpu_custom_call.1} parent=11 // pred_region
        _
      $region36: #{tpu_custom_call.1} parent=11 // pred_fallthru
        _
    $region12: #{tpu_custom_call.1} parent=5 // pred_fallthru
      _
    %p989 = scmp.lt.s32.totalorder %s76, 3
    // Predicated region
    $region37: #{tpu_custom_call.1} parent=5 // pred_check
      %p990 = pneg %p989
    $region38: #{tpu_custom_call.1} parent=5 // pred_check_branch
      %992 = sbr.rel (%p990) target = $region40
    $region39: #{tpu_custom_call.1} parent=5 // pred_region
      // Predicated region
      $region41: #{tpu_custom_call.1} parent=39 // pred_check
        %p993 = pneg %p222
      $region42: #{tpu_custom_call.1} parent=39 // pred_check_branch
        %995 = sbr.rel (%p993) target = $region44
      $region43: #{tpu_custom_call.1} parent=39 // pred_region
        %p996 = scmp.lt.s32.totalorder %s76, 2
        %s997 = scalar_select %p996, %s76, 2
        %s998 = smul.addr %s997, 2
        %s999 = scalar_lea.vmem %s13, %s998
      $region44: #{tpu_custom_call.1} parent=39 // pred_fallthru
        _
      // Predicated region
      $region45: #{tpu_custom_call.1} parent=39 // pred_check
        %p1000 = pneg %p248
      $region46: #{tpu_custom_call.1} parent=39 // pred_check_branch
        %1002 = sbr.rel (%p1000) target = $region48
      $region47: #{tpu_custom_call.1} parent=39 // pred_region
        %p1003 = scmp.lt.s32.totalorder %s76, 2
        %s1004 = scalar_select %p1003, %s76, 2
        %s1005 = scalar_lea.vmem %s15, %s1004
      $region48: #{tpu_custom_call.1} parent=39 // pred_fallthru
        _
      // Predicated region
      $region49: #{tpu_custom_call.1} parent=39 // pred_check
        %p1006 = pneg %p274
      $region50: #{tpu_custom_call.1} parent=39 // pred_check_branch
        %1008 = sbr.rel (%p1006) target = $region52
      $region51: #{tpu_custom_call.1} parent=39 // pred_region
        %p1009 = scmp.lt.s32.totalorder %s76, 2
        %s1010 = scalar_select %p1009, %s76, 2
        %s1011 = smul.addr %s1010, 4
        %s1012 = smul.addr %s1011, 4
        %s1013 = scalar_lea.vmem %s17, %s1012
      $region52: #{tpu_custom_call.1} parent=39 // pred_fallthru
        _
      // Predicated region
      $region53: #{tpu_custom_call.1} parent=39 // pred_check
        %p1014 = pneg %p300
      $region54: #{tpu_custom_call.1} parent=39 // pred_check_branch
        %1016 = sbr.rel (%p1014) target = $region56
      $region55: #{tpu_custom_call.1} parent=39 // pred_region
        %p1017 = scmp.lt.s32.totalorder %s76, 2
        %s1018 = scalar_select %p1017, %s76, 2
        %s1019 = scalar_lea.vmem %s19, %s1018
      $region56: #{tpu_custom_call.1} parent=39 // pred_fallthru
        _
      // Predicated region
      $region57: #{tpu_custom_call.1} parent=39 // pred_check
        %p1020 = pneg %p326
      $region58: #{tpu_custom_call.1} parent=39 // pred_check_branch
        %1022 = sbr.rel (%p1020) target = $region60
      $region59: #{tpu_custom_call.1} parent=39 // pred_region
        %p1023 = scmp.lt.s32.totalorder %s76, 2
        %s1024 = scalar_select %p1023, %s76, 2
        %s1025 = smul.addr %s1024, 2
        %s1026 = scalar_lea.vmem %s21, %s1025
      $region60: #{tpu_custom_call.1} parent=39 // pred_fallthru
        _
      // Predicated region
      $region61: #{tpu_custom_call.1} parent=39 // pred_check
        %p1027 = pneg %p352
      $region62: #{tpu_custom_call.1} parent=39 // pred_check_branch
        %1029 = sbr.rel (%p1027) target = $region64
      $region63: #{tpu_custom_call.1} parent=39 // pred_region
        %p1030 = scmp.lt.s32.totalorder %s76, 2
        %s1031 = scalar_select %p1030, %s76, 2
        %s1032 = scalar_lea.vmem %s23, %s1031
      $region64: #{tpu_custom_call.1} parent=39 // pred_fallthru
        _
      // Predicated region
      $region65: #{tpu_custom_call.1} parent=39 // pred_check
        %p1033 = pneg %p378
      $region66: #{tpu_custom_call.1} parent=39 // pred_check_branch
        %1035 = sbr.rel (%p1033) target = $region68
      $region67: #{tpu_custom_call.1} parent=39 // pred_region
        %p1036 = scmp.lt.s32.totalorder %s76, 2
        %s1037 = scalar_select %p1036, %s76, 2
        %s1038 = smul.addr %s1037, 4
        %s1039 = smul.addr %s1038, 4
        %s1040 = scalar_lea.vmem %s25, %s1039
      $region68: #{tpu_custom_call.1} parent=39 // pred_fallthru
        _
      // Predicated region
      $region69: #{tpu_custom_call.1} parent=39 // pred_check
        %p1041 = pneg %p404
      $region70: #{tpu_custom_call.1} parent=39 // pred_check_branch
        %1043 = sbr.rel (%p1041) target = $region72
      $region71: #{tpu_custom_call.1} parent=39 // pred_region
        %p1044 = scmp.lt.s32.totalorder %s76, 2
        %s1045 = scalar_select %p1044, %s76, 2
        %s1046 = scalar_lea.vmem %s27, %s1045
      $region72: #{tpu_custom_call.1} parent=39 // pred_fallthru
        _
      // Predicated region
      $region73: #{tpu_custom_call.1} parent=39 // pred_check
        %p1047 = pneg %p430
      $region74: #{tpu_custom_call.1} parent=39 // pred_check_branch
        %1049 = sbr.rel (%p1047) target = $region76
      $region75: #{tpu_custom_call.1} parent=39 // pred_region
        %p1050 = scmp.lt.s32.totalorder %s76, 2
        %s1051 = scalar_select %p1050, %s76, 2
        %s1052 = smul.addr %s1051, 24
        %s1053 = smul.addr %s1052, 4
        %s1054 = scalar_lea.vmem %s29, %s1053
      $region76: #{tpu_custom_call.1} parent=39 // pred_fallthru
        _
      // Predicated region
      $region77: #{tpu_custom_call.1} parent=39 // pred_check
        %p1055 = pneg %p456
      $region78: #{tpu_custom_call.1} parent=39 // pred_check_branch
        %1057 = sbr.rel (%p1055) target = $region80
      $region79: #{tpu_custom_call.1} parent=39 // pred_region
        %p1058 = scmp.lt.s32.totalorder %s76, 2
        %s1059 = scalar_select %p1058, %s76, 2
        %s1060 = smul.addr %s1059, 2
        %s1061 = scalar_lea.vmem %s31, %s1060
      $region80: #{tpu_custom_call.1} parent=39 // pred_fallthru
        _
      // Predicated region
      $region81: #{tpu_custom_call.1} parent=39 // pred_check
        %p1062 = pneg %p482
      $region82: #{tpu_custom_call.1} parent=39 // pred_check_branch
        %1064 = sbr.rel (%p1062) target = $region84
      $region83: #{tpu_custom_call.1} parent=39 // pred_region
        %p1065 = scmp.lt.s32.totalorder %s76, 2
        %s1066 = scalar_select %p1065, %s76, 2
        %s1067 = smul.addr %s1066, 8
        %s1068 = smul.addr %s1067, 4
        %s1069 = scalar_lea.vmem %s33, %s1068
      $region84: #{tpu_custom_call.1} parent=39 // pred_fallthru
        _
      // Predicated region
      $region85: #{tpu_custom_call.1} parent=39 // pred_check
        %p1070 = pneg %p508
      $region86: #{tpu_custom_call.1} parent=39 // pred_check_branch
        %1072 = sbr.rel (%p1070) target = $region88
      $region87: #{tpu_custom_call.1} parent=39 // pred_region
        %p1073 = scmp.lt.s32.totalorder %s76, 2
        %s1074 = scalar_select %p1073, %s76, 2
        %s1075 = smul.addr %s1074, 2
        %s1076 = scalar_lea.vmem %s35, %s1075
      $region88: #{tpu_custom_call.1} parent=39 // pred_fallthru
        _
      // Predicated region
      $region89: #{tpu_custom_call.1} parent=39 // pred_check
        %p1077 = pneg %p534
      $region90: #{tpu_custom_call.1} parent=39 // pred_check_branch
        %1079 = sbr.rel (%p1077) target = $region92
      $region91: #{tpu_custom_call.1} parent=39 // pred_region
        %p1080 = scmp.lt.s32.totalorder %s76, 2
        %s1081 = scalar_select %p1080, %s76, 2
        %s1082 = smul.addr %s1081, 16
        %s1083 = smul.addr %s1082, 4
        %s1084 = scalar_lea.vmem %s37, %s1083
      $region92: #{tpu_custom_call.1} parent=39 // pred_fallthru
        _
      // Predicated region
      $region93: #{tpu_custom_call.1} parent=39 // pred_check
        %p1085 = pneg %p560
      $region94: #{tpu_custom_call.1} parent=39 // pred_check_branch
        %1087 = sbr.rel (%p1085) target = $region96
      $region95: #{tpu_custom_call.1} parent=39 // pred_region
        %p1088 = scmp.lt.s32.totalorder %s76, 2
        %s1089 = scalar_select %p1088, %s76, 2
        %s1090 = smul.addr %s1089, 2
        %s1091 = scalar_lea.vmem %s39, %s1090
      $region96: #{tpu_custom_call.1} parent=39 // pred_fallthru
        _
      // Predicated region
      $region97: #{tpu_custom_call.1} parent=39 // pred_check
        %p1092 = pneg %p586
      $region98: #{tpu_custom_call.1} parent=39 // pred_check_branch
        %1094 = sbr.rel (%p1092) target = $region100
      $region99: #{tpu_custom_call.1} parent=39 // pred_region
        %p1095 = scmp.lt.s32.totalorder %s76, 2
        %s1096 = scalar_select %p1095, %s76, 2
        %s1097 = smul.addr %s1096, 8
        %s1098 = smul.addr %s1097, 4
        %s1099 = scalar_lea.vmem %s41, %s1098
      $region100: #{tpu_custom_call.1} parent=39 // pred_fallthru
        _
      // Predicated region
      $region101: #{tpu_custom_call.1} parent=39 // pred_check
        %p1100 = pneg %p612
      $region102: #{tpu_custom_call.1} parent=39 // pred_check_branch
        %1102 = sbr.rel (%p1100) target = $region104
      $region103: #{tpu_custom_call.1} parent=39 // pred_region
        %p1103 = scmp.lt.s32.totalorder %s76, 2
        %s1104 = scalar_select %p1103, %s76, 2
        %s1105 = smul.addr %s1104, 2
        %s1106 = scalar_lea.vmem %s43, %s1105
      $region104: #{tpu_custom_call.1} parent=39 // pred_fallthru
        _
      // Predicated region
      $region105: #{tpu_custom_call.1} parent=39 // pred_check
        %p1107 = pneg %p638
      $region106: #{tpu_custom_call.1} parent=39 // pred_check_branch
        %1109 = sbr.rel (%p1107) target = $region108
      $region107: #{tpu_custom_call.1} parent=39 // pred_region
        %p1110 = scmp.lt.s32.totalorder %s76, 2
        %s1111 = scalar_select %p1110, %s76, 2
        %s1112 = smul.addr %s1111, 4
        %s1113 = smul.addr %s1112, 4
        %s1114 = scalar_lea.vmem %s45, %s1113
      $region108: #{tpu_custom_call.1} parent=39 // pred_fallthru
        _
      // Predicated region
      $region109: #{tpu_custom_call.1} parent=39 // pred_check
        %p1115 = pneg %p664
      $region110: #{tpu_custom_call.1} parent=39 // pred_check_branch
        %1117 = sbr.rel (%p1115) target = $region112
      $region111: #{tpu_custom_call.1} parent=39 // pred_region
        %p1118 = scmp.lt.s32.totalorder %s76, 2
        %s1119 = scalar_select %p1118, %s76, 2
        %s1120 = scalar_lea.vmem %s47, %s1119
      $region112: #{tpu_custom_call.1} parent=39 // pred_fallthru
        _
      // Predicated region
      $region113: #{tpu_custom_call.1} parent=39 // pred_check
        %p1121 = pneg %p690
      $region114: #{tpu_custom_call.1} parent=39 // pred_check_branch
        %1123 = sbr.rel (%p1121) target = $region116
      $region115: #{tpu_custom_call.1} parent=39 // pred_region
        %p1124 = scmp.lt.s32.totalorder %s76, 2
        %s1125 = scalar_select %p1124, %s76, 2
        %s1126 = smul.addr %s1125, 4
        %s1127 = smul.addr %s1126, 4
        %s1128 = scalar_lea.vmem %s49, %s1127
      $region116: #{tpu_custom_call.1} parent=39 // pred_fallthru
        _
      // Predicated region
      $region117: #{tpu_custom_call.1} parent=39 // pred_check
        %p1129 = pneg %p716
      $region118: #{tpu_custom_call.1} parent=39 // pred_check_branch
        %1131 = sbr.rel (%p1129) target = $region120
      $region119: #{tpu_custom_call.1} parent=39 // pred_region
        %p1132 = scmp.lt.s32.totalorder %s76, 2
        %s1133 = scalar_select %p1132, %s76, 2
        %s1134 = scalar_lea.vmem %s51, %s1133
      $region120: #{tpu_custom_call.1} parent=39 // pred_fallthru
        _
      // Predicated region
      $region121: #{tpu_custom_call.1} parent=39 // pred_check
        %p1135 = pneg %p742
      $region122: #{tpu_custom_call.1} parent=39 // pred_check_branch
        %1137 = sbr.rel (%p1135) target = $region124
      $region123: #{tpu_custom_call.1} parent=39 // pred_region
        %p1138 = scmp.lt.s32.totalorder %s76, 2
        %s1139 = scalar_select %p1138, %s76, 2
        %s1140 = scalar_lea.vmem %s53, %s1139
      $region124: #{tpu_custom_call.1} parent=39 // pred_fallthru
        _
      // Predicated region
      $region125: #{tpu_custom_call.1} parent=39 // pred_check
        %p1141 = pneg %p768
      $region126: #{tpu_custom_call.1} parent=39 // pred_check_branch
        %1143 = sbr.rel (%p1141) target = $region128
      $region127: #{tpu_custom_call.1} parent=39 // pred_region
        %p1144 = scmp.lt.s32.totalorder %s76, 2
        %s1145 = scalar_select %p1144, %s76, 2
        %s1146 = smul.addr %s1145, 4
        %s1147 = smul.addr %s1146, 4
        %s1148 = scalar_lea.vmem %s55, %s1147
      $region128: #{tpu_custom_call.1} parent=39 // pred_fallthru
        _
      // Predicated region
      $region129: #{tpu_custom_call.1} parent=39 // pred_check
        %p1149 = pneg %p794
      $region130: #{tpu_custom_call.1} parent=39 // pred_check_branch
        %1151 = sbr.rel (%p1149) target = $region132
      $region131: #{tpu_custom_call.1} parent=39 // pred_region
        %p1152 = scmp.lt.s32.totalorder %s76, 2
        %s1153 = scalar_select %p1152, %s76, 2
        %s1154 = scalar_lea.vmem %s57, %s1153
      $region132: #{tpu_custom_call.1} parent=39 // pred_fallthru
        _
      // Predicated region
      $region133: #{tpu_custom_call.1} parent=39 // pred_check
        %p1155 = pneg %p820
      $region134: #{tpu_custom_call.1} parent=39 // pred_check_branch
        %1157 = sbr.rel (%p1155) target = $region136
      $region135: #{tpu_custom_call.1} parent=39 // pred_region
        %p1158 = scmp.lt.s32.totalorder %s76, 2
        %s1159 = scalar_select %p1158, %s76, 2
        %s1160 = smul.addr %s1159, 4
        %s1161 = smul.addr %s1160, 4
        %s1162 = scalar_lea.vmem %s59, %s1161
      $region136: #{tpu_custom_call.1} parent=39 // pred_fallthru
        _
      // Predicated region
      $region137: #{tpu_custom_call.1} parent=39 // pred_check
        %p1163 = pneg %p846
      $region138: #{tpu_custom_call.1} parent=39 // pred_check_branch
        %1165 = sbr.rel (%p1163) target = $region140
      $region139: #{tpu_custom_call.1} parent=39 // pred_region
        %p1166 = scmp.lt.s32.totalorder %s76, 2
        %s1167 = scalar_select %p1166, %s76, 2
        %s1168 = scalar_lea.vmem %s61, %s1167
      $region140: #{tpu_custom_call.1} parent=39 // pred_fallthru
        _
      // Predicated region
      $region141: #{tpu_custom_call.1} parent=39 // pred_check
        %p1169 = pneg %p872
      $region142: #{tpu_custom_call.1} parent=39 // pred_check_branch
        %1171 = sbr.rel (%p1169) target = $region144
      $region143: #{tpu_custom_call.1} parent=39 // pred_region
        %p1172 = scmp.lt.s32.totalorder %s76, 2
        %s1173 = scalar_select %p1172, %s76, 2
        %s1174 = smul.addr %s1173, 4
        %s1175 = smul.addr %s1174, 4
        %s1176 = scalar_lea.vmem %s63, %s1175
      $region144: #{tpu_custom_call.1} parent=39 // pred_fallthru
        _
      // Predicated region
      $region145: #{tpu_custom_call.1} parent=39 // pred_check
        %p1177 = pneg %p898
      $region146: #{tpu_custom_call.1} parent=39 // pred_check_branch
        %1179 = sbr.rel (%p1177) target = $region148
      $region147: #{tpu_custom_call.1} parent=39 // pred_region
        %p1180 = scmp.lt.s32.totalorder %s76, 2
        %s1181 = scalar_select %p1180, %s76, 2
        %s1182 = scalar_lea.vmem %s65, %s1181
      $region148: #{tpu_custom_call.1} parent=39 // pred_fallthru
        _
    $region40: #{tpu_custom_call.1} parent=5 // pred_fallthru
      _
    %p1183 = scmp.le.s32.totalorder 1, %s76
    %p1184 = scmp.lt.s32.totalorder %s76, 4
    %p1185 = pnand %p1183, %p1184
    %p1186 = pneg %p1185
    // Predicated region
    $region149: #{tpu_custom_call.1} parent=5 // pred_check
      _
    $region150: #{tpu_custom_call.1} parent=5 // pred_check_branch
      %1188 = sbr.rel (%p1185) target = $region152
    $region151: #{tpu_custom_call.1} parent=5 // pred_region
      %s1189 = ssub.s32 %s76, 1
      %p1190 = pneg %p97
      %p1191 = pneg %p94
      %p1192 = pneg %p118
      %p1193 = pneg %p115
      %p1194 = pneg %p139
      %p1195 = pneg %p136
      %p1196 = pneg %p160
      %p1197 = pneg %p157
      %p1198 = pneg %p181
      %p1199 = pneg %p178
      %p1200 = pneg %p202
      %p1201 = pneg %p199
      %p1202 = scmp.lt.s32.totalorder %s81, 2
      %s1203 = scalar_select %p1202, %s81, 2
      %s1204 = smul.addr %s1203, 2
      %s1205 = scalar_lea.vmem %s13, %s1204
      %p1206 = pneg %p228
      %p1207 = pneg %p225
      %p1208 = scmp.lt.s32.totalorder %s81, 2
      %s1209 = scalar_select %p1208, %s81, 2
      %s1210 = scalar_lea.vmem %s15, %s1209
      %p1211 = pneg %p254
      %p1212 = pneg %p251
      %p1213 = scmp.lt.s32.totalorder %s81, 2
      %s1214 = scalar_select %p1213, %s81, 2
      %s1215 = smul.addr %s1214, 4
      %s1216 = smul.addr %s1215, 4
      %s1217 = scalar_lea.vmem %s17, %s1216
      %p1218 = pneg %p280
      %p1219 = pneg %p277
      %p1220 = scmp.lt.s32.totalorder %s81, 2
      %s1221 = scalar_select %p1220, %s81, 2
      %s1222 = scalar_lea.vmem %s19, %s1221
      %p1223 = pneg %p306
      %p1224 = pneg %p303
      %p1225 = scmp.lt.s32.totalorder %s81, 2
      %s1226 = scalar_select %p1225, %s81, 2
      %s1227 = smul.addr %s1226, 2
      %s1228 = scalar_lea.vmem %s21, %s1227
      %p1229 = pneg %p332
      %p1230 = pneg %p329
      %p1231 = scmp.lt.s32.totalorder %s81, 2
      %s1232 = scalar_select %p1231, %s81, 2
      %s1233 = scalar_lea.vmem %s23, %s1232
      %p1234 = pneg %p358
      %p1235 = pneg %p355
      %p1236 = scmp.lt.s32.totalorder %s81, 2
      %s1237 = scalar_select %p1236, %s81, 2
      %s1238 = smul.addr %s1237, 4
      %s1239 = smul.addr %s1238, 4
      %s1240 = scalar_lea.vmem %s25, %s1239
      %p1241 = pneg %p384
      %p1242 = pneg %p381
      %p1243 = scmp.lt.s32.totalorder %s81, 2
      %s1244 = scalar_select %p1243, %s81, 2
      %s1245 = scalar_lea.vmem %s27, %s1244
      %p1246 = pneg %p410
      %p1247 = pneg %p407
      %p1248 = scmp.lt.s32.totalorder %s81, 2
      %s1249 = scalar_select %p1248, %s81, 2
      %s1250 = smul.addr %s1249, 24
      %s1251 = smul.addr %s1250, 4
      %s1252 = scalar_lea.vmem %s29, %s1251
      %p1253 = pneg %p436
      %p1254 = pneg %p433
      %p1255 = scmp.lt.s32.totalorder %s81, 2
      %s1256 = scalar_select %p1255, %s81, 2
      %s1257 = smul.addr %s1256, 2
      %s1258 = scalar_lea.vmem %s31, %s1257
      %p1259 = pneg %p462
      %p1260 = pneg %p459
      %p1261 = scmp.lt.s32.totalorder %s81, 2
      %s1262 = scalar_select %p1261, %s81, 2
      %s1263 = smul.addr %s1262, 8
      %s1264 = smul.addr %s1263, 4
      %s1265 = scalar_lea.vmem %s33, %s1264
      %p1266 = pneg %p488
      %p1267 = pneg %p485
      %p1268 = scmp.lt.s32.totalorder %s81, 2
      %s1269 = scalar_select %p1268, %s81, 2
      %s1270 = smul.addr %s1269, 2
      %s1271 = scalar_lea.vmem %s35, %s1270
      %p1272 = pneg %p514
      %p1273 = pneg %p511
      %p1274 = scmp.lt.s32.totalorder %s81, 2
      %s1275 = scalar_select %p1274, %s81, 2
      %s1276 = smul.addr %s1275, 16
      %s1277 = smul.addr %s1276, 4
      %s1278 = scalar_lea.vmem %s37, %s1277
      %p1279 = pneg %p540
      %p1280 = pneg %p537
      %p1281 = scmp.lt.s32.totalorder %s81, 2
      %s1282 = scalar_select %p1281, %s81, 2
      %s1283 = smul.addr %s1282, 2
      %s1284 = scalar_lea.vmem %s39, %s1283
      %p1285 = pneg %p566
      %p1286 = pneg %p563
      %p1287 = scmp.lt.s32.totalorder %s81, 2
      %s1288 = scalar_select %p1287, %s81, 2
      %s1289 = smul.addr %s1288, 8
      %s1290 = smul.addr %s1289, 4
      %s1291 = scalar_lea.vmem %s41, %s1290
      %p1292 = pneg %p592
      %p1293 = pneg %p589
      %p1294 = scmp.lt.s32.totalorder %s81, 2
      %s1295 = scalar_select %p1294, %s81, 2
      %s1296 = smul.addr %s1295, 2
      %s1297 = scalar_lea.vmem %s43, %s1296
      %p1298 = pneg %p618
      %p1299 = pneg %p615
      %p1300 = scmp.lt.s32.totalorder %s81, 2
      %s1301 = scalar_select %p1300, %s81, 2
      %s1302 = smul.addr %s1301, 4
      %s1303 = smul.addr %s1302, 4
      %s1304 = scalar_lea.vmem %s45, %s1303
      %p1305 = pneg %p644
      %p1306 = pneg %p641
      %p1307 = scmp.lt.s32.totalorder %s81, 2
      %s1308 = scalar_select %p1307, %s81, 2
      %s1309 = scalar_lea.vmem %s47, %s1308
      %p1310 = pneg %p670
      %p1311 = pneg %p667
      %p1312 = scmp.lt.s32.totalorder %s81, 2
      %s1313 = scalar_select %p1312, %s81, 2
      %s1314 = smul.addr %s1313, 4
      %s1315 = smul.addr %s1314, 4
      %s1316 = scalar_lea.vmem %s49, %s1315
      %p1317 = pneg %p696
      %p1318 = pneg %p693
      %p1319 = scmp.lt.s32.totalorder %s81, 2
      %s1320 = scalar_select %p1319, %s81, 2
      %s1321 = scalar_lea.vmem %s51, %s1320
      %p1322 = pneg %p722
      %p1323 = pneg %p719
      %p1324 = scmp.lt.s32.totalorder %s81, 2
      %s1325 = scalar_select %p1324, %s81, 2
      %s1326 = scalar_lea.vmem %s53, %s1325
      %p1327 = pneg %p748
      %p1328 = pneg %p745
      %p1329 = scmp.lt.s32.totalorder %s81, 2
      %s1330 = scalar_select %p1329, %s81, 2
      %s1331 = smul.addr %s1330, 4
      %s1332 = smul.addr %s1331, 4
      %s1333 = scalar_lea.vmem %s55, %s1332
      %p1334 = pneg %p774
      %p1335 = pneg %p771
      %p1336 = scmp.lt.s32.totalorder %s81, 2
      %s1337 = scalar_select %p1336, %s81, 2
      %s1338 = scalar_lea.vmem %s57, %s1337
      %p1339 = pneg %p800
      %p1340 = pneg %p797
      %p1341 = scmp.lt.s32.totalorder %s81, 2
      %s1342 = scalar_select %p1341, %s81, 2
      %s1343 = smul.addr %s1342, 4
      %s1344 = smul.addr %s1343, 4
      %s1345 = scalar_lea.vmem %s59, %s1344
      %p1346 = pneg %p826
      %p1347 = pneg %p823
      %p1348 = scmp.lt.s32.totalorder %s81, 2
      %s1349 = scalar_select %p1348, %s81, 2
      %s1350 = scalar_lea.vmem %s61, %s1349
      %p1351 = pneg %p852
      %p1352 = pneg %p849
      %p1353 = scmp.lt.s32.totalorder %s81, 2
      %s1354 = scalar_select %p1353, %s81, 2
      %s1355 = smul.addr %s1354, 4
      %s1356 = smul.addr %s1355, 4
      %s1357 = scalar_lea.vmem %s63, %s1356
      %p1358 = pneg %p878
      %p1359 = pneg %p875
      %p1360 = scmp.lt.s32.totalorder %s81, 2
      %s1361 = scalar_select %p1360, %s81, 2
      %s1362 = scalar_lea.vmem %s65, %s1361
      %p1363 = pneg %p904
      %p1364 = pneg %p901
      %p1365 = pneg %p930
      %p1366 = pneg %p927
      %p1367 = scmp.lt.s32.totalorder %s81, 2
      %s1368 = scalar_select %p1367, %s81, 2
      %s1369 = smul.addr %s1368, 4
      %s1370 = smul.addr %s1369, 8
      %s1371 = scalar_lea.vmem %s67, %s1370
      %p1372 = pneg %p956
      %p1373 = pneg %p953
      %p1374 = scmp.lt.s32.totalorder %s81, 2
      %s1375 = scalar_select %p1374, %s81, 2
      %s1376 = scalar_lea.vmem %s69, %s1375
      %p1377 = scmp.lt.s32.totalorder %s81, 2
      %s1378 = scalar_select %p1377, %s81, 2
      %s1379 = smul.addr %s1378, 2
      %s1380 = scalar_lea.vmem %s13, %s1379
      %p1381 = scmp.lt.s32.totalorder %s81, 2
      %s1382 = scalar_select %p1381, %s81, 2
      %s1383 = scalar_lea.vmem %s15, %s1382
      %p1384 = scmp.lt.s32.totalorder %s81, 2
      %s1385 = scalar_select %p1384, %s81, 2
      %s1386 = smul.addr %s1385, 4
      %s1387 = smul.addr %s1386, 4
      %s1388 = scalar_lea.vmem %s17, %s1387
      %p1389 = scmp.lt.s32.totalorder %s81, 2
      %s1390 = scalar_select %p1389, %s81, 2
      %s1391 = scalar_lea.vmem %s19, %s1390
      %p1392 = scmp.lt.s32.totalorder %s81, 2
      %s1393 = scalar_select %p1392, %s81, 2
      %s1394 = smul.addr %s1393, 2
      %s1395 = scalar_lea.vmem %s21, %s1394
      %p1396 = scmp.lt.s32.totalorder %s81, 2
      %s1397 = scalar_select %p1396, %s81, 2
      %s1398 = scalar_lea.vmem %s23, %s1397
      %p1399 = scmp.lt.s32.totalorder %s81, 2
      %s1400 = scalar_select %p1399, %s81, 2
      %s1401 = smul.addr %s1400, 4
      %s1402 = smul.addr %s1401, 4
      %s1403 = scalar_lea.vmem %s25, %s1402
      %p1404 = scmp.lt.s32.totalorder %s81, 2
      %s1405 = scalar_select %p1404, %s81, 2
      %s1406 = scalar_lea.vmem %s27, %s1405
      %p1407 = scmp.lt.s32.totalorder %s81, 2
      %s1408 = scalar_select %p1407, %s81, 2
      %s1409 = smul.addr %s1408, 24
      %s1410 = smul.addr %s1409, 4
      %s1411 = scalar_lea.vmem %s29, %s1410
      %p1412 = scmp.lt.s32.totalorder %s81, 2
      %s1413 = scalar_select %p1412, %s81, 2
      %s1414 = smul.addr %s1413, 2
      %s1415 = scalar_lea.vmem %s31, %s1414
      %p1416 = scmp.lt.s32.totalorder %s81, 2
      %s1417 = scalar_select %p1416, %s81, 2
      %s1418 = smul.addr %s1417, 8
      %s1419 = smul.addr %s1418, 4
      %s1420 = scalar_lea.vmem %s33, %s1419
      %p1421 = scmp.lt.s32.totalorder %s81, 2
      %s1422 = scalar_select %p1421, %s81, 2
      %s1423 = smul.addr %s1422, 2
      %s1424 = scalar_lea.vmem %s35, %s1423
      %p1425 = scmp.lt.s32.totalorder %s81, 2
      %s1426 = scalar_select %p1425, %s81, 2
      %s1427 = smul.addr %s1426, 16
      %s1428 = smul.addr %s1427, 4
      %s1429 = scalar_lea.vmem %s37, %s1428
      %p1430 = scmp.lt.s32.totalorder %s81, 2
      %s1431 = scalar_select %p1430, %s81, 2
      %s1432 = smul.addr %s1431, 2
      %s1433 = scalar_lea.vmem %s39, %s1432
      %p1434 = scmp.lt.s32.totalorder %s81, 2
      %s1435 = scalar_select %p1434, %s81, 2
      %s1436 = smul.addr %s1435, 8
      %s1437 = smul.addr %s1436, 4
      %s1438 = scalar_lea.vmem %s41, %s1437
      %p1439 = scmp.lt.s32.totalorder %s81, 2
      %s1440 = scalar_select %p1439, %s81, 2
      %s1441 = smul.addr %s1440, 2
      %s1442 = scalar_lea.vmem %s43, %s1441
      %p1443 = scmp.lt.s32.totalorder %s81, 2
      %s1444 = scalar_select %p1443, %s81, 2
      %s1445 = smul.addr %s1444, 4
      %s1446 = smul.addr %s1445, 4
      %s1447 = scalar_lea.vmem %s45, %s1446
      %p1448 = scmp.lt.s32.totalorder %s81, 2
      %s1449 = scalar_select %p1448, %s81, 2
      %s1450 = scalar_lea.vmem %s47, %s1449
      %p1451 = scmp.lt.s32.totalorder %s81, 2
      %s1452 = scalar_select %p1451, %s81, 2
      %s1453 = smul.addr %s1452, 4
      %s1454 = smul.addr %s1453, 4
      %s1455 = scalar_lea.vmem %s49, %s1454
      %p1456 = scmp.lt.s32.totalorder %s81, 2
      %s1457 = scalar_select %p1456, %s81, 2
      %s1458 = scalar_lea.vmem %s51, %s1457
      %p1459 = scmp.lt.s32.totalorder %s81, 2
      %s1460 = scalar_select %p1459, %s81, 2
      %s1461 = scalar_lea.vmem %s53, %s1460
      %p1462 = scmp.lt.s32.totalorder %s81, 2
      %s1463 = scalar_select %p1462, %s81, 2
      %s1464 = smul.addr %s1463, 4
      %s1465 = smul.addr %s1464, 4
      %s1466 = scalar_lea.vmem %s55, %s1465
      %p1467 = scmp.lt.s32.totalorder %s81, 2
      %s1468 = scalar_select %p1467, %s81, 2
      %s1469 = scalar_lea.vmem %s57, %s1468
      %p1470 = scmp.lt.s32.totalorder %s81, 2
      %s1471 = scalar_select %p1470, %s81, 2
      %s1472 = smul.addr %s1471, 4
      %s1473 = smul.addr %s1472, 4
      %s1474 = scalar_lea.vmem %s59, %s1473
      %p1475 = scmp.lt.s32.totalorder %s81, 2
      %s1476 = scalar_select %p1475, %s81, 2
      %s1477 = scalar_lea.vmem %s61, %s1476
      %p1478 = scmp.lt.s32.totalorder %s81, 2
      %s1479 = scalar_select %p1478, %s81, 2
      %s1480 = smul.addr %s1479, 4
      %s1481 = smul.addr %s1480, 4
      %s1482 = scalar_lea.vmem %s63, %s1481
      %p1483 = scmp.lt.s32.totalorder %s81, 2
      %s1484 = scalar_select %p1483, %s81, 2
      %s1485 = scalar_lea.vmem %s65, %s1484
      %p1486 = scmp.lt.s32.totalorder %s81, 2
      %s1487 = scalar_select %p1486, %s81, 2
      %s1488 = smul.addr %s1487, 4
      %s1489 = smul.addr %s1488, 8
      %s1490 = scalar_lea.vmem %s67, %s1489
      %p1491 = scmp.lt.s32.totalorder %s81, 2
      %s1492 = scalar_select %p1491, %s81, 2
      %s1493 = scalar_lea.vmem %s69, %s1492
      %v1495 = vld [vmem:[%s1] sm:$0xff]
      %v1496 = vld [vmem:[%s1 + $0x8] sm:$0xff]
      %v1497 = vld [vmem:[%s1 + $0x10] sm:$0xff]
      %v1498 = vld [vmem:[%s1 + $0x18] sm:$0xff]
      %v1499 = vld [vmem:[%s3] sm:$0xff]
      %v1500 = vld [vmem:[%s3 + $0x8] sm:$0xff]
      %v1501 = vld [vmem:[%s3 + $0x10] sm:$0xff]
      %v1502 = vld [vmem:[%s3 + $0x18] sm:$0xff]
      %v1503 = vld [vmem:[%s3 + $0x20] sm:$0xff]
      %v1504 = vld [vmem:[%s3 + $0x28] sm:$0xff]
      %v1505 = vld [vmem:[%s3 + $0x30] sm:$0xff]
      %v1506 = vld [vmem:[%s3 + $0x38] sm:$0xff]
      %v1507 = vld [vmem:[%s5] sm:$0xf]
      %v1508 = vld [vmem:[%s5 + $0x4] sm:$0xf]
      %v1509 = vld [vmem:[%s5 + $0x8] sm:$0xf]
      %v1510 = vld [vmem:[%s5 + $0xc] sm:$0xf]
      %v1511 = vld [vmem:[%s5 + $0x10] sm:$0xf]
      %v1512 = vld [vmem:[%s5 + $0x14] sm:$0xf]
      %v1513 = vld [vmem:[%s5 + $0x18] sm:$0xf]
      %v1514 = vld [vmem:[%s5 + $0x1c] sm:$0xf]
      %v1515 = vld [vmem:[%s7] sm:$0xf]
      %v1516 = vld [vmem:[%s7 + $0x4] sm:$0xf]
      %v1517 = vld [vmem:[%s7 + $0x8] sm:$0xf]
      %v1518 = vld [vmem:[%s7 + $0xc] sm:$0xf]
      %v1519 = vld [vmem:[%s7 + $0x10] sm:$0xf]
      %v1520 = vld [vmem:[%s7 + $0x14] sm:$0xf]
      %v1521 = vld [vmem:[%s7 + $0x18] sm:$0xf]
      %v1522 = vld [vmem:[%s7 + $0x1c] sm:$0xf]
      %v1523 = vld [vmem:[%s9] sm:$0xf]
      %v1524 = vld [vmem:[%s9 + $0x4] sm:$0xf]
      %v1525 = vld [vmem:[%s9 + $0x8] sm:$0xf]
      %v1526 = vld [vmem:[%s9 + $0xc] sm:$0xf]
      %v1527 = vld [vmem:[%s11] sm:$0xff]
      %v1528 = vld [vmem:[%s11 + $0x8] sm:$0xff]
      %v1529 = vld [vmem:[%s11 + $0x10] sm:$0xff]
      %v1530 = vld [vmem:[%s11 + $0x18] sm:$0xff]
      %v1531 = vld [vmem:[%s1380] sm:$0x3]
      %v1532 = vpack.c.bf16 %v1496, %v1495
      %v1533 = vpack.c.bf16 %v1498, %v1497
      %v1534 = vld [vmem:[%s1383] sm:$0x1]
      %v1536 = vperm.slane %v1534, 0
      %vm1538 = vcmask 31744
      %v1540 = vsel %vm1538, %v1532, 0
      %v1543 = vsel %vm1538, %v1533, 0
      %vm1545 = vcmask 1041408
      %v1547 = vsel %vm1545, %v1531, 0
      %1549 = vmatpush.bf16.msra.mxu0 0
      %1550 = vmatpush.bf16.msra.mxu0 0
      %1551 = vmatpush.bf16.msra.mxu0 0
      %1552 = vmatpush.bf16.msra.mxu0 0
      %1553 = vmatpush.bf16.msra.mxu0 0
      %1554 = vmatpush.bf16.msra.mxu0 0
      %1555 = vmatpush.bf16.msra.mxu0 0
      %1556 = vmatpush.bf16.msra.mxu0 %v1547
      %1557 = vmatmul.bf16.gmra.mxu0 %v1540
      %v1558 = vpop.f32.mrf.mxu0
      %v1559 = vadd.f32 %v1536, %v1558
      %v1560 = vpop.f32.mrf.mxu0
      %v1561 = vadd.f32 %v1536, %v1560
      %1562 = vmatmul.bf16.gmra.mxu0 %v1543
      %v1563 = vpop.f32.mrf.mxu0
      %v1564 = vadd.f32 %v1536, %v1563
      %v1565 = vpop.f32.mrf.mxu0
      %v1566 = vadd.f32 %v1536, %v1565
      %1567 = vdwg.mxu0
      %v1568 = vmul.f32 %v1559, 0.01
      %v1569 = vmul.f32 %v1561, 0.01
      %v1570 = vmul.f32 %v1564, 0.01
      %v1571 = vmul.f32 %v1566, 0.01
      %v1572 = vmax.f32 %v1559, %v1568
      %v1573 = vmax.f32 %v1561, %v1569
      %v1574 = vmax.f32 %v1564, %v1570
      %v1575 = vmax.f32 %v1566, %v1571
      %v1576 = vld [vmem:[%s1388] sm:$0xf]
      %v1577 = vld [vmem:[%s1388 + $0x4] sm:$0xf]
      %v1578 = vld [vmem:[%s1388 + $0x8] sm:$0xf]
      %v1579 = vld [vmem:[%s1388 + $0xc] sm:$0xf]
      %v1580 = vpack.c.bf16 %v1573, %v1572
      %v1581 = vpack.c.bf16 %v1575, %v1574
      %v1582 = vld [vmem:[%s1391] sm:$0x1]
      %v1584 = vperm.slane %v1582, 0
      %v1590 = vunpack.c.l.b16 %v1576
      %v1591 = vunpack.c.l.b16 %v1577
      %v1592 = vunpack.c.l.b16 %v1578
      %v1593 = vunpack.c.l.b16 %v1579
      %v1594 = vpack.c.b16 %v1591, %v1590
      %v1595 = vpack.c.b16 %v1593, %v1592
      %vm1598 = vcmask 261120
      %v1600 = vsel %vm1598, %v1580, 0
      %v1603 = vsel %vm1598, %v1581, 0
      %1605 = vmatpush.bf16.msra.mxu0 0
      %1606 = vmatpush.bf16.msra.mxu0 0
      %1607 = vmatpush.bf16.msra.mxu0 0
      %1608 = vmatpush.bf16.msra.mxu0 0
      %1609 = vmatpush.bf16.msra.mxu0 0
      %1610 = vmatpush.bf16.msra.mxu0 0
      %1611 = vmatpush.bf16.msra.mxu0 %v1595
      %1612 = vmatpush.bf16.msra.mxu0 %v1594
      %1613 = vmatmul.bf16.gmra.mxu0 %v1600
      %v1614 = vpop.f32.mrf.mxu0
      %v1615 = vadd.f32 %v1584, %v1614
      %v1616 = vpop.f32.mrf.mxu0
      %v1617 = vadd.f32 %v1584, %v1616
      %1618 = vmatmul.bf16.gmra.mxu0 %v1603
      %v1619 = vpop.f32.mrf.mxu0
      %v1620 = vadd.f32 %v1584, %v1619
      %v1621 = vpop.f32.mrf.mxu0
      %v1622 = vadd.f32 %v1584, %v1621
      %1623 = vdwg.mxu0
      %v1624 = vld [vmem:[%s1395] sm:$0x3]
      %v1625 = vpack.c.bf16 %v1500, %v1499
      %v1626 = vpack.c.bf16 %v1502, %v1501
      %v1627 = vpack.c.bf16 %v1504, %v1503
      %v1628 = vpack.c.bf16 %v1506, %v1505
      %v1629 = vld [vmem:[%s1398] sm:$0x1]
      %v1631 = vperm.slane %v1629, 0
      %v1634 = vsel %vm1538, %v1625, 0
      %v1637 = vsel %vm1538, %v1626, 0
      %v1640 = vsel %vm1538, %v1627, 0
      %v1643 = vsel %vm1538, %v1628, 0
      %v1646 = vsel %vm1545, %v1624, 0
      %1648 = vmatpush.bf16.msra.mxu0 0
      %1649 = vmatpush.bf16.msra.mxu0 0
      %1650 = vmatpush.bf16.msra.mxu0 0
      %1651 = vmatpush.bf16.msra.mxu0 0
      %1652 = vmatpush.bf16.msra.mxu0 0
      %1653 = vmatpush.bf16.msra.mxu0 0
      %1654 = vmatpush.bf16.msra.mxu0 0
      %1655 = vmatpush.bf16.msra.mxu0 %v1646
      %1656 = vmatmul.bf16.gmra.mxu0 %v1634
      %v1657 = vpop.f32.mrf.mxu0
      %v1658 = vadd.f32 %v1631, %v1657
      %v1659 = vpop.f32.mrf.mxu0
      %v1660 = vadd.f32 %v1631, %v1659
      %1661 = vmatmul.bf16.gmra.mxu0 %v1637
      %v1662 = vpop.f32.mrf.mxu0
      %v1663 = vadd.f32 %v1631, %v1662
      %v1664 = vpop.f32.mrf.mxu0
      %v1665 = vadd.f32 %v1631, %v1664
      %1666 = vmatmul.bf16.gmra.mxu0 %v1640
      %v1667 = vpop.f32.mrf.mxu0
      %v1668 = vadd.f32 %v1631, %v1667
      %v1669 = vpop.f32.mrf.mxu0
      %v1670 = vadd.f32 %v1631, %v1669
      %1671 = vmatmul.bf16.gmra.mxu0 %v1643
      %v1672 = vpop.f32.mrf.mxu0
      %v1673 = vadd.f32 %v1631, %v1672
      %v1674 = vpop.f32.mrf.mxu0
      %v1675 = vadd.f32 %v1631, %v1674
      %1676 = vdwg.mxu0
      %v1677 = vmul.f32 %v1658, 0.01
      %v1678 = vmul.f32 %v1660, 0.01
      %v1679 = vmul.f32 %v1663, 0.01
      %v1680 = vmul.f32 %v1665, 0.01
      %v1681 = vmul.f32 %v1668, 0.01
      %v1682 = vmul.f32 %v1670, 0.01
      %v1683 = vmul.f32 %v1673, 0.01
      %v1684 = vmul.f32 %v1675, 0.01
      %v1685 = vmax.f32 %v1658, %v1677
      %v1686 = vmax.f32 %v1660, %v1678
      %v1687 = vmax.f32 %v1663, %v1679
      %v1688 = vmax.f32 %v1665, %v1680
      %v1689 = vmax.f32 %v1668, %v1681
      %v1690 = vmax.f32 %v1670, %v1682
      %v1691 = vmax.f32 %v1673, %v1683
      %v1692 = vmax.f32 %v1675, %v1684
      %v1693 = vld [vmem:[%s1403] sm:$0xf]
      %v1694 = vld [vmem:[%s1403 + $0x4] sm:$0xf]
      %v1695 = vld [vmem:[%s1403 + $0x8] sm:$0xf]
      %v1696 = vld [vmem:[%s1403 + $0xc] sm:$0xf]
      %v1697 = vpack.c.bf16 %v1686, %v1685
      %v1698 = vpack.c.bf16 %v1688, %v1687
      %v1699 = vpack.c.bf16 %v1690, %v1689
      %v1700 = vpack.c.bf16 %v1692, %v1691
      %v1701 = vld [vmem:[%s1406] sm:$0x1]
      %v1703 = vperm.slane %v1701, 0
      %v1709 = vunpack.c.l.b16 %v1693
      %v1710 = vunpack.c.l.b16 %v1694
      %v1711 = vunpack.c.l.b16 %v1695
      %v1712 = vunpack.c.l.b16 %v1696
      %v1713 = vpack.c.b16 %v1710, %v1709
      %v1714 = vpack.c.b16 %v1712, %v1711
      %v1718 = vsel %vm1598, %v1697, 0
      %v1721 = vsel %vm1598, %v1698, 0
      %v1724 = vsel %vm1598, %v1699, 0
      %v1727 = vsel %vm1598, %v1700, 0
      %1729 = vmatpush.bf16.msra.mxu0 0
      %1730 = vmatpush.bf16.msra.mxu0 0
      %1731 = vmatpush.bf16.msra.mxu0 0
      %1732 = vmatpush.bf16.msra.mxu0 0
      %1733 = vmatpush.bf16.msra.mxu0 0
      %1734 = vmatpush.bf16.msra.mxu0 0
      %1735 = vmatpush.bf16.msra.mxu0 %v1714
      %1736 = vmatpush.bf16.msra.mxu0 %v1713
      %1737 = vmatmul.bf16.gmra.mxu0 %v1718
      %v1738 = vpop.f32.mrf.mxu0
      %v1739 = vadd.f32 %v1703, %v1738
      %v1740 = vpop.f32.mrf.mxu0
      %v1741 = vadd.f32 %v1703, %v1740
      %1742 = vmatmul.bf16.gmra.mxu0 %v1721
      %v1743 = vpop.f32.mrf.mxu0
      %v1744 = vadd.f32 %v1703, %v1743
      %v1745 = vpop.f32.mrf.mxu0
      %v1746 = vadd.f32 %v1703, %v1745
      %1747 = vmatmul.bf16.gmra.mxu0 %v1724
      %v1748 = vpop.f32.mrf.mxu0
      %v1749 = vadd.f32 %v1703, %v1748
      %v1750 = vpop.f32.mrf.mxu0
      %v1751 = vadd.f32 %v1703, %v1750
      %1752 = vmatmul.bf16.gmra.mxu0 %v1727
      %v1753 = vpop.f32.mrf.mxu0
      %v1754 = vadd.f32 %v1703, %v1753
      %v1755 = vpop.f32.mrf.mxu0
      %v1756 = vadd.f32 %v1703, %v1755
      %1757 = vdwg.mxu0
      %v1758 = vld [vmem:[%s1411] sm:$0xf]
      %v1759 = vld [vmem:[%s1411 + $0x4] sm:$0xf]
      %v1760 = vld [vmem:[%s1411 + $0x8] sm:$0xf]
      %v1761 = vld [vmem:[%s1411 + $0xc] sm:$0xf]
      %v1762 = vld [vmem:[%s1411 + $0x10] sm:$0xf]
      %v1763 = vld [vmem:[%s1411 + $0x14] sm:$0xf]
      %v1764 = vld [vmem:[%s1411 + $0x18] sm:$0xf]
      %v1765 = vld [vmem:[%s1411 + $0x1c] sm:$0xf]
      %v1766 = vld [vmem:[%s1411 + $0x20] sm:$0xf]
      %v1767 = vld [vmem:[%s1411 + $0x24] sm:$0xf]
      %v1768 = vld [vmem:[%s1411 + $0x28] sm:$0xf]
      %v1769 = vld [vmem:[%s1411 + $0x2c] sm:$0xf]
      %v1770 = vld [vmem:[%s1415] sm:$0x1]
      %v1771 = vld [vmem:[%s1420] sm:$0xf]
      %v1772 = vld [vmem:[%s1420 + $0x4] sm:$0xf]
      %v1773 = vld [vmem:[%s1420 + $0x8] sm:$0xf]
      %v1774 = vld [vmem:[%s1420 + $0xc] sm:$0xf]
      %v1775 = vld [vmem:[%s1424] sm:$0x1]
      %v1776 = vld [vmem:[%s1429] sm:$0xf]
      %v1777 = vld [vmem:[%s1429 + $0x4] sm:$0xf]
      %v1778 = vld [vmem:[%s1429 + $0x8] sm:$0xf]
      %v1779 = vld [vmem:[%s1429 + $0xc] sm:$0xf]
      %v1780 = vld [vmem:[%s1429 + $0x10] sm:$0xf]
      %v1781 = vld [vmem:[%s1429 + $0x14] sm:$0xf]
      %v1782 = vld [vmem:[%s1429 + $0x18] sm:$0xf]
      %v1783 = vld [vmem:[%s1429 + $0x1c] sm:$0xf]
      %v1784 = vld [vmem:[%s1433] sm:$0x1]
      %v1785 = vld [vmem:[%s1438] sm:$0xf]
      %v1786 = vld [vmem:[%s1438 + $0x4] sm:$0xf]
      %v1787 = vld [vmem:[%s1438 + $0x8] sm:$0xf]
      %v1788 = vld [vmem:[%s1438 + $0xc] sm:$0xf]
      %v1789 = vld [vmem:[%s1442] sm:$0x1]
      %v1790 = vpack.c.bf16 %v1617, %v1615
      %v1791 = vpack.c.bf16 %v1622, %v1620
      %v1796 = vunpack.c.l.b16 %v1758
      %v1797 = vunpack.c.l.b16 %v1759
      %v1798 = vunpack.c.l.b16 %v1760
      %v1799 = vunpack.c.l.b16 %v1761
      %v1800 = vpack.c.b16 %v1797, %v1796
      %v1801 = vpack.c.b16 %v1799, %v1798
      %v1805 = vsel %vm1598, %v1790, 0
      %v1808 = vsel %vm1598, %v1791, 0
      %1810 = vmatpush.bf16.msra.mxu0 0
      %1811 = vmatpush.bf16.msra.mxu0 0
      %1812 = vmatpush.bf16.msra.mxu0 0
      %1813 = vmatpush.bf16.msra.mxu0 0
      %1814 = vmatpush.bf16.msra.mxu0 0
      %1815 = vmatpush.bf16.msra.mxu0 0
      %1816 = vmatpush.bf16.msra.mxu0 %v1801
      %1817 = vmatpush.bf16.msra.mxu0 %v1800
      %1818 = vmatmul.bf16.gmra.mxu0 %v1805
      %v1819 = vpop.f32.mrf.mxu0
      %v1820 = vadd.f32 0.0, %v1819
      %v1821 = vpop.f32.mrf.mxu0
      %v1822 = vadd.f32 0.0, %v1821
      %1823 = vmatmul.bf16.gmra.mxu0 %v1808
      %v1824 = vpop.f32.mrf.mxu0
      %v1825 = vadd.f32 0.0, %v1824
      %v1826 = vpop.f32.mrf.mxu0
      %v1827 = vadd.f32 0.0, %v1826
      %1828 = vdwg.mxu0
      %v1833 = vunpack.c.l.b16 %v1762
      %v1834 = vunpack.c.l.b16 %v1763
      %v1835 = vunpack.c.l.b16 %v1764
      %v1836 = vunpack.c.l.b16 %v1765
      %v1837 = vpack.c.b16 %v1834, %v1833
      %v1838 = vpack.c.b16 %v1836, %v1835
      %1841 = vmatpush.bf16.msra.mxu0 0
      %1842 = vmatpush.bf16.msra.mxu0 0
      %1843 = vmatpush.bf16.msra.mxu0 0
      %1844 = vmatpush.bf16.msra.mxu0 0
      %1845 = vmatpush.bf16.msra.mxu0 0
      %1846 = vmatpush.bf16.msra.mxu0 0
      %1847 = vmatpush.bf16.msra.mxu0 %v1838
      %1848 = vmatpush.bf16.msra.mxu0 %v1837
      %1849 = vmatmul.bf16.gmra.mxu0 %v1805
      %v1850 = vpop.f32.mrf.mxu0
      %v1851 = vadd.f32 0.0, %v1850
      %v1852 = vpop.f32.mrf.mxu0
      %v1853 = vadd.f32 0.0, %v1852
      %1854 = vmatmul.bf16.gmra.mxu0 %v1808
      %v1855 = vpop.f32.mrf.mxu0
      %v1856 = vadd.f32 0.0, %v1855
      %v1857 = vpop.f32.mrf.mxu0
      %v1858 = vadd.f32 0.0, %v1857
      %1859 = vdwg.mxu0
      %v1860 = vpack.c.bf16 %v1822, %v1820
      %v1861 = vpack.c.bf16 %v1827, %v1825
      %v1862 = vpack.c.bf16 %v1853, %v1851
      %v1863 = vpack.c.bf16 %v1858, %v1856
      %v1872 = vunpack.c.l.b16 %v1507
      %v1873 = vunpack.c.l.b16 %v1508
      %v1874 = vunpack.c.l.b16 %v1509
      %v1875 = vunpack.c.l.b16 %v1510
      %v1876 = vunpack.c.l.b16 %v1511
      %v1877 = vunpack.c.l.b16 %v1512
      %v1878 = vunpack.c.l.b16 %v1513
      %v1879 = vunpack.c.l.b16 %v1514
      %v1880 = vpack.c.b16 %v1873, %v1872
      %v1881 = vpack.c.b16 %v1875, %v1874
      %v1882 = vpack.c.b16 %v1877, %v1876
      %v1883 = vpack.c.b16 %v1879, %v1878
      %v1885 = vsel %vm1598, %v1880, 0
      %v1888 = vsel %vm1598, %v1881, 0
      %v1891 = vsel %vm1598, %v1882, 0
      %v1894 = vsel %vm1598, %v1883, 0
      %1896 = vmatpush.bf16.msra.mxu0 0
      %1897 = vmatpush.bf16.msra.mxu0 0
      %1898 = vmatpush.bf16.msra.mxu0 0
      %1899 = vmatpush.bf16.msra.mxu0 0
      %1900 = vmatpush.bf16.msra.mxu0 0
      %1901 = vmatpush.bf16.msra.mxu0 0
      %1902 = vmatpush.bf16.msra.mxu0 %v1863
      %1903 = vmatpush.bf16.msra.mxu0 %v1862
      %1904 = vmatmul.bf16.gmra.mxu0 %v1885
      %v1905 = vpop.f32.mrf.mxu0
      %v1906 = vadd.f32 0.0, %v1905
      %v1907 = vpop.f32.mrf.mxu0
      %v1908 = vadd.f32 0.0, %v1907
      %1909 = vmatmul.bf16.gmra.mxu0 %v1888
      %v1910 = vpop.f32.mrf.mxu0
      %v1911 = vadd.f32 0.0, %v1910
      %v1912 = vpop.f32.mrf.mxu0
      %v1913 = vadd.f32 0.0, %v1912
      %1914 = vmatmul.bf16.gmra.mxu0 %v1891
      %v1915 = vpop.f32.mrf.mxu0
      %v1916 = vadd.f32 0.0, %v1915
      %v1917 = vpop.f32.mrf.mxu0
      %v1918 = vadd.f32 0.0, %v1917
      %1919 = vmatmul.bf16.gmra.mxu0 %v1894
      %v1920 = vpop.f32.mrf.mxu0
      %v1921 = vadd.f32 0.0, %v1920
      %v1922 = vpop.f32.mrf.mxu0
      %v1923 = vadd.f32 0.0, %v1922
      %1924 = vdwg.mxu0
      %v1933 = vunpack.c.l.b16 %v1515
      %v1934 = vunpack.c.l.b16 %v1516
      %v1935 = vunpack.c.l.b16 %v1517
      %v1936 = vunpack.c.l.b16 %v1518
      %v1937 = vunpack.c.l.b16 %v1519
      %v1938 = vunpack.c.l.b16 %v1520
      %v1939 = vunpack.c.l.b16 %v1521
      %v1940 = vunpack.c.l.b16 %v1522
      %v1941 = vpack.c.b16 %v1934, %v1933
      %v1942 = vpack.c.b16 %v1936, %v1935
      %v1943 = vpack.c.b16 %v1938, %v1937
      %v1944 = vpack.c.b16 %v1940, %v1939
      %v1946 = vsel %vm1598, %v1941, 0
      %v1949 = vsel %vm1598, %v1942, 0
      %v1952 = vsel %vm1598, %v1943, 0
      %v1955 = vsel %vm1598, %v1944, 0
      %1957 = vmatpush.bf16.msra.mxu0 0
      %1958 = vmatpush.bf16.msra.mxu0 0
      %1959 = vmatpush.bf16.msra.mxu0 0
      %1960 = vmatpush.bf16.msra.mxu0 0
      %1961 = vmatpush.bf16.msra.mxu0 0
      %1962 = vmatpush.bf16.msra.mxu0 0
      %1963 = vmatpush.bf16.msra.mxu0 %v1861
      %1964 = vmatpush.bf16.msra.mxu0 %v1860
      %1965 = vmatmul.bf16.gmra.mxu0 %v1946
      %v1966 = vpop.f32.mrf.mxu0
      %v1967 = vadd.f32 %v1906, %v1966
      %v1968 = vpop.f32.mrf.mxu0
      %v1969 = vadd.f32 %v1908, %v1968
      %1970 = vmatmul.bf16.gmra.mxu0 %v1949
      %v1971 = vpop.f32.mrf.mxu0
      %v1972 = vadd.f32 %v1911, %v1971
      %v1973 = vpop.f32.mrf.mxu0
      %v1974 = vadd.f32 %v1913, %v1973
      %1975 = vmatmul.bf16.gmra.mxu0 %v1952
      %v1976 = vpop.f32.mrf.mxu0
      %v1977 = vadd.f32 %v1916, %v1976
      %v1978 = vpop.f32.mrf.mxu0
      %v1979 = vadd.f32 %v1918, %v1978
      %1980 = vmatmul.bf16.gmra.mxu0 %v1955
      %v1981 = vpop.f32.mrf.mxu0
      %v1982 = vadd.f32 %v1921, %v1981
      %v1983 = vpop.f32.mrf.mxu0
      %v1984 = vadd.f32 %v1923, %v1983
      %1985 = vdwg.mxu0
      %v1986 = vpack.c.bf16 %v1741, %v1739
      %v1987 = vpack.c.bf16 %v1746, %v1744
      %v1988 = vpack.c.bf16 %v1751, %v1749
      %v1989 = vpack.c.bf16 %v1756, %v1754
      %v1994 = vunpack.c.l.b16 %v1766
      %v1995 = vunpack.c.l.b16 %v1767
      %v1996 = vunpack.c.l.b16 %v1768
      %v1997 = vunpack.c.l.b16 %v1769
      %v1998 = vpack.c.b16 %v1995, %v1994
      %v1999 = vpack.c.b16 %v1997, %v1996
      %v2003 = vsel %vm1598, %v1986, 0
      %v2006 = vsel %vm1598, %v1987, 0
      %v2009 = vsel %vm1598, %v1988, 0
      %v2012 = vsel %vm1598, %v1989, 0
      %2014 = vmatpush.bf16.msra.mxu0 0
      %2015 = vmatpush.bf16.msra.mxu0 0
      %2016 = vmatpush.bf16.msra.mxu0 0
      %2017 = vmatpush.bf16.msra.mxu0 0
      %2018 = vmatpush.bf16.msra.mxu0 0
      %2019 = vmatpush.bf16.msra.mxu0 0
      %2020 = vmatpush.bf16.msra.mxu0 %v1999
      %2021 = vmatpush.bf16.msra.mxu0 %v1998
      %2022 = vmatmul.bf16.gmra.mxu0 %v2003
      %v2023 = vpop.f32.mrf.mxu0
      %v2024 = vadd.f32 0.0, %v2023
      %v2025 = vpop.f32.mrf.mxu0
      %v2026 = vadd.f32 0.0, %v2025
      %2027 = vmatmul.bf16.gmra.mxu0 %v2006
      %v2028 = vpop.f32.mrf.mxu0
      %v2029 = vadd.f32 0.0, %v2028
      %v2030 = vpop.f32.mrf.mxu0
      %v2031 = vadd.f32 0.0, %v2030
      %2032 = vmatmul.bf16.gmra.mxu0 %v2009
      %v2033 = vpop.f32.mrf.mxu0
      %v2034 = vadd.f32 0.0, %v2033
      %v2035 = vpop.f32.mrf.mxu0
      %v2036 = vadd.f32 0.0, %v2035
      %2037 = vmatmul.bf16.gmra.mxu0 %v2012
      %v2038 = vpop.f32.mrf.mxu0
      %v2039 = vadd.f32 0.0, %v2038
      %v2040 = vpop.f32.mrf.mxu0
      %v2041 = vadd.f32 0.0, %v2040
      %2042 = vdwg.mxu0
      %v2043 = vadd.f32 %v1967, %v2024
      %v2044 = vadd.f32 %v1969, %v2026
      %v2045 = vadd.f32 %v1972, %v2029
      %v2046 = vadd.f32 %v1974, %v2031
      %v2047 = vadd.f32 %v1977, %v2034
      %v2048 = vadd.f32 %v1979, %v2036
      %v2049 = vadd.f32 %v1982, %v2039
      %v2050 = vadd.f32 %v1984, %v2041
      %v2052 = vperm.slane %v1770, 0
      %v2054 = vadd.f32 %v2043, %v2052
      %v2055 = vadd.f32 %v2044, %v2052
      %v2056 = vadd.f32 %v2045, %v2052
      %v2057 = vadd.f32 %v2046, %v2052
      %v2058 = vadd.f32 %v2047, %v2052
      %v2059 = vadd.f32 %v2048, %v2052
      %v2060 = vadd.f32 %v2049, %v2052
      %v2061 = vadd.f32 %v2050, %v2052
      %v2062 = vmul.f32 %v2054, 0.01
      %v2063 = vmul.f32 %v2055, 0.01
      %v2064 = vmul.f32 %v2056, 0.01
      %v2065 = vmul.f32 %v2057, 0.01
      %v2066 = vmul.f32 %v2058, 0.01
      %v2067 = vmul.f32 %v2059, 0.01
      %v2068 = vmul.f32 %v2060, 0.01
      %v2069 = vmul.f32 %v2061, 0.01
      %v2070 = vmax.f32 %v2054, %v2062
      %v2071 = vmax.f32 %v2055, %v2063
      %v2072 = vmax.f32 %v2056, %v2064
      %v2073 = vmax.f32 %v2057, %v2065
      %v2074 = vmax.f32 %v2058, %v2066
      %v2075 = vmax.f32 %v2059, %v2067
      %v2076 = vmax.f32 %v2060, %v2068
      %v2077 = vmax.f32 %v2061, %v2069
      %v2078 = vpack.c.bf16 %v2071, %v2070
      %v2079 = vpack.c.bf16 %v2073, %v2072
      %v2080 = vpack.c.bf16 %v2075, %v2074
      %v2081 = vpack.c.bf16 %v2077, %v2076
      %v2083 = vperm.slane %v1775, 0
      %v2089 = vunpack.c.l.b16 %v1771
      %v2090 = vunpack.c.l.b16 %v1772
      %v2091 = vunpack.c.l.b16 %v1773
      %v2092 = vunpack.c.l.b16 %v1774
      %v2093 = vpack.c.b16 %v2090, %v2089
      %v2094 = vpack.c.b16 %v2092, %v2091
      %v2098 = vsel %vm1598, %v2078, 0
      %v2101 = vsel %vm1598, %v2079, 0
      %v2104 = vsel %vm1598, %v2080, 0
      %v2107 = vsel %vm1598, %v2081, 0
      %2109 = vmatpush.bf16.msra.mxu0 0
      %2110 = vmatpush.bf16.msra.mxu0 0
      %2111 = vmatpush.bf16.msra.mxu0 0
      %2112 = vmatpush.bf16.msra.mxu0 0
      %2113 = vmatpush.bf16.msra.mxu0 0
      %2114 = vmatpush.bf16.msra.mxu0 0
      %2115 = vmatpush.bf16.msra.mxu0 %v2094
      %2116 = vmatpush.bf16.msra.mxu0 %v2093
      %2117 = vmatmul.bf16.gmra.mxu0 %v2098
      %v2118 = vpop.f32.mrf.mxu0
      %v2119 = vadd.f32 %v2083, %v2118
      %v2120 = vpop.f32.mrf.mxu0
      %v2121 = vadd.f32 %v2083, %v2120
      %2122 = vmatmul.bf16.gmra.mxu0 %v2101
      %v2123 = vpop.f32.mrf.mxu0
      %v2124 = vadd.f32 %v2083, %v2123
      %v2125 = vpop.f32.mrf.mxu0
      %v2126 = vadd.f32 %v2083, %v2125
      %2127 = vmatmul.bf16.gmra.mxu0 %v2104
      %v2128 = vpop.f32.mrf.mxu0
      %v2129 = vadd.f32 %v2083, %v2128
      %v2130 = vpop.f32.mrf.mxu0
      %v2131 = vadd.f32 %v2083, %v2130
      %2132 = vmatmul.bf16.gmra.mxu0 %v2107
      %v2133 = vpop.f32.mrf.mxu0
      %v2134 = vadd.f32 %v2083, %v2133
      %v2135 = vpop.f32.mrf.mxu0
      %v2136 = vadd.f32 %v2083, %v2135
      %2137 = vdwg.mxu0
      %v2138 = vpack.c.bf16 %v2121, %v2119
      %v2139 = vpack.c.bf16 %v2126, %v2124
      %v2140 = vpack.c.bf16 %v2131, %v2129
      %v2141 = vpack.c.bf16 %v2136, %v2134
      %v2146 = vunpack.c.l.b16 %v1523
      %v2147 = vunpack.c.l.b16 %v1524
      %v2148 = vunpack.c.l.b16 %v1525
      %v2149 = vunpack.c.l.b16 %v1526
      %v2150 = vpack.c.b16 %v2147, %v2146
      %v2151 = vpack.c.b16 %v2149, %v2148
      %vm2152 = vcmask 523264
      %v2154 = vsel %vm2152, %v2150, 0
      %v2157 = vsel %vm2152, %v2151, 0
      %2159 = vmatpush.bf16.msra.mxu0 0
      %2160 = vmatpush.bf16.msra.mxu0 0
      %2161 = vmatpush.bf16.msra.mxu0 0
      %2162 = vmatpush.bf16.msra.mxu0 0
      %2163 = vmatpush.bf16.msra.mxu0 %v2141
      %2164 = vmatpush.bf16.msra.mxu0 %v2140
      %2165 = vmatpush.bf16.msra.mxu0 %v2139
      %2166 = vmatpush.bf16.msra.mxu0 %v2138
      %2167 = vmatmul.bf16.gmra.mxu0 %v2154
      %v2168 = vpop.f32.mrf.mxu0
      %v2169 = vadd.f32 0.0, %v2168
      %v2170 = vpop.f32.mrf.mxu0
      %v2171 = vadd.f32 0.0, %v2170
      %2172 = vmatmul.bf16.gmra.mxu0 %v2157
      %v2173 = vpop.f32.mrf.mxu0
      %v2174 = vadd.f32 0.0, %v2173
      %v2175 = vpop.f32.mrf.mxu0
      %v2176 = vadd.f32 0.0, %v2175
      %2177 = vdwg.mxu0
      %2179 = vset.pattern.permute.xlu0 0
      %2180 = vperm.xlu0 %2179, %v1527
      %v2181 = vpop.permute.xlu0 %2180
      %2184 = vset.pattern.permute.xlu0 0
      %2185 = vperm.xlu0 %2184, %v1528
      %v2186 = vpop.permute.xlu0 %2185
      %2189 = vset.pattern.permute.xlu0 0
      %2190 = vperm.xlu0 %2189, %v1529
      %v2191 = vpop.permute.xlu0 %2190
      %2194 = vset.pattern.permute.xlu0 0
      %2195 = vperm.xlu0 %2194, %v1530
      %v2196 = vpop.permute.xlu0 %2195
      %v2198 = vmul.f32 %v2169, %v2181
      %v2199 = vmul.f32 %v2171, %v2186
      %v2200 = vmul.f32 %v2174, %v2191
      %v2201 = vmul.f32 %v2176, %v2196
      %v2202 = vpack.c.bf16 %v2199, %v2198
      %v2203 = vpack.c.bf16 %v2201, %v2200
      %v2208 = vunpack.c.l.b16 %v1780
      %v2209 = vunpack.c.l.b16 %v1781
      %v2210 = vunpack.c.l.b16 %v1782
      %v2211 = vunpack.c.l.b16 %v1783
      %v2212 = vpack.c.b16 %v2209, %v2208
      %v2213 = vpack.c.b16 %v2211, %v2210
      %v2217 = vsel %vm1598, %v2202, 0
      %v2220 = vsel %vm1598, %v2203, 0
      %2222 = vmatpush.bf16.msra.mxu0 0
      %2223 = vmatpush.bf16.msra.mxu0 0
      %2224 = vmatpush.bf16.msra.mxu0 0
      %2225 = vmatpush.bf16.msra.mxu0 0
      %2226 = vmatpush.bf16.msra.mxu0 0
      %2227 = vmatpush.bf16.msra.mxu0 0
      %2228 = vmatpush.bf16.msra.mxu0 %v2213
      %2229 = vmatpush.bf16.msra.mxu0 %v2212
      %2230 = vmatmul.bf16.gmra.mxu0 %v2217
      %v2231 = vpop.f32.mrf.mxu0
      %v2232 = vadd.f32 0.0, %v2231
      %v2233 = vpop.f32.mrf.mxu0
      %v2234 = vadd.f32 0.0, %v2233
      %2235 = vmatmul.bf16.gmra.mxu0 %v2220
      %v2236 = vpop.f32.mrf.mxu0
      %v2237 = vadd.f32 0.0, %v2236
      %v2238 = vpop.f32.mrf.mxu0
      %v2239 = vadd.f32 0.0, %v2238
      %2240 = vdwg.mxu0
      %v2245 = vunpack.c.l.b16 %v1776
      %v2246 = vunpack.c.l.b16 %v1777
      %v2247 = vunpack.c.l.b16 %v1778
      %v2248 = vunpack.c.l.b16 %v1779
      %v2249 = vpack.c.b16 %v2246, %v2245
      %v2250 = vpack.c.b16 %v2248, %v2247
      %2253 = vmatpush.bf16.msra.mxu0 0
      %2254 = vmatpush.bf16.msra.mxu0 0
      %2255 = vmatpush.bf16.msra.mxu0 0
      %2256 = vmatpush.bf16.msra.mxu0 0
      %2257 = vmatpush.bf16.msra.mxu0 0
      %2258 = vmatpush.bf16.msra.mxu0 0
      %2259 = vmatpush.bf16.msra.mxu0 %v2250
      %2260 = vmatpush.bf16.msra.mxu0 %v2249
      %2261 = vmatmul.bf16.gmra.mxu0 %v1805
      %v2262 = vpop.f32.mrf.mxu0
      %v2263 = vadd.f32 %v2232, %v2262
      %v2264 = vpop.f32.mrf.mxu0
      %v2265 = vadd.f32 %v2234, %v2264
      %2266 = vmatmul.bf16.gmra.mxu0 %v1808
      %v2267 = vpop.f32.mrf.mxu0
      %v2268 = vadd.f32 %v2237, %v2267
      %v2269 = vpop.f32.mrf.mxu0
      %v2270 = vadd.f32 %v2239, %v2269
      %2271 = vdwg.mxu0
      %v2273 = vperm.slane %v1784, 0
      %v2275 = vadd.f32 %v2263, %v2273
      %v2276 = vadd.f32 %v2265, %v2273
      %v2277 = vadd.f32 %v2268, %v2273
      %v2278 = vadd.f32 %v2270, %v2273
      %v2279 = vmul.f32 %v2275, 0.01
      %v2280 = vmul.f32 %v2276, 0.01
      %v2281 = vmul.f32 %v2277, 0.01
      %v2282 = vmul.f32 %v2278, 0.01
      %v2283 = vmax.f32 %v2275, %v2279
      %v2284 = vmax.f32 %v2276, %v2280
      %v2285 = vmax.f32 %v2277, %v2281
      %v2286 = vmax.f32 %v2278, %v2282
      %v2287 = vpack.c.bf16 %v2284, %v2283
      %v2288 = vpack.c.bf16 %v2286, %v2285
      %v2290 = vperm.slane %v1789, 0
      %v2296 = vunpack.c.l.b16 %v1785
      %v2297 = vunpack.c.l.b16 %v1786
      %v2298 = vunpack.c.l.b16 %v1787
      %v2299 = vunpack.c.l.b16 %v1788
      %v2300 = vpack.c.b16 %v2297, %v2296
      %v2301 = vpack.c.b16 %v2299, %v2298
      %v2305 = vsel %vm1598, %v2287, 0
      %v2308 = vsel %vm1598, %v2288, 0
      %2310 = vmatpush.bf16.msra.mxu0 0
      %2311 = vmatpush.bf16.msra.mxu0 0
      %2312 = vmatpush.bf16.msra.mxu0 0
      %2313 = vmatpush.bf16.msra.mxu0 0
      %2314 = vmatpush.bf16.msra.mxu0 0
      %2315 = vmatpush.bf16.msra.mxu0 0
      %2316 = vmatpush.bf16.msra.mxu0 %v2301
      %2317 = vmatpush.bf16.msra.mxu0 %v2300
      %2318 = vmatmul.bf16.gmra.mxu0 %v2305
      %v2319 = vpop.f32.mrf.mxu0
      %v2320 = vadd.f32 %v2290, %v2319
      %v2321 = vpop.f32.mrf.mxu0
      %v2322 = vadd.f32 %v2290, %v2321
      %2323 = vmatmul.bf16.gmra.mxu0 %v2308
      %v2324 = vpop.f32.mrf.mxu0
      %v2325 = vadd.f32 %v2290, %v2324
      %v2326 = vpop.f32.mrf.mxu0
      %v2327 = vadd.f32 %v2290, %v2326
      %2328 = vdwg.mxu0
      %v2329 = vadd.f32 %v2119, %v1739
      %v2330 = vadd.f32 %v2121, %v1741
      %v2331 = vadd.f32 %v2124, %v1744
      %v2332 = vadd.f32 %v2126, %v1746
      %v2333 = vadd.f32 %v2129, %v1749
      %v2334 = vadd.f32 %v2131, %v1751
      %v2335 = vadd.f32 %v2134, %v1754
      %v2336 = vadd.f32 %v2136, %v1756
      %v2337 = vadd.f32 %v2320, %v1615
      %v2338 = vadd.f32 %v2322, %v1617
      %v2339 = vadd.f32 %v2325, %v1620
      %v2340 = vadd.f32 %v2327, %v1622
      %s2341 = scalar_lea.vmem %s1411, 48
      %v2342 = vld [vmem:[%s2341] sm:$0xf]
      %v2343 = vld [vmem:[%s2341 + $0x4] sm:$0xf]
      %v2344 = vld [vmem:[%s2341 + $0x8] sm:$0xf]
      %v2345 = vld [vmem:[%s2341 + $0xc] sm:$0xf]
      %v2346 = vld [vmem:[%s2341 + $0x10] sm:$0xf]
      %v2347 = vld [vmem:[%s2341 + $0x14] sm:$0xf]
      %v2348 = vld [vmem:[%s2341 + $0x18] sm:$0xf]
      %v2349 = vld [vmem:[%s2341 + $0x1c] sm:$0xf]
      %v2350 = vld [vmem:[%s2341 + $0x20] sm:$0xf]
      %v2351 = vld [vmem:[%s2341 + $0x24] sm:$0xf]
      %v2352 = vld [vmem:[%s2341 + $0x28] sm:$0xf]
      %v2353 = vld [vmem:[%s2341 + $0x2c] sm:$0xf]
      %s2354 = scalar_lea.vmem %s1415, 1
      %v2355 = vld [vmem:[%s2354] sm:$0x1]
      %s2356 = scalar_lea.vmem %s1420, 16
      %v2357 = vld [vmem:[%s2356] sm:$0xf]
      %v2358 = vld [vmem:[%s2356 + $0x4] sm:$0xf]
      %v2359 = vld [vmem:[%s2356 + $0x8] sm:$0xf]
      %v2360 = vld [vmem:[%s2356 + $0xc] sm:$0xf]
      %s2361 = scalar_lea.vmem %s1424, 1
      %v2362 = vld [vmem:[%s2361] sm:$0x1]
      %s2363 = scalar_lea.vmem %s1429, 32
      %v2364 = vld [vmem:[%s2363] sm:$0xf]
      %v2365 = vld [vmem:[%s2363 + $0x4] sm:$0xf]
      %v2366 = vld [vmem:[%s2363 + $0x8] sm:$0xf]
      %v2367 = vld [vmem:[%s2363 + $0xc] sm:$0xf]
      %v2368 = vld [vmem:[%s2363 + $0x10] sm:$0xf]
      %v2369 = vld [vmem:[%s2363 + $0x14] sm:$0xf]
      %v2370 = vld [vmem:[%s2363 + $0x18] sm:$0xf]
      %v2371 = vld [vmem:[%s2363 + $0x1c] sm:$0xf]
      %s2372 = scalar_lea.vmem %s1433, 1
      %v2373 = vld [vmem:[%s2372] sm:$0x1]
      %s2374 = scalar_lea.vmem %s1438, 16
      %v2375 = vld [vmem:[%s2374] sm:$0xf]
      %v2376 = vld [vmem:[%s2374 + $0x4] sm:$0xf]
      %v2377 = vld [vmem:[%s2374 + $0x8] sm:$0xf]
      %v2378 = vld [vmem:[%s2374 + $0xc] sm:$0xf]
      %s2379 = scalar_lea.vmem %s1442, 1
      %v2380 = vld [vmem:[%s2379] sm:$0x1]
      %v2381 = vpack.c.bf16 %v2338, %v2337
      %v2382 = vpack.c.bf16 %v2340, %v2339
      %v2387 = vunpack.c.l.b16 %v2342
      %v2388 = vunpack.c.l.b16 %v2343
      %v2389 = vunpack.c.l.b16 %v2344
      %v2390 = vunpack.c.l.b16 %v2345
      %v2391 = vpack.c.b16 %v2388, %v2387
      %v2392 = vpack.c.b16 %v2390, %v2389
      %v2396 = vsel %vm1598, %v2381, 0
      %v2399 = vsel %vm1598, %v2382, 0
      %2401 = vmatpush.bf16.msra.mxu0 0
      %2402 = vmatpush.bf16.msra.mxu0 0
      %2403 = vmatpush.bf16.msra.mxu0 0
      %2404 = vmatpush.bf16.msra.mxu0 0
      %2405 = vmatpush.bf16.msra.mxu0 0
      %2406 = vmatpush.bf16.msra.mxu0 0
      %2407 = vmatpush.bf16.msra.mxu0 %v2392
      %2408 = vmatpush.bf16.msra.mxu0 %v2391
      %2409 = vmatmul.bf16.gmra.mxu0 %v2396
      %v2410 = vpop.f32.mrf.mxu0
      %v2411 = vadd.f32 0.0, %v2410
      %v2412 = vpop.f32.mrf.mxu0
      %v2413 = vadd.f32 0.0, %v2412
      %2414 = vmatmul.bf16.gmra.mxu0 %v2399
      %v2415 = vpop.f32.mrf.mxu0
      %v2416 = vadd.f32 0.0, %v2415
      %v2417 = vpop.f32.mrf.mxu0
      %v2418 = vadd.f32 0.0, %v2417
      %2419 = vdwg.mxu0
      %v2424 = vunpack.c.l.b16 %v2346
      %v2425 = vunpack.c.l.b16 %v2347
      %v2426 = vunpack.c.l.b16 %v2348
      %v2427 = vunpack.c.l.b16 %v2349
      %v2428 = vpack.c.b16 %v2425, %v2424
      %v2429 = vpack.c.b16 %v2427, %v2426
      %2432 = vmatpush.bf16.msra.mxu0 0
      %2433 = vmatpush.bf16.msra.mxu0 0
      %2434 = vmatpush.bf16.msra.mxu0 0
      %2435 = vmatpush.bf16.msra.mxu0 0
      %2436 = vmatpush.bf16.msra.mxu0 0
      %2437 = vmatpush.bf16.msra.mxu0 0
      %2438 = vmatpush.bf16.msra.mxu0 %v2429
      %2439 = vmatpush.bf16.msra.mxu0 %v2428
      %2440 = vmatmul.bf16.gmra.mxu0 %v2396
      %v2441 = vpop.f32.mrf.mxu0
      %v2442 = vadd.f32 0.0, %v2441
      %v2443 = vpop.f32.mrf.mxu0
      %v2444 = vadd.f32 0.0, %v2443
      %2445 = vmatmul.bf16.gmra.mxu0 %v2399
      %v2446 = vpop.f32.mrf.mxu0
      %v2447 = vadd.f32 0.0, %v2446
      %v2448 = vpop.f32.mrf.mxu0
      %v2449 = vadd.f32 0.0, %v2448
      %2450 = vdwg.mxu0
      %v2451 = vpack.c.bf16 %v2413, %v2411
      %v2452 = vpack.c.bf16 %v2418, %v2416
      %v2453 = vpack.c.bf16 %v2444, %v2442
      %v2454 = vpack.c.bf16 %v2449, %v2447
      %2455 = vmatpush.bf16.msra.mxu0 0
      %2456 = vmatpush.bf16.msra.mxu0 0
      %2457 = vmatpush.bf16.msra.mxu0 0
      %2458 = vmatpush.bf16.msra.mxu0 0
      %2459 = vmatpush.bf16.msra.mxu0 0
      %2460 = vmatpush.bf16.msra.mxu0 0
      %2461 = vmatpush.bf16.msra.mxu0 %v2454
      %2462 = vmatpush.bf16.msra.mxu0 %v2453
      %2463 = vmatmul.bf16.gmra.mxu0 %v1885
      %v2464 = vpop.f32.mrf.mxu0
      %v2465 = vadd.f32 0.0, %v2464
      %v2466 = vpop.f32.mrf.mxu0
      %v2467 = vadd.f32 0.0, %v2466
      %2468 = vmatmul.bf16.gmra.mxu0 %v1888
      %v2469 = vpop.f32.mrf.mxu0
      %v2470 = vadd.f32 0.0, %v2469
      %v2471 = vpop.f32.mrf.mxu0
      %v2472 = vadd.f32 0.0, %v2471
      %2473 = vmatmul.bf16.gmra.mxu0 %v1891
      %v2474 = vpop.f32.mrf.mxu0
      %v2475 = vadd.f32 0.0, %v2474
      %v2476 = vpop.f32.mrf.mxu0
      %v2477 = vadd.f32 0.0, %v2476
      %2478 = vmatmul.bf16.gmra.mxu0 %v1894
      %v2479 = vpop.f32.mrf.mxu0
      %v2480 = vadd.f32 0.0, %v2479
      %v2481 = vpop.f32.mrf.mxu0
      %v2482 = vadd.f32 0.0, %v2481
      %2483 = vdwg.mxu0
      %2484 = vmatpush.bf16.msra.mxu0 0
      %2485 = vmatpush.bf16.msra.mxu0 0
      %2486 = vmatpush.bf16.msra.mxu0 0
      %2487 = vmatpush.bf16.msra.mxu0 0
      %2488 = vmatpush.bf16.msra.mxu0 0
      %2489 = vmatpush.bf16.msra.mxu0 0
      %2490 = vmatpush.bf16.msra.mxu0 %v2452
      %2491 = vmatpush.bf16.msra.mxu0 %v2451
      %2492 = vmatmul.bf16.gmra.mxu0 %v1946
      %v2493 = vpop.f32.mrf.mxu0
      %v2494 = vadd.f32 %v2465, %v2493
      %v2495 = vpop.f32.mrf.mxu0
      %v2496 = vadd.f32 %v2467, %v2495
      %2497 = vmatmul.bf16.gmra.mxu0 %v1949
      %v2498 = vpop.f32.mrf.mxu0
      %v2499 = vadd.f32 %v2470, %v2498
      %v2500 = vpop.f32.mrf.mxu0
      %v2501 = vadd.f32 %v2472, %v2500
      %2502 = vmatmul.bf16.gmra.mxu0 %v1952
      %v2503 = vpop.f32.mrf.mxu0
      %v2504 = vadd.f32 %v2475, %v2503
      %v2505 = vpop.f32.mrf.mxu0
      %v2506 = vadd.f32 %v2477, %v2505
      %2507 = vmatmul.bf16.gmra.mxu0 %v1955
      %v2508 = vpop.f32.mrf.mxu0
      %v2509 = vadd.f32 %v2480, %v2508
      %v2510 = vpop.f32.mrf.mxu0
      %v2511 = vadd.f32 %v2482, %v2510
      %2512 = vdwg.mxu0
      %v2513 = vpack.c.bf16 %v2330, %v2329
      %v2514 = vpack.c.bf16 %v2332, %v2331
      %v2515 = vpack.c.bf16 %v2334, %v2333
      %v2516 = vpack.c.bf16 %v2336, %v2335
      %v2521 = vunpack.c.l.b16 %v2350
      %v2522 = vunpack.c.l.b16 %v2351
      %v2523 = vunpack.c.l.b16 %v2352
      %v2524 = vunpack.c.l.b16 %v2353
      %v2525 = vpack.c.b16 %v2522, %v2521
      %v2526 = vpack.c.b16 %v2524, %v2523
      %v2530 = vsel %vm1598, %v2513, 0
      %v2533 = vsel %vm1598, %v2514, 0
      %v2536 = vsel %vm1598, %v2515, 0
      %v2539 = vsel %vm1598, %v2516, 0
      %2541 = vmatpush.bf16.msra.mxu0 0
      %2542 = vmatpush.bf16.msra.mxu0 0
      %2543 = vmatpush.bf16.msra.mxu0 0
      %2544 = vmatpush.bf16.msra.mxu0 0
      %2545 = vmatpush.bf16.msra.mxu0 0
      %2546 = vmatpush.bf16.msra.mxu0 0
      %2547 = vmatpush.bf16.msra.mxu0 %v2526
      %2548 = vmatpush.bf16.msra.mxu0 %v2525
      %2549 = vmatmul.bf16.gmra.mxu0 %v2530
      %v2550 = vpop.f32.mrf.mxu0
      %v2551 = vadd.f32 0.0, %v2550
      %v2552 = vpop.f32.mrf.mxu0
      %v2553 = vadd.f32 0.0, %v2552
      %2554 = vmatmul.bf16.gmra.mxu0 %v2533
      %v2555 = vpop.f32.mrf.mxu0
      %v2556 = vadd.f32 0.0, %v2555
      %v2557 = vpop.f32.mrf.mxu0
      %v2558 = vadd.f32 0.0, %v2557
      %2559 = vmatmul.bf16.gmra.mxu0 %v2536
      %v2560 = vpop.f32.mrf.mxu0
      %v2561 = vadd.f32 0.0, %v2560
      %v2562 = vpop.f32.mrf.mxu0
      %v2563 = vadd.f32 0.0, %v2562
      %2564 = vmatmul.bf16.gmra.mxu0 %v2539
      %v2565 = vpop.f32.mrf.mxu0
      %v2566 = vadd.f32 0.0, %v2565
      %v2567 = vpop.f32.mrf.mxu0
      %v2568 = vadd.f32 0.0, %v2567
      %2569 = vdwg.mxu0
      %v2570 = vadd.f32 %v2494, %v2551
      %v2571 = vadd.f32 %v2496, %v2553
      %v2572 = vadd.f32 %v2499, %v2556
      %v2573 = vadd.f32 %v2501, %v2558
      %v2574 = vadd.f32 %v2504, %v2561
      %v2575 = vadd.f32 %v2506, %v2563
      %v2576 = vadd.f32 %v2509, %v2566
      %v2577 = vadd.f32 %v2511, %v2568
      %v2579 = vperm.slane %v2355, 0
      %v2581 = vadd.f32 %v2570, %v2579
      %v2582 = vadd.f32 %v2571, %v2579
      %v2583 = vadd.f32 %v2572, %v2579
      %v2584 = vadd.f32 %v2573, %v2579
      %v2585 = vadd.f32 %v2574, %v2579
      %v2586 = vadd.f32 %v2575, %v2579
      %v2587 = vadd.f32 %v2576, %v2579
      %v2588 = vadd.f32 %v2577, %v2579
      %v2589 = vmul.f32 %v2581, 0.01
      %v2590 = vmul.f32 %v2582, 0.01
      %v2591 = vmul.f32 %v2583, 0.01
      %v2592 = vmul.f32 %v2584, 0.01
      %v2593 = vmul.f32 %v2585, 0.01
      %v2594 = vmul.f32 %v2586, 0.01
      %v2595 = vmul.f32 %v2587, 0.01
      %v2596 = vmul.f32 %v2588, 0.01
      %v2597 = vmax.f32 %v2581, %v2589
      %v2598 = vmax.f32 %v2582, %v2590
      %v2599 = vmax.f32 %v2583, %v2591
      %v2600 = vmax.f32 %v2584, %v2592
      %v2601 = vmax.f32 %v2585, %v2593
      %v2602 = vmax.f32 %v2586, %v2594
      %v2603 = vmax.f32 %v2587, %v2595
      %v2604 = vmax.f32 %v2588, %v2596
      %v2605 = vpack.c.bf16 %v2598, %v2597
      %v2606 = vpack.c.bf16 %v2600, %v2599
      %v2607 = vpack.c.bf16 %v2602, %v2601
      %v2608 = vpack.c.bf16 %v2604, %v2603
      %v2610 = vperm.slane %v2362, 0
      %v2616 = vunpack.c.l.b16 %v2357
      %v2617 = vunpack.c.l.b16 %v2358
      %v2618 = vunpack.c.l.b16 %v2359
      %v2619 = vunpack.c.l.b16 %v2360
      %v2620 = vpack.c.b16 %v2617, %v2616
      %v2621 = vpack.c.b16 %v2619, %v2618
      %v2625 = vsel %vm1598, %v2605, 0
      %v2628 = vsel %vm1598, %v2606, 0
      %v2631 = vsel %vm1598, %v2607, 0
      %v2634 = vsel %vm1598, %v2608, 0
      %2636 = vmatpush.bf16.msra.mxu0 0
      %2637 = vmatpush.bf16.msra.mxu0 0
      %2638 = vmatpush.bf16.msra.mxu0 0
      %2639 = vmatpush.bf16.msra.mxu0 0
      %2640 = vmatpush.bf16.msra.mxu0 0
      %2641 = vmatpush.bf16.msra.mxu0 0
      %2642 = vmatpush.bf16.msra.mxu0 %v2621
      %2643 = vmatpush.bf16.msra.mxu0 %v2620
      %2644 = vmatmul.bf16.gmra.mxu0 %v2625
      %v2645 = vpop.f32.mrf.mxu0
      %v2646 = vadd.f32 %v2610, %v2645
      %v2647 = vpop.f32.mrf.mxu0
      %v2648 = vadd.f32 %v2610, %v2647
      %2649 = vmatmul.bf16.gmra.mxu0 %v2628
      %v2650 = vpop.f32.mrf.mxu0
      %v2651 = vadd.f32 %v2610, %v2650
      %v2652 = vpop.f32.mrf.mxu0
      %v2653 = vadd.f32 %v2610, %v2652
      %2654 = vmatmul.bf16.gmra.mxu0 %v2631
      %v2655 = vpop.f32.mrf.mxu0
      %v2656 = vadd.f32 %v2610, %v2655
      %v2657 = vpop.f32.mrf.mxu0
      %v2658 = vadd.f32 %v2610, %v2657
      %2659 = vmatmul.bf16.gmra.mxu0 %v2634
      %v2660 = vpop.f32.mrf.mxu0
      %v2661 = vadd.f32 %v2610, %v2660
      %v2662 = vpop.f32.mrf.mxu0
      %v2663 = vadd.f32 %v2610, %v2662
      %2664 = vdwg.mxu0
      %v2665 = vpack.c.bf16 %v2648, %v2646
      %v2666 = vpack.c.bf16 %v2653, %v2651
      %v2667 = vpack.c.bf16 %v2658, %v2656
      %v2668 = vpack.c.bf16 %v2663, %v2661
      %2669 = vmatpush.bf16.msra.mxu0 0
      %2670 = vmatpush.bf16.msra.mxu0 0
      %2671 = vmatpush.bf16.msra.mxu0 0
      %2672 = vmatpush.bf16.msra.mxu0 0
      %2673 = vmatpush.bf16.msra.mxu0 %v2668
      %2674 = vmatpush.bf16.msra.mxu0 %v2667
      %2675 = vmatpush.bf16.msra.mxu0 %v2666
      %2676 = vmatpush.bf16.msra.mxu0 %v2665
      %2677 = vmatmul.bf16.gmra.mxu0 %v2154
      %v2678 = vpop.f32.mrf.mxu0
      %v2679 = vadd.f32 0.0, %v2678
      %v2680 = vpop.f32.mrf.mxu0
      %v2681 = vadd.f32 0.0, %v2680
      %2682 = vmatmul.bf16.gmra.mxu0 %v2157
      %v2683 = vpop.f32.mrf.mxu0
      %v2684 = vadd.f32 0.0, %v2683
      %v2685 = vpop.f32.mrf.mxu0
      %v2686 = vadd.f32 0.0, %v2685
      %2687 = vdwg.mxu0
      %v2688 = vmul.f32 %v2679, %v2181
      %v2689 = vmul.f32 %v2681, %v2186
      %v2690 = vmul.f32 %v2684, %v2191
      %v2691 = vmul.f32 %v2686, %v2196
      %v2692 = vpack.c.bf16 %v2689, %v2688
      %v2693 = vpack.c.bf16 %v2691, %v2690
      %v2698 = vunpack.c.l.b16 %v2368
      %v2699 = vunpack.c.l.b16 %v2369
      %v2700 = vunpack.c.l.b16 %v2370
      %v2701 = vunpack.c.l.b16 %v2371
      %v2702 = vpack.c.b16 %v2699, %v2698
      %v2703 = vpack.c.b16 %v2701, %v2700
      %v2707 = vsel %vm1598, %v2692, 0
      %v2710 = vsel %vm1598, %v2693, 0
      %2712 = vmatpush.bf16.msra.mxu0 0
      %2713 = vmatpush.bf16.msra.mxu0 0
      %2714 = vmatpush.bf16.msra.mxu0 0
      %2715 = vmatpush.bf16.msra.mxu0 0
      %2716 = vmatpush.bf16.msra.mxu0 0
      %2717 = vmatpush.bf16.msra.mxu0 0
      %2718 = vmatpush.bf16.msra.mxu0 %v2703
      %2719 = vmatpush.bf16.msra.mxu0 %v2702
      %2720 = vmatmul.bf16.gmra.mxu0 %v2707
      %v2721 = vpop.f32.mrf.mxu0
      %v2722 = vadd.f32 0.0, %v2721
      %v2723 = vpop.f32.mrf.mxu0
      %v2724 = vadd.f32 0.0, %v2723
      %2725 = vmatmul.bf16.gmra.mxu0 %v2710
      %v2726 = vpop.f32.mrf.mxu0
      %v2727 = vadd.f32 0.0, %v2726
      %v2728 = vpop.f32.mrf.mxu0
      %v2729 = vadd.f32 0.0, %v2728
      %2730 = vdwg.mxu0
      %v2735 = vunpack.c.l.b16 %v2364
      %v2736 = vunpack.c.l.b16 %v2365
      %v2737 = vunpack.c.l.b16 %v2366
      %v2738 = vunpack.c.l.b16 %v2367
      %v2739 = vpack.c.b16 %v2736, %v2735
      %v2740 = vpack.c.b16 %v2738, %v2737
      %2743 = vmatpush.bf16.msra.mxu0 0
      %2744 = vmatpush.bf16.msra.mxu0 0
      %2745 = vmatpush.bf16.msra.mxu0 0
      %2746 = vmatpush.bf16.msra.mxu0 0
      %2747 = vmatpush.bf16.msra.mxu0 0
      %2748 = vmatpush.bf16.msra.mxu0 0
      %2749 = vmatpush.bf16.msra.mxu0 %v2740
      %2750 = vmatpush.bf16.msra.mxu0 %v2739
      %2751 = vmatmul.bf16.gmra.mxu0 %v2396
      %v2752 = vpop.f32.mrf.mxu0
      %v2753 = vadd.f32 %v2722, %v2752
      %v2754 = vpop.f32.mrf.mxu0
      %v2755 = vadd.f32 %v2724, %v2754
      %2756 = vmatmul.bf16.gmra.mxu0 %v2399
      %v2757 = vpop.f32.mrf.mxu0
      %v2758 = vadd.f32 %v2727, %v2757
      %v2759 = vpop.f32.mrf.mxu0
      %v2760 = vadd.f32 %v2729, %v2759
      %2761 = vdwg.mxu0
      %v2763 = vperm.slane %v2373, 0
      %v2765 = vadd.f32 %v2753, %v2763
      %v2766 = vadd.f32 %v2755, %v2763
      %v2767 = vadd.f32 %v2758, %v2763
      %v2768 = vadd.f32 %v2760, %v2763
      %v2769 = vmul.f32 %v2765, 0.01
      %v2770 = vmul.f32 %v2766, 0.01
      %v2771 = vmul.f32 %v2767, 0.01
      %v2772 = vmul.f32 %v2768, 0.01
      %v2773 = vmax.f32 %v2765, %v2769
      %v2774 = vmax.f32 %v2766, %v2770
      %v2775 = vmax.f32 %v2767, %v2771
      %v2776 = vmax.f32 %v2768, %v2772
      %v2777 = vpack.c.bf16 %v2774, %v2773
      %v2778 = vpack.c.bf16 %v2776, %v2775
      %v2780 = vperm.slane %v2380, 0
      %v2786 = vunpack.c.l.b16 %v2375
      %v2787 = vunpack.c.l.b16 %v2376
      %v2788 = vunpack.c.l.b16 %v2377
      %v2789 = vunpack.c.l.b16 %v2378
      %v2790 = vpack.c.b16 %v2787, %v2786
      %v2791 = vpack.c.b16 %v2789, %v2788
      %v2795 = vsel %vm1598, %v2777, 0
      %v2798 = vsel %vm1598, %v2778, 0
      %2800 = vmatpush.bf16.msra.mxu0 0
      %2801 = vmatpush.bf16.msra.mxu0 0
      %2802 = vmatpush.bf16.msra.mxu0 0
      %2803 = vmatpush.bf16.msra.mxu0 0
      %2804 = vmatpush.bf16.msra.mxu0 0
      %2805 = vmatpush.bf16.msra.mxu0 0
      %2806 = vmatpush.bf16.msra.mxu0 %v2791
      %2807 = vmatpush.bf16.msra.mxu0 %v2790
      %2808 = vmatmul.bf16.gmra.mxu0 %v2795
      %v2809 = vpop.f32.mrf.mxu0
      %v2810 = vadd.f32 %v2780, %v2809
      %v2811 = vpop.f32.mrf.mxu0
      %v2812 = vadd.f32 %v2780, %v2811
      %2813 = vmatmul.bf16.gmra.mxu0 %v2798
      %v2814 = vpop.f32.mrf.mxu0
      %v2815 = vadd.f32 %v2780, %v2814
      %v2816 = vpop.f32.mrf.mxu0
      %v2817 = vadd.f32 %v2780, %v2816
      %2818 = vdwg.mxu0
      %v2819 = vadd.f32 %v2810, %v2337
      %v2820 = vadd.f32 %v2812, %v2338
      %v2821 = vadd.f32 %v2815, %v2339
      %v2822 = vadd.f32 %v2817, %v2340
      %v2823 = vld [vmem:[%s1447] sm:$0xf]
      %v2824 = vld [vmem:[%s1447 + $0x4] sm:$0xf]
      %v2825 = vld [vmem:[%s1447 + $0x8] sm:$0xf]
      %v2826 = vld [vmem:[%s1447 + $0xc] sm:$0xf]
      %v2827 = vpack.c.bf16 %v2820, %v2819
      %v2828 = vpack.c.bf16 %v2822, %v2821
      %v2829 = vld [vmem:[%s1450] sm:$0x1]
      %v2831 = vperm.slane %v2829, 0
      %v2837 = vunpack.c.l.b16 %v2823
      %v2838 = vunpack.c.l.b16 %v2824
      %v2839 = vunpack.c.l.b16 %v2825
      %v2840 = vunpack.c.l.b16 %v2826
      %v2841 = vpack.c.b16 %v2838, %v2837
      %v2842 = vpack.c.b16 %v2840, %v2839
      %v2846 = vsel %vm1598, %v2827, 0
      %v2849 = vsel %vm1598, %v2828, 0
      %2851 = vmatpush.bf16.msra.mxu0 0
      %2852 = vmatpush.bf16.msra.mxu0 0
      %2853 = vmatpush.bf16.msra.mxu0 0
      %2854 = vmatpush.bf16.msra.mxu0 0
      %2855 = vmatpush.bf16.msra.mxu0 0
      %2856 = vmatpush.bf16.msra.mxu0 0
      %2857 = vmatpush.bf16.msra.mxu0 %v2842
      %2858 = vmatpush.bf16.msra.mxu0 %v2841
      %2859 = vmatmul.bf16.gmra.mxu0 %v2846
      %v2860 = vpop.f32.mrf.mxu0
      %v2861 = vadd.f32 %v2831, %v2860
      %v2862 = vpop.f32.mrf.mxu0
      %v2863 = vadd.f32 %v2831, %v2862
      %2864 = vmatmul.bf16.gmra.mxu0 %v2849
      %v2865 = vpop.f32.mrf.mxu0
      %v2866 = vadd.f32 %v2831, %v2865
      %v2867 = vpop.f32.mrf.mxu0
      %v2868 = vadd.f32 %v2831, %v2867
      %2869 = vdwg.mxu0
      %v2870 = vmul.f32 %v2861, 0.01
      %v2871 = vmul.f32 %v2863, 0.01
      %v2872 = vmul.f32 %v2866, 0.01
      %v2873 = vmul.f32 %v2868, 0.01
      %v2874 = vmax.f32 %v2861, %v2870
      %v2875 = vmax.f32 %v2863, %v2871
      %v2876 = vmax.f32 %v2866, %v2872
      %v2877 = vmax.f32 %v2868, %v2873
      %v2878 = vld [vmem:[%s1455] sm:$0xf]
      %v2879 = vld [vmem:[%s1455 + $0x4] sm:$0xf]
      %v2880 = vld [vmem:[%s1455 + $0x8] sm:$0xf]
      %v2881 = vld [vmem:[%s1455 + $0xc] sm:$0xf]
      %v2882 = vpack.c.bf16 %v2875, %v2874
      %v2883 = vpack.c.bf16 %v2877, %v2876
      %v2884 = vld [vmem:[%s1458] sm:$0x1]
      %v2886 = vperm.slane %v2884, 0
      %v2892 = vunpack.c.l.b16 %v2878
      %v2893 = vunpack.c.l.b16 %v2879
      %v2894 = vunpack.c.l.b16 %v2880
      %v2895 = vunpack.c.l.b16 %v2881
      %v2896 = vpack.c.b16 %v2893, %v2892
      %v2897 = vpack.c.b16 %v2895, %v2894
      %v2901 = vsel %vm1598, %v2882, 0
      %v2904 = vsel %vm1598, %v2883, 0
      %2906 = vmatpush.bf16.msra.mxu0 0
      %2907 = vmatpush.bf16.msra.mxu0 0
      %2908 = vmatpush.bf16.msra.mxu0 0
      %2909 = vmatpush.bf16.msra.mxu0 0
      %2910 = vmatpush.bf16.msra.mxu0 0
      %2911 = vmatpush.bf16.msra.mxu0 0
      %2912 = vmatpush.bf16.msra.mxu0 %v2897
      %2913 = vmatpush.bf16.msra.mxu0 %v2896
      %2914 = vmatmul.bf16.gmra.mxu0 %v2901
      %v2915 = vpop.f32.mrf.mxu0
      %v2916 = vadd.f32 %v2886, %v2915
      %v2917 = vpop.f32.mrf.mxu0
      %v2918 = vadd.f32 %v2886, %v2917
      %2919 = vmatmul.bf16.gmra.mxu0 %v2904
      %v2920 = vpop.f32.mrf.mxu0
      %v2921 = vadd.f32 %v2886, %v2920
      %v2922 = vpop.f32.mrf.mxu0
      %v2923 = vadd.f32 %v2886, %v2922
      %2924 = vdwg.mxu0
      %v2925 = vld [vmem:[%s1461] sm:$0x1]
      %v2927 = vperm.slane %v2925, 0
      %2928 = vset.pattern.permute.xlu0 0
      %2929 = vperm.xlu0 %2928, %v2927
      %v2930 = vpop.permute.xlu0 %2929
      %v2932 = vmul.f32 %v2819, %v2930
      %v2933 = vmul.f32 %v2820, %v2930
      %v2934 = vmul.f32 %v2821, %v2930
      %v2935 = vmul.f32 %v2822, %v2930
      %v2936 = vsel %vm1598, %v2932, -inf
      %v2937 = vsel %vm1598, %v2933, -inf
      %v2938 = vsel %vm1598, %v2934, -inf
      %v2939 = vsel %vm1598, %v2935, -inf
      %v2940 = vmax.f32 %v2936, %v2937
      %v2941 = vmax.f32 %v2938, %v2939
      %v2942 = vmax.f32 %v2940, %v2941
      %v2943 = vrot.slane %v2942, 4
      %v2944 = vmax.f32 %v2942, %v2943
      %v2945 = vrot.slane %v2944, 2
      %v2946 = vmax.f32 %v2944, %v2945
      %v2947 = vrot.slane %v2946, 1
      %v2948 = vmax.f32 %v2946, %v2947
      %v2949 = vsub.f32 %v2932, %v2948
      %v2950 = vsub.f32 %v2933, %v2948
      %v2951 = vsub.f32 %v2934, %v2948
      %v2952 = vsub.f32 %v2935, %v2948
      %v2953 = vmul.f32 %v2949, 1.442695
      %v2954 = vpow.pop %v2953
      %v2955 = vmul.f32 %v2950, 1.442695
      %v2956 = vpow.pop %v2955
      %v2957 = vmul.f32 %v2951, 1.442695
      %v2958 = vpow.pop %v2957
      %v2959 = vmul.f32 %v2952, 1.442695
      %v2960 = vpow.pop %v2959
      %v2961 = vsel %vm1598, %v2954, 0.0
      %v2962 = vsel %vm1598, %v2956, 0.0
      %v2963 = vadd.f32 %v2961, %v2962
      %v2964 = vsel %vm1598, %v2958, 0.0
      %v2965 = vadd.f32 %v2963, %v2964
      %v2966 = vsel %vm1598, %v2960, 0.0
      %v2967 = vadd.f32 %v2965, %v2966
      %v2968 = vrot.slane %v2967, 4
      %v2969 = vadd.f32 %v2967, %v2968
      %v2970 = vrot.slane %v2969, 2
      %v2971 = vadd.f32 %v2969, %v2970
      %v2972 = vrot.slane %v2971, 1
      %v2973 = vadd.f32 %v2971, %v2972
      %v2974 = vrcp.pop %v2973
      %v2975 = vmul.f32 %v2954, %v2974
      %v2976 = vmul.f32 %v2956, %v2974
      %v2977 = vmul.f32 %v2958, %v2974
      %v2978 = vmul.f32 %v2960, %v2974
      %v2979 = vmul.f32 %v2975, %v2819
      %v2980 = vmul.f32 %v2976, %v2820
      %v2981 = vmul.f32 %v2977, %v2821
      %v2982 = vmul.f32 %v2978, %v2822
      %v2983 = vsel %vm1598, %v2979, 0.0
      %v2984 = vsel %vm1598, %v2980, 0.0
      %v2985 = vadd.f32 %v2983, %v2984
      %v2986 = vsel %vm1598, %v2981, 0.0
      %v2987 = vadd.f32 %v2985, %v2986
      %v2988 = vsel %vm1598, %v2982, 0.0
      %v2989 = vadd.f32 %v2987, %v2988
      %v2990 = vrot.slane %v2989, 4
      %v2991 = vadd.f32 %v2989, %v2990
      %v2992 = vrot.slane %v2991, 2
      %v2993 = vadd.f32 %v2991, %v2992
      %v2994 = vrot.slane %v2993, 1
      %v2995 = vadd.f32 %v2993, %v2994
      %v2996 = vld [vmem:[%s1466] sm:$0xf]
      %v2997 = vld [vmem:[%s1466 + $0x4] sm:$0xf]
      %v2998 = vld [vmem:[%s1466 + $0x8] sm:$0xf]
      %v2999 = vld [vmem:[%s1466 + $0xc] sm:$0xf]
      %v3000 = vpack.c.bf16 %v2995, %v2995
      %v3001 = vld [vmem:[%s1469] sm:$0x1]
      %v3006 = vunpack.c.l.b16 %v2996
      %v3007 = vunpack.c.l.b16 %v2997
      %v3008 = vunpack.c.l.b16 %v2998
      %v3009 = vunpack.c.l.b16 %v2999
      %v3010 = vpack.c.b16 %v3007, %v3006
      %v3011 = vpack.c.b16 %v3009, %v3008
      %v3015 = vsel %vm1598, %v3000, 0
      %3017 = vmatpush.bf16.msra.mxu0 0
      %3018 = vmatpush.bf16.msra.mxu0 0
      %3019 = vmatpush.bf16.msra.mxu0 0
      %3020 = vmatpush.bf16.msra.mxu0 0
      %3021 = vmatpush.bf16.msra.mxu0 0
      %3022 = vmatpush.bf16.msra.mxu0 0
      %3023 = vmatpush.bf16.msra.mxu0 %v3011
      %3024 = vmatpush.bf16.msra.mxu0 %v3010
      %3025 = vmatmul.bf16.gmra.mxu0 %v3015
      %v3026 = vpop.f32.mrf.mxu0
      %v3027 = vadd.f32 %v3001, %v3026
      %v3028 = vpop.f32.mrf.mxu0
      %3029 = vdwg.mxu0
      %v3030 = vmul.f32 %v3027, 0.01
      %v3031 = vmax.f32 %v3027, %v3030
      %v3032 = vld [vmem:[%s1474] sm:$0xf]
      %v3033 = vld [vmem:[%s1474 + $0x4] sm:$0xf]
      %v3034 = vld [vmem:[%s1474 + $0x8] sm:$0xf]
      %v3035 = vld [vmem:[%s1474 + $0xc] sm:$0xf]
      %v3036 = vpack.c.bf16 %v3031, %v3031
      %v3037 = vld [vmem:[%s1477] sm:$0x1]
      %v3042 = vunpack.c.l.b16 %v3032
      %v3043 = vunpack.c.l.b16 %v3033
      %v3044 = vunpack.c.l.b16 %v3034
      %v3045 = vunpack.c.l.b16 %v3035
      %v3046 = vpack.c.b16 %v3043, %v3042
      %v3047 = vpack.c.b16 %v3045, %v3044
      %v3051 = vsel %vm1598, %v3036, 0
      %3053 = vmatpush.bf16.msra.mxu0 0
      %3054 = vmatpush.bf16.msra.mxu0 0
      %3055 = vmatpush.bf16.msra.mxu0 0
      %3056 = vmatpush.bf16.msra.mxu0 0
      %3057 = vmatpush.bf16.msra.mxu0 0
      %3058 = vmatpush.bf16.msra.mxu0 0
      %3059 = vmatpush.bf16.msra.mxu0 %v3047
      %3060 = vmatpush.bf16.msra.mxu0 %v3046
      %3061 = vmatmul.bf16.gmra.mxu0 %v3051
      %v3062 = vpop.f32.mrf.mxu0
      %v3063 = vadd.f32 %v3037, %v3062
      %v3064 = vpop.f32.mrf.mxu0
      %3065 = vdwg.mxu0
      %v3066 = vmul.f32 %v3063, 0.01
      %v3067 = vmax.f32 %v3063, %v3066
      %v3068 = vld [vmem:[%s1482] sm:$0xf]
      %v3069 = vld [vmem:[%s1482 + $0x4] sm:$0xf]
      %v3070 = vld [vmem:[%s1482 + $0x8] sm:$0xf]
      %v3071 = vld [vmem:[%s1482 + $0xc] sm:$0xf]
      %v3072 = vpack.c.bf16 %v3067, %v3067
      %v3073 = vld [vmem:[%s1485] sm:$0x1]
      %v3078 = vunpack.c.l.b16 %v3068
      %v3079 = vunpack.c.l.b16 %v3069
      %v3080 = vunpack.c.l.b16 %v3070
      %v3081 = vunpack.c.l.b16 %v3071
      %v3082 = vpack.c.b16 %v3079, %v3078
      %v3083 = vpack.c.b16 %v3081, %v3080
      %v3087 = vsel %vm1598, %v3072, 0
      %3089 = vmatpush.bf16.msra.mxu0 0
      %3090 = vmatpush.bf16.msra.mxu0 0
      %3091 = vmatpush.bf16.msra.mxu0 0
      %3092 = vmatpush.bf16.msra.mxu0 0
      %3093 = vmatpush.bf16.msra.mxu0 0
      %3094 = vmatpush.bf16.msra.mxu0 0
      %3095 = vmatpush.bf16.msra.mxu0 %v3083
      %3096 = vmatpush.bf16.msra.mxu0 %v3082
      %3097 = vmatmul.bf16.gmra.mxu0 %v3087
      %v3098 = vpop.f32.mrf.mxu0
      %v3099 = vadd.f32 %v3073, %v3098
      %v3100 = vpop.f32.mrf.mxu0
      %3101 = vdwg.mxu0
      %vm3102 = vcmask 23552
      %3103 = vst.msk [vmem:[%s1490] sm:$0xff] %vm3102, %v2916
      %3104 = vst.msk [vmem:[%s1490 + $0x8] sm:$0xff] %vm3102, %v2918
      %3105 = vst.msk [vmem:[%s1490 + $0x10] sm:$0xff] %vm3102, %v2921
      %3106 = vst.msk [vmem:[%s1490 + $0x18] sm:$0xff] %vm3102, %v2923
      %vm3107 = vcmask 8192
      %3108 = vst.msk [vmem:[%s1493] sm:$0x1] %vm3107, %v3099
      %p3109 = scmp.lt.s32.totalorder %s81, 2
      %s3110 = scalar_select %p3109, %s81, 2
      %s3111 = smul.addr %s3110, 4
      %s3112 = smul.addr %s3111, 8
      %s3113 = scalar_lea.vmem %s67, %s3112
      %p3114 = scmp.lt.s32.totalorder %s81, 2
      %s3115 = scalar_select %p3114, %s81, 2
      %s3116 = scalar_lea.vmem %s69, %s3115
      // Predicated region
      $region153: #{tpu_custom_call.1} parent=151 // pred_check
        %p3117 = pneg %p927
      $region154: #{tpu_custom_call.1} parent=151 // pred_check_branch
        %3119 = sbr.rel (%p3117) target = $region156
      $region155: #{tpu_custom_call.1} parent=151 // pred_region
        _
      $region156: #{tpu_custom_call.1} parent=151 // pred_fallthru
        _
      // Predicated region
      $region157: #{tpu_custom_call.1} parent=151 // pred_check
        %p3120 = pneg %p953
      $region158: #{tpu_custom_call.1} parent=151 // pred_check_branch
        %3122 = sbr.rel (%p3120) target = $region160
      $region159: #{tpu_custom_call.1} parent=151 // pred_region
        _
      $region160: #{tpu_custom_call.1} parent=151 // pred_fallthru
        _
    $region152: #{tpu_custom_call.1} parent=5 // pred_fallthru
      _
    %p3123 = scmp.le.s32.totalorder 2, %s76
    // Predicated region
    $region161: #{tpu_custom_call.1} parent=5 // pred_check
      %p3124 = pneg %p3123
    $region162: #{tpu_custom_call.1} parent=5 // pred_check_branch
      %3126 = sbr.rel (%p3124) target = $region164
    $region163: #{tpu_custom_call.1} parent=5 // pred_region
      %s3127 = ssub.s32 %s76, 2
      // Predicated region
      $region165: #{tpu_custom_call.1} parent=163 // pred_check
        %p3128 = pneg %p933
      $region166: #{tpu_custom_call.1} parent=163 // pred_check_branch
        %3130 = sbr.rel (%p3128) target = $region168
      $region167: #{tpu_custom_call.1} parent=163 // pred_region
        %p3131 = scmp.lt.s32.totalorder %s82, 2
        %s3132 = scalar_select %p3131, %s82, 2
        %s3133 = smul.addr %s3132, 4
        %s3134 = smul.addr %s3133, 8
        %s3135 = scalar_lea.vmem %s67, %s3134
      $region168: #{tpu_custom_call.1} parent=163 // pred_fallthru
        _
      // Predicated region
      $region169: #{tpu_custom_call.1} parent=163 // pred_check
        %p3136 = pneg %p959
      $region170: #{tpu_custom_call.1} parent=163 // pred_check_branch
        %3138 = sbr.rel (%p3136) target = $region172
      $region171: #{tpu_custom_call.1} parent=163 // pred_region
        %p3139 = scmp.lt.s32.totalorder %s82, 2
        %s3140 = scalar_select %p3139, %s82, 2
        %s3141 = scalar_lea.vmem %s69, %s3140
      $region172: #{tpu_custom_call.1} parent=163 // pred_fallthru
        _
    $region164: #{tpu_custom_call.1} parent=5 // pred_fallthru
      _
  $region6: #{tpu_custom_call.1} parent=0 // loop_footer
    %s80 = sadd.s32 1, %s76
  $region7: #{tpu_custom_call.1} parent=0 // loop_footer_branch
    %75 = sbr.rel target = $region3
  $region8: #{tpu_custom_call.1} parent=0 // loop_exit
    _

</llo_original>
